<compile_context>
chip_gen: v7x
topology: tpu7x:2x2x1
jax: 0.10.0
libtpu: 0.0.40
codegen_flags: <defaults>
</compile_context>

<pallas_src>
import functools

import jax
import jax.numpy as jnp
from jax.experimental import pallas as pl
from jax.experimental.pallas import tpu as pltpu

_BN_EPS = 1e-5
_LANES = 128


def _round_up(x, m):
    return (x + m - 1) // m * m


# --------------------------------------------------------------------------
# Capability probes / small helpers.
# --------------------------------------------------------------------------
def _probe_pipeline_mode():
    if not hasattr(pl, "Buffered"):
        return False
    try:
        pl.BlockSpec((8, 128), lambda i: (i, 0), pipeline_mode=pl.Buffered(1))
        return True
    except Exception:
        return False


_SINGLE_BUFFER_OK = _probe_pipeline_mode()


def _bspec(shape, index_map, *, single_buffer=False):
    """BlockSpec; grid-invariant operands get single-buffering when supported."""
    if single_buffer and _SINGLE_BUFFER_OK:
        return pl.BlockSpec(shape, index_map, pipeline_mode=pl.Buffered(1))
    return pl.BlockSpec(shape, index_map)


def _vmem_limit():
    """Generation-aware scoped-VMEM budget (~75% of per-core capacity)."""
    cap = 128 * 1024 * 1024
    try:
        cap = int(pltpu.get_tpu_info().vmem_capacity_bytes)
    except Exception:
        pass
    return int(cap * 3 // 4)


def _largest_divisor(n, cap):
    cap = max(1, min(n, int(cap)))
    best = 1
    for d in range(1, cap + 1):
        if n % d == 0:
            best = d
    return best


def _conv_row_tile(ho, wo, k, cin_p, cout_p, has_skip,
                   phases_block_bytes, w_bytes, vmem_limit):
    """VMEM-budget-driven row tile for the conv kernel (divisor of ho)."""
    bufs = 1 if _SINGLE_BUFFER_OK else 2
    fixed = bufs * (phases_block_bytes + w_bytes) + (4 << 20)
    avail = max(vmem_limit - fixed, 2 << 20)
    per_row = wo * (k * k * cin_p * 2      # bf16 deep-K lhs concat
                    + cout_p * 4           # f32 accumulator
                    + 2 * cout_p * 2)      # double-buffered bf16 u tile
    if has_skip:
        per_row += wo * (cout_p * 4 + 2 * cout_p * 2)
    cap = min(avail // max(1, per_row),
              (8 << 20) // max(1, wo * cout_p * 2))   # <=8 MiB output tiles
    return _largest_divisor(ho, cap)


def _ew_row_tile(ho, wo, c, vmem_limit):
    """Row tile for the elementwise epilogue kernels (divisor of ho)."""
    per_row = wo * c * (2 + 2 + 4) * 2     # bf16 u + bf16 res + f32 out, x2 buf
    cap = min((vmem_limit // 4) // max(1, per_row),
              (4 << 20) // max(1, wo * c * 4))
    return _largest_divisor(ho, cap)


# --------------------------------------------------------------------------
# Pass-1 kernel: k x k conv as a single deep-K MXU dot (bf16 in / f32 acc)
# + per-tile BatchNorm partial stats. Optionally also the fused 1x1 skip
# projection (== centre tap of the zero-padded 3x3).
# --------------------------------------------------------------------------
def _conv_stats_kernel(x_ref, w_ref, *rest, k, stride, tr, wo, has_skip):
    if has_skip:
        ws_ref, u_ref, st_ref, us_ref, sts_ref = rest
    else:
        u_ref, st_ref = rest

    r0 = pl.program_id(1) * tr
    slabs = []
    for kh in range(k):
        for kw in range(k):
            ph = (kh % stride) * stride + (kw % stride)
            dh, dw = kh // stride, kw // stride
            slabs.append(x_ref[0, ph, pl.ds(r0 + dh, tr), pl.ds(dw, wo), :])
    cin_p = slabs[0].shape[-1]

    # Deep-K: one dot with K = k*k*cin_p; accumulation stays in the MXU.
    lhs = jnp.concatenate(slabs, axis=-1).reshape(tr * wo, k * k * cin_p)
    acc = jnp.dot(lhs, w_ref[...], preferred_element_type=jnp.float32)

    u_ref[...] = acc.astype(u_ref.dtype).reshape(u_ref.shape)
    st = jnp.concatenate([jnp.sum(acc, axis=0, keepdims=True),
                          jnp.sum(acc * acc, axis=0, keepdims=True)], axis=0)
    st_ref[...] = st.reshape(st_ref.shape)

    if has_skip:
        centre = slabs[(k // 2) * k + (k // 2)].reshape(tr * wo, cin_p)
        sk = jnp.dot(centre, ws_ref[...], preferred_element_type=jnp.float32)
        us_ref[...] = sk.astype(us_ref.dtype).reshape(us_ref.shape)
        sts = jnp.concatenate([jnp.sum(sk, axis=0, keepdims=True),
                               jnp.sum(sk * sk, axis=0, keepdims=True)], axis=0)
        sts_ref[...] = sts.reshape(sts_ref.shape)


def conv_bn_stats(phases, w_deep, *, k, stride, ho, wo, cin_p,
                  w_skip=None, vmem_limit):
    n, ss, hph, wph, _ = phases.shape
    cout_p = w_deep.shape[-1]
    has_skip = w_skip is not None

    phases_block_bytes = ss * hph * wph * cin_p * 2
    w_bytes = w_deep.size * 2 + (w_skip.size * 2 if has_skip else 0)
    tr = _conv_row_tile(ho, wo, k, cin_p, cout_p, has_skip,
                        phases_block_bytes, w_bytes, vmem_limit)
    rt = ho // tr

    kernel = functools.partial(_conv_stats_kernel, k=k, stride=stride,
                               tr=tr, wo=wo, has_skip=has_skip)

    in_specs = [
        _bspec((1, ss, hph, wph, cin_p), lambda i, r: (i, 0, 0, 0, 0),
               single_buffer=True),
        _bspec((k * k * cin_p, cout_p), lambda i, r: (0, 0),
               single_buffer=True),
    ]
    operands = [phases, w_deep]

    u_spec = pl.BlockSpec((1, tr, wo, cout_p), lambda i, r: (i, r, 0, 0))
    st_spec = pl.BlockSpec((1, 1, 2, cout_p), lambda i, r: (i, r, 0, 0))
    u_shape = jax.ShapeDtypeStruct((n, ho, wo, cout_p), jnp.bfloat16)
    st_shape = jax.ShapeDtypeStruct((n, rt, 2, cout_p), jnp.float32)
    out_specs = [u_spec, st_spec]
    out_shapes = [u_shape, st_shape]
    if has_skip:
        in_specs.append(_bspec((cin_p, cout_p), lambda i, r: (0, 0),
                               single_buffer=True))
        operands.append(w_skip)
        out_specs += [u_spec, st_spec]
        out_shapes += [u_shape, st_shape]

    # Only the batch axis is core-parallel when n >= 2 (avoids duplicated
    # per-image phase DMA across the two v7x cores).
    dims = ("parallel", "arbitrary") if n >= 2 else ("parallel", "parallel")

    flops = 2 * n * ho * wo * cout_p * (k * k * cin_p
                                        + (cin_p if has_skip else 0))
    bytes_acc = (phases.size * 2 + w_deep.size * 2
                 + (w_skip.size * 2 if has_skip else 0)
                 + (2 if has_skip else 1) * (n * ho * wo * cout_p * 2)
                 + (2 if has_skip else 1) * (n * rt * 2 * cout_p * 4))

    return pl.pallas_call(
        kernel,
        grid=(n, rt),
        in_specs=in_specs,
        out_specs=tuple(out_specs),
        out_shape=tuple(out_shapes),
        compiler_params=pltpu.CompilerParams(
            dimension_semantics=dims,
            vmem_limit_bytes=int(vmem_limit)),
        cost_estimate=pl.CostEstimate(flops=int(flops), transcendentals=0,
                                      bytes_accessed=int(bytes_acc)),
    )(*operands)


# --------------------------------------------------------------------------
# Pass-2a kernel: a1 = relu(u*scale + shift), written directly into the
# zero-haloed (Ho+2, Wo+2) bf16 buffer consumed by conv2 (pad fusion).
# --------------------------------------------------------------------------
def _bn_relu_pad_kernel(u_ref, sc_ref, sh_ref, o_ref):
    ho, wo = u_ref.shape[1], u_ref.shape[2]
    y = u_ref[...].astype(jnp.float32) * sc_ref[...] + sh_ref[...]
    y = jnp.maximum(y, 0.0).astype(o_ref.dtype)
    o_ref[...] = jnp.zeros(o_ref.shape, o_ref.dtype)   # halo (VMEM-only cost)
    o_ref[:, pl.ds(1, ho), pl.ds(1, wo), :] = y


def bn_relu_pad(u, scale, shift, *, vmem_limit):
    n, ho, wo, c = u.shape
    hop, wop = ho + 2, wo + 2
    # TODO(synk): row-tile with halo handling if single images ever exceed VMEM.
    return pl.pallas_call(
        _bn_relu_pad_kernel,
        grid=(n,),
        in_specs=[pl.BlockSpec((1, ho, wo, c), lambda i: (i, 0, 0, 0)),
                  pl.BlockSpec((1, c), lambda i: (0, 0)),
                  pl.BlockSpec((1, c), lambda i: (0, 0))],
        out_specs=pl.BlockSpec((1, hop, wop, c), lambda i: (i, 0, 0, 0)),
        out_shape=jax.ShapeDtypeStruct((n, hop, wop, c), jnp.bfloat16),
        compiler_params=pltpu.CompilerParams(
            dimension_semantics=("parallel",),
            vmem_limit_bytes=int(vmem_limit)),
    )(u, scale, shift)


# --------------------------------------------------------------------------
# Pass-2b kernel: out = relu(u*sc + sh + residual[*rsc + rsh]).
# --------------------------------------------------------------------------
def _bn_add_relu_kernel(u_ref, sc_ref, sh_ref, *rest, res_affine):
    if res_affine:
        r_ref, rsc_ref, rsh_ref, o_ref = rest
    else:
        r_ref, o_ref = rest
    y = u_ref[...].astype(jnp.float32) * sc_ref[...] + sh_ref[...]
    r = r_ref[...].astype(jnp.float32)
    if res_affine:
        r = r * rsc_ref[...] + rsh_ref[...]
    o_ref[...] = jnp.maximum(y + r, 0.0).astype(o_ref.dtype)


def bn_add_relu(u, scale, shift, residual, *, res_scale=None, res_shift=None,
                out_dtype=jnp.float32, vmem_limit):
    n, ho, wo, c = u.shape
    res_affine = res_scale is not None
    tr = _ew_row_tile(ho, wo, c, vmem_limit)
    rt = ho // tr

    tile = pl.BlockSpec((1, tr, wo, c), lambda i, r: (i, r, 0, 0))
    vec = pl.BlockSpec((1, c), lambda i, r: (0, 0))
    operands = [u, scale, shift, residual]
    in_specs = [tile, vec, vec, tile]
    if res_affine:
        operands += [res_scale, res_shift]
        in_specs += [vec, vec]

    kernel = functools.partial(_bn_add_relu_kernel, res_affine=res_affine)
    dims = ("parallel", "arbitrary") if n >= 2 else ("parallel", "parallel")
    return pl.pallas_call(
        kernel,
        grid=(n, rt),
        in_specs=in_specs,
        out_specs=pl.BlockSpec((1, tr, wo, c), lambda i, r: (i, r, 0, 0)),
        out_shape=jax.ShapeDtypeStruct((n, ho, wo, c), out_dtype),
        compiler_params=pltpu.CompilerParams(
            dimension_semantics=dims,
            vmem_limit_bytes=int(vmem_limit)),
    )(*operands)


# --------------------------------------------------------------------------
# Host-side glue (tiny / pure data movement).
# --------------------------------------------------------------------------
def _make_phases(x_nhwc, pad, stride):
    """Zero-pad spatially and split into stride*stride phases so a k x k /
    stride conv becomes contiguous shifted slices in-kernel (no im2col)."""
    x_nhwc = x_nhwc.astype(jnp.bfloat16)
    n, h, w, c = x_nhwc.shape
    xp = jnp.pad(x_nhwc, ((0, 0), (pad, pad), (pad, pad), (0, 0)))
    hp, wp = h + 2 * pad, w + 2 * pad
    hph = -(-hp // stride)
    wph = -(-wp // stride)
    xp = jnp.pad(xp, ((0, 0), (0, hph * stride - hp),
                      (0, wph * stride - wp), (0, 0)))
    ph = xp.reshape(n, hph, stride, wph, stride, c)
    ph = jnp.transpose(ph, (0, 2, 4, 1, 3, 5))
    return ph.reshape(n, stride * stride, hph, wph, c)


def _deep_weight(w, cin_p, cout_p):
    """(k,k,ci,co) -> zero-padded, bf16, deep-K layout (k*k*cin_p, cout_p)."""
    k, _, ci, co = w.shape
    w = jnp.pad(w, ((0, 0), (0, 0), (0, cin_p - ci), (0, cout_p - co)))
    return w.reshape(k * k * cin_p, cout_p).astype(jnp.bfloat16)


def _skip_weight(w, cin_p, cout_p):
    _, _, ci, co = w.shape
    w = jnp.pad(w, ((0, 0), (0, 0), (0, cin_p - ci), (0, cout_p - co)))
    return w.reshape(cin_p, cout_p).astype(jnp.bfloat16)


def _bn_fold(stats, gamma, beta, count, cout, cout_p):
    """Fold per-tile (sum, sum-of-squares) partials into per-channel
    scale = gamma*rsqrt(var+eps), shift = beta - mean*scale (f32)."""
    tot = jnp.sum(stats, axis=(0, 1))                       # (2, cout_p)
    mean = tot[0] / count
    var = jnp.maximum(tot[1] / count - mean * mean, 0.0)    # biased, as PyTorch
    # TODO(synk): switch to centered per-tile partials + parallel-variance
    # combine if conv outputs ever have |mean| >> std (catastrophic cancel).
    g = jnp.zeros((cout_p,), jnp.float32).at[:cout].set(gamma.astype(jnp.float32))
    b = jnp.zeros((cout_p,), jnp.float32).at[:cout].set(beta.astype(jnp.float32))
    scale = g * jax.lax.rsqrt(var + _BN_EPS)
    shift = b - mean * scale
    return scale.reshape(1, cout_p), shift.reshape(1, cout_p)


# --------------------------------------------------------------------------
# BottleneckBlock forward.
# --------------------------------------------------------------------------
def bottleneck_block(x_nchw, params, stride):
    x = jnp.transpose(x_nchw, (0, 2, 3, 1))                 # NCHW -> NHWC
    # TODO(synk): in a multi-block network keep activations NHWC / channel-
    # padded bf16 across blocks instead of transposing at every boundary.
    n, h, w, cin = x.shape
    cout = params["w1"].shape[-1]
    cin_p = _round_up(cin, _LANES)
    cout_p = _round_up(cout, _LANES)
    ho = (h + 2 - 3) // stride + 1
    wo = (w + 2 - 3) // stride + 1
    m = n * ho * wo
    has_proj = (stride != 1) or (cin != cout)
    vmem_limit = _vmem_limit()

    x_p = jnp.pad(x, ((0, 0), (0, 0), (0, 0), (0, cin_p - cin)))
    ph1 = _make_phases(x_p, pad=1, stride=stride)
    w1 = _deep_weight(params["w1"], cin_p, cout_p)

    # conv1 (3x3/stride) [+ fused 1x1 skip projection] + BN partial stats.
    if has_proj:
        ws = _skip_weight(params["ws"], cin_p, cout_p)
        u1, st1, us, sts = conv_bn_stats(ph1, w1, k=3, stride=stride,
                                         ho=ho, wo=wo, cin_p=cin_p,
                                         w_skip=ws, vmem_limit=vmem_limit)
    else:
        u1, st1 = conv_bn_stats(ph1, w1, k=3, stride=stride, ho=ho, wo=wo,
                                cin_p=cin_p, vmem_limit=vmem_limit)

    sc1, sh1 = _bn_fold(st1, params["g1"], params["b1"], m, cout, cout_p)
    # Pad fusion: a1 comes out already zero-haloed for the stride-1 conv2.
    a1p = bn_relu_pad(u1, sc1, sh1, vmem_limit=vmem_limit)   # (n, ho+2, wo+2, C)

    # conv2 (3x3, stride 1) + BN partial stats.
    ph2 = a1p.reshape(n, 1, ho + 2, wo + 2, cout_p)          # free: add phase dim
    w2 = _deep_weight(params["w2"], cout_p, cout_p)
    u2, st2 = conv_bn_stats(ph2, w2, k=3, stride=1, ho=ho, wo=wo,
                            cin_p=cout_p, vmem_limit=vmem_limit)
    sc2, sh2 = _bn_fold(st2, params["g2"], params["b2"], m, cout, cout_p)

    # Fused: bn2(conv2) + bn_skip(skip)/identity, then ReLU.
    if has_proj:
        scs, shs = _bn_fold(sts, params["gs"], params["bs"], m, cout, cout_p)
        out = bn_add_relu(u2, sc2, sh2, us, res_scale=scs, res_shift=shs,
                          out_dtype=jnp.float32, vmem_limit=vmem_limit)
    else:
        # identity path: stride==1 and cin==cout, so shapes/padding line up.
        res = x_p.astype(jnp.bfloat16)                       # (n, ho, wo, cout_p)
        out = bn_add_relu(u2, sc2, sh2, res,
                          out_dtype=jnp.float32, vmem_limit=vmem_limit)

    out = out[..., :cout]
    return jnp.transpose(out, (0, 3, 1, 2))                  # back to NCHW


# --------------------------------------------------------------------------
# Pure-JAX reference with matching numerics (bf16 conv inputs, f32 acc,
# f32 training-mode BatchNorm).  Correctness check only.
# --------------------------------------------------------------------------
def _ref_forward(x_nchw, params, stride):
    x = jnp.transpose(x_nchw, (0, 2, 3, 1))

    def conv(a, w, s, pad):
        return jax.lax.conv_general_dilated(
            a.astype(jnp.bfloat16), w.astype(jnp.bfloat16), (s, s),
            [(pad, pad), (pad, pad)],
            dimension_numbers=("NHWC", "HWIO", "NHWC"),
            preferred_element_type=jnp.float32)

    def bn(a, g, b):
        mean = jnp.mean(a, axis=(0, 1, 2), keepdims=True)
        var = jnp.mean(jnp.square(a - mean), axis=(0, 1, 2), keepdims=True)
        return (a - mean) * jax.lax.rsqrt(var + _BN_EPS) * g + b

    cin, cout = x.shape[-1], params["w1"].shape[-1]
    out = jax.nn.relu(bn(conv(x, params["w1"], stride, 1),
                         params["g1"], params["b1"]))
    out = bn(conv(out, params["w2"], 1, 1), params["g2"], params["b2"])
    if stride != 1 or cin != cout:
        identity = bn(conv(x, params["ws"], stride, 0),
                      params["gs"], params["bs"])
    else:
        identity = x
    out = jax.nn.relu(out + identity)
    return jnp.transpose(out, (0, 3, 1, 2))


# --------------------------------------------------------------------------
if __name__ == "__main__":
    key = jax.random.PRNGKey(0)

    def make_params(k, cin, cout, with_proj):
        k1, k2, k3 = jax.random.split(k, 3)
        p = {
            "w1": 0.1 * jax.random.normal(k1, (3, 3, cin, cout), jnp.float32),
            "w2": 0.1 * jax.random.normal(k2, (3, 3, cout, cout), jnp.float32),
            "g1": jnp.ones((cout,), jnp.float32),
            "b1": jnp.zeros((cout,), jnp.float32),
            "g2": jnp.ones((cout,), jnp.float32),
            "b2": jnp.zeros((cout,), jnp.float32),
        }
        if with_proj:
            p["ws"] = 0.1 * jax.random.normal(k3, (1, 1, cin, cout),
                                              jnp.float32)
            p["gs"] = jnp.ones((cout,), jnp.float32)
            p["bs"] = jnp.zeros((cout,), jnp.float32)
        return p

    fwd = jax.jit(bottleneck_block, static_argnums=(2,))

    # Case 1: projection skip (stride 2, channel change) -> fused 1x1 skip.
    k_a, k_b, k_x1, k_x2 = jax.random.split(key, 4)
    n, cin, h, w_, cout, stride = 2, 4, 16, 16, 8, 2
    params1 = make_params(k_a, cin, cout, with_proj=True)
    x1 = jax.random.normal(k_x1, (n, cin, h, w_), jnp.float32)
    out1 = jax.block_until_ready(fwd(x1, params1, stride))
    ref1 = jax.block_until_ready(_ref_forward(x1, params1, stride))
    assert out1.shape == (n, cout, h // stride, w_ // stride)
    assert jnp.allclose(out1, ref1, atol=2e-2, rtol=2e-2), \
        float(jnp.max(jnp.abs(out1 - ref1)))

    # Case 2: identity skip (stride 1, same channels).
    c2 = 8
    params2 = make_params(k_b, c2, c2, with_proj=False)
    x2 = jax.random.normal(k_x2, (n, c2, h, w_), jnp.float32)
    out2 = jax.block_until_ready(fwd(x2, params2, 1))
    ref2 = jax.block_until_ready(_ref_forward(x2, params2, 1))
    assert out2.shape == (n, c2, h, w_)
    assert jnp.allclose(out2, ref2, atol=2e-2, rtol=2e-2), \
        float(jnp.max(jnp.abs(out2 - ref2)))

    print("KERNEL_OK")
</pallas_src>

<mosaic_0001>
module attributes {stable_mosaic.version = 11 : i64} {
  func.func @_conv_stats_kernel(%arg0: i32, %arg1: i32, %arg2: memref<1x4x9x9x128xbf16, #tpu.memory_space<vmem>>, %arg3: memref<1152x128xbf16, #tpu.memory_space<vmem>>, %arg4: memref<128x128xbf16, #tpu.memory_space<vmem>>, %arg5: memref<1x8x8x128xbf16, #tpu.memory_space<vmem>>, %arg6: memref<1x1x2x128xf32, #tpu.memory_space<vmem>>, %arg7: memref<1x8x8x128xbf16, #tpu.memory_space<vmem>>, %arg8: memref<1x1x2x128xf32, #tpu.memory_space<vmem>>) attributes {dimension_semantics = [#tpu.dimension_semantics<parallel>, #tpu.dimension_semantics<arbitrary>], iteration_bounds = array<i64: 2, 1>, scalar_prefetch = 0 : i64, scratch_operands = 0 : i64, tpu.core_type = #tpu.core_type<tc>, window_params = [{pipeline_mode = #tpu.pipeline_mode<synchronous>, transform_indices = @transform_0, window_bounds = array<i64: 1, 4, 9, 9, 128>}, {pipeline_mode = #tpu.pipeline_mode<synchronous>, transform_indices = @transform_1, window_bounds = array<i64: 1152, 128>}, {pipeline_mode = #tpu.pipeline_mode<synchronous>, transform_indices = @transform_2, window_bounds = array<i64: 128, 128>}, {transform_indices = @transform_3, window_bounds = array<i64: 1, 8, 8, 128>}, {transform_indices = @transform_4, window_bounds = array<i64: 1, 1, 2, 128>}, {transform_indices = @transform_5, window_bounds = array<i64: 1, 8, 8, 128>}, {transform_indices = @transform_6, window_bounds = array<i64: 1, 1, 2, 128>}]} {
    %c8_i32 = arith.constant 8 : i32
    %0 = arith.muli %arg1, %c8_i32 : i32
    %c0_i32 = arith.constant 0 : i32
    %1 = arith.addi %0, %c0_i32 : i32
    %c0 = arith.constant 0 : index
    %c0_0 = arith.constant 0 : index
    %2 = arith.index_cast %1 : i32 to index
    %c0_1 = arith.constant 0 : index
    %c0_2 = arith.constant 0 : index
    %3 = vector.load %arg2[%c0, %c0_0, %2, %c0_1, %c0_2] : memref<1x4x9x9x128xbf16, #tpu.memory_space<vmem>>, vector<1x1x8x8x128xbf16>
    %4 = vector.shape_cast %3 : vector<1x1x8x8x128xbf16> to vector<8x8x128xbf16>
    %c0_i32_3 = arith.constant 0 : i32
    %5 = arith.addi %0, %c0_i32_3 : i32
    %c0_4 = arith.constant 0 : index
    %c1 = arith.constant 1 : index
    %6 = arith.index_cast %5 : i32 to index
    %c0_5 = arith.constant 0 : index
    %c0_6 = arith.constant 0 : index
    %7 = vector.load %arg2[%c0_4, %c1, %6, %c0_5, %c0_6] : memref<1x4x9x9x128xbf16, #tpu.memory_space<vmem>>, vector<1x1x8x8x128xbf16>
    %8 = vector.shape_cast %7 : vector<1x1x8x8x128xbf16> to vector<8x8x128xbf16>
    %c0_i32_7 = arith.constant 0 : i32
    %9 = arith.addi %0, %c0_i32_7 : i32
    %c0_8 = arith.constant 0 : index
    %c0_9 = arith.constant 0 : index
    %10 = arith.index_cast %9 : i32 to index
    %c1_10 = arith.constant 1 : index
    %c0_11 = arith.constant 0 : index
    %11 = vector.load %arg2[%c0_8, %c0_9, %10, %c1_10, %c0_11] : memref<1x4x9x9x128xbf16, #tpu.memory_space<vmem>>, vector<1x1x8x8x128xbf16>
    %12 = vector.shape_cast %11 : vector<1x1x8x8x128xbf16> to vector<8x8x128xbf16>
    %c0_i32_12 = arith.constant 0 : i32
    %13 = arith.addi %0, %c0_i32_12 : i32
    %c0_13 = arith.constant 0 : index
    %c2 = arith.constant 2 : index
    %14 = arith.index_cast %13 : i32 to index
    %c0_14 = arith.constant 0 : index
    %c0_15 = arith.constant 0 : index
    %15 = vector.load %arg2[%c0_13, %c2, %14, %c0_14, %c0_15] : memref<1x4x9x9x128xbf16, #tpu.memory_space<vmem>>, vector<1x1x8x8x128xbf16>
    %16 = vector.shape_cast %15 : vector<1x1x8x8x128xbf16> to vector<8x8x128xbf16>
    %c0_i32_16 = arith.constant 0 : i32
    %17 = arith.addi %0, %c0_i32_16 : i32
    %c0_17 = arith.constant 0 : index
    %c3 = arith.constant 3 : index
    %18 = arith.index_cast %17 : i32 to index
    %c0_18 = arith.constant 0 : index
    %c0_19 = arith.constant 0 : index
    %19 = vector.load %arg2[%c0_17, %c3, %18, %c0_18, %c0_19] : memref<1x4x9x9x128xbf16, #tpu.memory_space<vmem>>, vector<1x1x8x8x128xbf16>
    %20 = vector.shape_cast %19 : vector<1x1x8x8x128xbf16> to vector<8x8x128xbf16>
    %c0_i32_20 = arith.constant 0 : i32
    %21 = arith.addi %0, %c0_i32_20 : i32
    %c0_21 = arith.constant 0 : index
    %c2_22 = arith.constant 2 : index
    %22 = arith.index_cast %21 : i32 to index
    %c1_23 = arith.constant 1 : index
    %c0_24 = arith.constant 0 : index
    %23 = vector.load %arg2[%c0_21, %c2_22, %22, %c1_23, %c0_24] : memref<1x4x9x9x128xbf16, #tpu.memory_space<vmem>>, vector<1x1x8x8x128xbf16>
    %24 = vector.shape_cast %23 : vector<1x1x8x8x128xbf16> to vector<8x8x128xbf16>
    %c1_i32 = arith.constant 1 : i32
    %25 = arith.addi %0, %c1_i32 : i32
    %c0_25 = arith.constant 0 : index
    %c0_26 = arith.constant 0 : index
    %26 = arith.index_cast %25 : i32 to index
    %c0_27 = arith.constant 0 : index
    %c0_28 = arith.constant 0 : index
    %27 = vector.load %arg2[%c0_25, %c0_26, %26, %c0_27, %c0_28] : memref<1x4x9x9x128xbf16, #tpu.memory_space<vmem>>, vector<1x1x8x8x128xbf16>
    %28 = vector.shape_cast %27 : vector<1x1x8x8x128xbf16> to vector<8x8x128xbf16>
    %c1_i32_29 = arith.constant 1 : i32
    %29 = arith.addi %0, %c1_i32_29 : i32
    %c0_30 = arith.constant 0 : index
    %c1_31 = arith.constant 1 : index
    %30 = arith.index_cast %29 : i32 to index
    %c0_32 = arith.constant 0 : index
    %c0_33 = arith.constant 0 : index
    %31 = vector.load %arg2[%c0_30, %c1_31, %30, %c0_32, %c0_33] : memref<1x4x9x9x128xbf16, #tpu.memory_space<vmem>>, vector<1x1x8x8x128xbf16>
    %32 = vector.shape_cast %31 : vector<1x1x8x8x128xbf16> to vector<8x8x128xbf16>
    %c1_i32_34 = arith.constant 1 : i32
    %33 = arith.addi %0, %c1_i32_34 : i32
    %c0_35 = arith.constant 0 : index
    %c0_36 = arith.constant 0 : index
    %34 = arith.index_cast %33 : i32 to index
    %c1_37 = arith.constant 1 : index
    %c0_38 = arith.constant 0 : index
    %35 = vector.load %arg2[%c0_35, %c0_36, %34, %c1_37, %c0_38] : memref<1x4x9x9x128xbf16, #tpu.memory_space<vmem>>, vector<1x1x8x8x128xbf16>
    %36 = vector.shape_cast %35 : vector<1x1x8x8x128xbf16> to vector<8x8x128xbf16>
    %37 = tpu.concatenate %4, %8, %12, %16, %20, %24, %28, %32, %36 in 2 : vector<8x8x128xbf16>, vector<8x8x128xbf16>, vector<8x8x128xbf16>, vector<8x8x128xbf16>, vector<8x8x128xbf16>, vector<8x8x128xbf16>, vector<8x8x128xbf16>, vector<8x8x128xbf16>, vector<8x8x128xbf16> -> vector<8x8x1152xbf16>
    %38 = vector.shape_cast %37 : vector<8x8x1152xbf16> to vector<64x1152xbf16>
    %c0_39 = arith.constant 0 : index
    %c0_40 = arith.constant 0 : index
    %39 = vector.load %arg3[%c0_39, %c0_40] : memref<1152x128xbf16, #tpu.memory_space<vmem>>, vector<1152x128xbf16>
    %cst = arith.constant dense<0.000000e+00> : vector<64x128xf32>
    %40 = tpu.matmul %38, %39, %cst {dimension_numbers = #tpu.dot_dimension_numbers<[1], [0], [0], [1], [0, 0, 1, 1], [], []>} : vector<64x1152xbf16>, vector<1152x128xbf16>, vector<64x128xf32> -> vector<64x128xf32>
    %41 = arith.truncf %40 : vector<64x128xf32> to vector<64x128xbf16>
    %42 = vector.shape_cast %41 : vector<64x128xbf16> to vector<1x8x8x128xbf16>
    %c0_41 = arith.constant 0 : index
    %c0_42 = arith.constant 0 : index
    %c0_43 = arith.constant 0 : index
    %c0_44 = arith.constant 0 : index
    %43 = vector.load %arg5[%c0_41, %c0_42, %c0_43, %c0_44] : memref<1x8x8x128xbf16, #tpu.memory_space<vmem>>, vector<1x8x8x128xbf16>
    tpu.vector_store %arg5[%c0_41, %c0_42, %c0_43, %c0_44], %42 {strides = array<i32>} : memref<1x8x8x128xbf16, #tpu.memory_space<vmem>>, vector<1x8x8x128xbf16>,
    %cst_45 = arith.constant dense<0.000000e+00> : vector<128xf32>
    %44 = vector.multi_reduction <add>, %40, %cst_45 [0] : vector<64x128xf32> to vector<128xf32>
    %45 = vector.shape_cast %44 : vector<128xf32> to vector<1x128xf32>
    %46 = arith.mulf %40, %40 : vector<64x128xf32>
    %cst_46 = arith.constant dense<0.000000e+00> : vector<128xf32>
    %47 = vector.multi_reduction <add>, %46, %cst_46 [0] : vector<64x128xf32> to vector<128xf32>
    %48 = vector.shape_cast %47 : vector<128xf32> to vector<1x128xf32>
    %49 = tpu.concatenate %45, %48 in 0 : vector<1x128xf32>, vector<1x128xf32> -> vector<2x128xf32>
    %50 = vector.shape_cast %49 : vector<2x128xf32> to vector<1x1x2x128xf32>
    %c0_47 = arith.constant 0 : index
    %c0_48 = arith.constant 0 : index
    %c0_49 = arith.constant 0 : index
    %c0_50 = arith.constant 0 : index
    %51 = vector.load %arg6[%c0_47, %c0_48, %c0_49, %c0_50] : memref<1x1x2x128xf32, #tpu.memory_space<vmem>>, vector<1x1x2x128xf32>
    tpu.vector_store %arg6[%c0_47, %c0_48, %c0_49, %c0_50], %50 {strides = array<i32>} : memref<1x1x2x128xf32, #tpu.memory_space<vmem>>, vector<1x1x2x128xf32>,
    %52 = vector.shape_cast %20 : vector<8x8x128xbf16> to vector<64x128xbf16>
    %c0_51 = arith.constant 0 : index
    %c0_52 = arith.constant 0 : index
    %53 = vector.load %arg4[%c0_51, %c0_52] : memref<128x128xbf16, #tpu.memory_space<vmem>>, vector<128x128xbf16>
    %cst_53 = arith.constant dense<0.000000e+00> : vector<64x128xf32>
    %54 = tpu.matmul %52, %53, %cst_53 {dimension_numbers = #tpu.dot_dimension_numbers<[1], [0], [0], [1], [0, 0, 1, 1], [], []>} : vector<64x128xbf16>, vector<128x128xbf16>, vector<64x128xf32> -> vector<64x128xf32>
    %55 = arith.truncf %54 : vector<64x128xf32> to vector<64x128xbf16>
    %56 = vector.shape_cast %55 : vector<64x128xbf16> to vector<1x8x8x128xbf16>
    %c0_54 = arith.constant 0 : index
    %c0_55 = arith.constant 0 : index
    %c0_56 = arith.constant 0 : index
    %c0_57 = arith.constant 0 : index
    %57 = vector.load %arg7[%c0_54, %c0_55, %c0_56, %c0_57] : memref<1x8x8x128xbf16, #tpu.memory_space<vmem>>, vector<1x8x8x128xbf16>
    tpu.vector_store %arg7[%c0_54, %c0_55, %c0_56, %c0_57], %56 {strides = array<i32>} : memref<1x8x8x128xbf16, #tpu.memory_space<vmem>>, vector<1x8x8x128xbf16>,
    %cst_58 = arith.constant dense<0.000000e+00> : vector<128xf32>
    %58 = vector.multi_reduction <add>, %54, %cst_58 [0] : vector<64x128xf32> to vector<128xf32>
    %59 = vector.shape_cast %58 : vector<128xf32> to vector<1x128xf32>
    %60 = arith.mulf %54, %54 : vector<64x128xf32>
    %cst_59 = arith.constant dense<0.000000e+00> : vector<128xf32>
    %61 = vector.multi_reduction <add>, %60, %cst_59 [0] : vector<64x128xf32> to vector<128xf32>
    %62 = vector.shape_cast %61 : vector<128xf32> to vector<1x128xf32>
    %63 = tpu.concatenate %59, %62 in 0 : vector<1x128xf32>, vector<1x128xf32> -> vector<2x128xf32>
    %64 = vector.shape_cast %63 : vector<2x128xf32> to vector<1x1x2x128xf32>
    %c0_60 = arith.constant 0 : index
    %c0_61 = arith.constant 0 : index
    %c0_62 = arith.constant 0 : index
    %c0_63 = arith.constant 0 : index
    %65 = vector.load %arg8[%c0_60, %c0_61, %c0_62, %c0_63] : memref<1x1x2x128xf32, #tpu.memory_space<vmem>>, vector<1x1x2x128xf32>
    tpu.vector_store %arg8[%c0_60, %c0_61, %c0_62, %c0_63], %64 {strides = array<i32>} : memref<1x1x2x128xf32, #tpu.memory_space<vmem>>, vector<1x1x2x128xf32>,
    return
  }
  func.func @transform_0(%arg0: i32, %arg1: i32) -> (i32, i32, i32, i32, i32) {
    %c0_i32 = arith.constant 0 : i32
    %c0_i32_0 = arith.constant 0 : i32
    %c0_i32_1 = arith.constant 0 : i32
    %c0_i32_2 = arith.constant 0 : i32
    %c0_i32_3 = arith.constant 0 : i32
    return %arg0, %c0_i32, %c0_i32_0, %c0_i32_1, %c0_i32_2 : i32, i32, i32, i32, i32
  }
  func.func @transform_1(%arg0: i32, %arg1: i32) -> (i32, i32) {
    %c0_i32 = arith.constant 0 : i32
    %c0_i32_0 = arith.constant 0 : i32
    %c0_i32_1 = arith.constant 0 : i32
    return %c0_i32, %c0_i32_0 : i32, i32
  }
  func.func @transform_2(%arg0: i32, %arg1: i32) -> (i32, i32) {
    %c0_i32 = arith.constant 0 : i32
    %c0_i32_0 = arith.constant 0 : i32
    %c0_i32_1 = arith.constant 0 : i32
    return %c0_i32, %c0_i32_0 : i32, i32
  }
  func.func @transform_3(%arg0: i32, %arg1: i32) -> (i32, i32, i32, i32) {
    %c0_i32 = arith.constant 0 : i32
    %c0_i32_0 = arith.constant 0 : i32
    %c0_i32_1 = arith.constant 0 : i32
    return %arg0, %arg1, %c0_i32, %c0_i32_0 : i32, i32, i32, i32
  }
  func.func @transform_4(%arg0: i32, %arg1: i32) -> (i32, i32, i32, i32) {
    %c0_i32 = arith.constant 0 : i32
    %c0_i32_0 = arith.constant 0 : i32
    %c0_i32_1 = arith.constant 0 : i32
    return %arg0, %arg1, %c0_i32, %c0_i32_0 : i32, i32, i32, i32
  }
  func.func @transform_5(%arg0: i32, %arg1: i32) -> (i32, i32, i32, i32) {
    %c0_i32 = arith.constant 0 : i32
    %c0_i32_0 = arith.constant 0 : i32
    %c0_i32_1 = arith.constant 0 : i32
    return %arg0, %arg1, %c0_i32, %c0_i32_0 : i32, i32, i32, i32
  }
  func.func @transform_6(%arg0: i32, %arg1: i32) -> (i32, i32, i32, i32) {
    %c0_i32 = arith.constant 0 : i32
    %c0_i32_0 = arith.constant 0 : i32
    %c0_i32_1 = arith.constant 0 : i32
    return %arg0, %arg1, %c0_i32, %c0_i32_0 : i32, i32, i32, i32
  }
}

module attributes {stable_mosaic.version = 11 : i64} {
  func.func @_bn_relu_pad_kernel(%arg0: i32, %arg1: memref<1x8x8x128xbf16, #tpu.memory_space<vmem>>, %arg2: memref<1x128xf32, #tpu.memory_space<vmem>>, %arg3: memref<1x128xf32, #tpu.memory_space<vmem>>, %arg4: memref<1x10x10x128xbf16, #tpu.memory_space<vmem>>) attributes {dimension_semantics = [#tpu.dimension_semantics<parallel>], iteration_bounds = array<i64: 2>, scalar_prefetch = 0 : i64, scratch_operands = 0 : i64, tpu.core_type = #tpu.core_type<tc>, window_params = [{transform_indices = @transform_0, window_bounds = array<i64: 1, 8, 8, 128>}, {pipeline_mode = #tpu.pipeline_mode<synchronous>, transform_indices = @transform_1, window_bounds = array<i64: 1, 128>}, {pipeline_mode = #tpu.pipeline_mode<synchronous>, transform_indices = @transform_2, window_bounds = array<i64: 1, 128>}, {transform_indices = @transform_3, window_bounds = array<i64: 1, 10, 10, 128>}]} {
    %c0 = arith.constant 0 : index
    %c0_0 = arith.constant 0 : index
    %c0_1 = arith.constant 0 : index
    %c0_2 = arith.constant 0 : index
    %0 = vector.load %arg1[%c0, %c0_0, %c0_1, %c0_2] : memref<1x8x8x128xbf16, #tpu.memory_space<vmem>>, vector<1x8x8x128xbf16>
    %1 = arith.extf %0 : vector<1x8x8x128xbf16> to vector<1x8x8x128xf32>
    %c0_3 = arith.constant 0 : index
    %c0_4 = arith.constant 0 : index
    %2 = vector.load %arg2[%c0_3, %c0_4] : memref<1x128xf32, #tpu.memory_space<vmem>>, vector<1x128xf32>
    %3 = vector.shape_cast %2 : vector<1x128xf32> to vector<1x1x1x128xf32>
    %4 = vector.broadcast %3 : vector<1x1x1x128xf32> to vector<1x8x8x128xf32>
    %5 = arith.mulf %1, %4 : vector<1x8x8x128xf32>
    %c0_5 = arith.constant 0 : index
    %c0_6 = arith.constant 0 : index
    %6 = vector.load %arg3[%c0_5, %c0_6] : memref<1x128xf32, #tpu.memory_space<vmem>>, vector<1x128xf32>
    %7 = vector.shape_cast %6 : vector<1x128xf32> to vector<1x1x1x128xf32>
    %8 = vector.broadcast %7 : vector<1x1x1x128xf32> to vector<1x8x8x128xf32>
    %9 = arith.addf %5, %8 : vector<1x8x8x128xf32>
    %cst = arith.constant 0.000000e+00 : f32
    %10 = vector.broadcast %cst : f32 to vector<1x8x8x128xf32>
    %11 = arith.maximumf %9, %10 : vector<1x8x8x128xf32>
    %12 = arith.truncf %11 : vector<1x8x8x128xf32> to vector<1x8x8x128xbf16>
    %cst_7 = arith.constant 0.000000e+00 : bf16
    %13 = vector.broadcast %cst_7 : bf16 to vector<1x10x10x128xbf16>
    %c0_8 = arith.constant 0 : index
    %c0_9 = arith.constant 0 : index
    %c0_10 = arith.constant 0 : index
    %c0_11 = arith.constant 0 : index
    %14 = vector.load %arg4[%c0_8, %c0_9, %c0_10, %c0_11] : memref<1x10x10x128xbf16, #tpu.memory_space<vmem>>, vector<1x10x10x128xbf16>
    tpu.vector_store %arg4[%c0_8, %c0_9, %c0_10, %c0_11], %13 {strides = array<i32>} : memref<1x10x10x128xbf16, #tpu.memory_space<vmem>>, vector<1x10x10x128xbf16>,
    %c0_12 = arith.constant 0 : index
    %c1 = arith.constant 1 : index
    %c1_13 = arith.constant 1 : index
    %c0_14 = arith.constant 0 : index
    %15 = vector.load %arg4[%c0_12, %c1, %c1_13, %c0_14] : memref<1x10x10x128xbf16, #tpu.memory_space<vmem>>, vector<1x8x8x128xbf16>
    tpu.vector_store %arg4[%c0_12, %c1, %c1_13, %c0_14], %12 {strides = array<i32>} : memref<1x10x10x128xbf16, #tpu.memory_space<vmem>>, vector<1x8x8x128xbf16>,
    return
  }
  func.func @transform_0(%arg0: i32) -> (i32, i32, i32, i32) {
    %c0_i32 = arith.constant 0 : i32
    %c0_i32_0 = arith.constant 0 : i32
    %c0_i32_1 = arith.constant 0 : i32
    %c0_i32_2 = arith.constant 0 : i32
    return %arg0, %c0_i32, %c0_i32_0, %c0_i32_1 : i32, i32, i32, i32
  }
  func.func @transform_1(%arg0: i32) -> (i32, i32) {
    %c0_i32 = arith.constant 0 : i32
    %c0_i32_0 = arith.constant 0 : i32
    %c0_i32_1 = arith.constant 0 : i32
    return %c0_i32, %c0_i32_0 : i32, i32
  }
  func.func @transform_2(%arg0: i32) -> (i32, i32) {
    %c0_i32 = arith.constant 0 : i32
    %c0_i32_0 = arith.constant 0 : i32
    %c0_i32_1 = arith.constant 0 : i32
    return %c0_i32, %c0_i32_0 : i32, i32
  }
  func.func @transform_3(%arg0: i32) -> (i32, i32, i32, i32) {
    %c0_i32 = arith.constant 0 : i32
    %c0_i32_0 = arith.constant 0 : i32
    %c0_i32_1 = arith.constant 0 : i32
    %c0_i32_2 = arith.constant 0 : i32
    return %arg0, %c0_i32, %c0_i32_0, %c0_i32_1 : i32, i32, i32, i32
  }
}

module attributes {stable_mosaic.version = 11 : i64} {
  func.func @_conv_stats_kernel(%arg0: i32, %arg1: i32, %arg2: memref<1x1x10x10x128xbf16, #tpu.memory_space<vmem>>, %arg3: memref<1152x128xbf16, #tpu.memory_space<vmem>>, %arg4: memref<1x8x8x128xbf16, #tpu.memory_space<vmem>>, %arg5: memref<1x1x2x128xf32, #tpu.memory_space<vmem>>) attributes {dimension_semantics = [#tpu.dimension_semantics<parallel>, #tpu.dimension_semantics<arbitrary>], iteration_bounds = array<i64: 2, 1>, scalar_prefetch = 0 : i64, scratch_operands = 0 : i64, tpu.core_type = #tpu.core_type<tc>, window_params = [{pipeline_mode = #tpu.pipeline_mode<synchronous>, transform_indices = @transform_0, window_bounds = array<i64: 1, 1, 10, 10, 128>}, {pipeline_mode = #tpu.pipeline_mode<synchronous>, transform_indices = @transform_1, window_bounds = array<i64: 1152, 128>}, {transform_indices = @transform_2, window_bounds = array<i64: 1, 8, 8, 128>}, {transform_indices = @transform_3, window_bounds = array<i64: 1, 1, 2, 128>}]} {
    %c8_i32 = arith.constant 8 : i32
    %0 = arith.muli %arg1, %c8_i32 : i32
    %c0_i32 = arith.constant 0 : i32
    %1 = arith.addi %0, %c0_i32 : i32
    %c0 = arith.constant 0 : index
    %c0_0 = arith.constant 0 : index
    %2 = arith.index_cast %1 : i32 to index
    %c0_1 = arith.constant 0 : index
    %c0_2 = arith.constant 0 : index
    %3 = vector.load %arg2[%c0, %c0_0, %2, %c0_1, %c0_2] : memref<1x1x10x10x128xbf16, #tpu.memory_space<vmem>>, vector<1x1x8x8x128xbf16>
    %4 = vector.shape_cast %3 : vector<1x1x8x8x128xbf16> to vector<8x8x128xbf16>
    %c0_i32_3 = arith.constant 0 : i32
    %5 = arith.addi %0, %c0_i32_3 : i32
    %c0_4 = arith.constant 0 : index
    %c0_5 = arith.constant 0 : index
    %6 = arith.index_cast %5 : i32 to index
    %c1 = arith.constant 1 : index
    %c0_6 = arith.constant 0 : index
    %7 = vector.load %arg2[%c0_4, %c0_5, %6, %c1, %c0_6] : memref<1x1x10x10x128xbf16, #tpu.memory_space<vmem>>, vector<1x1x8x8x128xbf16>
    %8 = vector.shape_cast %7 : vector<1x1x8x8x128xbf16> to vector<8x8x128xbf16>
    %c0_i32_7 = arith.constant 0 : i32
    %9 = arith.addi %0, %c0_i32_7 : i32
    %c0_8 = arith.constant 0 : index
    %c0_9 = arith.constant 0 : index
    %10 = arith.index_cast %9 : i32 to index
    %c2 = arith.constant 2 : index
    %c0_10 = arith.constant 0 : index
    %11 = vector.load %arg2[%c0_8, %c0_9, %10, %c2, %c0_10] : memref<1x1x10x10x128xbf16, #tpu.memory_space<vmem>>, vector<1x1x8x8x128xbf16>
    %12 = vector.shape_cast %11 : vector<1x1x8x8x128xbf16> to vector<8x8x128xbf16>
    %c1_i32 = arith.constant 1 : i32
    %13 = arith.addi %0, %c1_i32 : i32
    %c0_11 = arith.constant 0 : index
    %c0_12 = arith.constant 0 : index
    %14 = arith.index_cast %13 : i32 to index
    %c0_13 = arith.constant 0 : index
    %c0_14 = arith.constant 0 : index
    %15 = vector.load %arg2[%c0_11, %c0_12, %14, %c0_13, %c0_14] : memref<1x1x10x10x128xbf16, #tpu.memory_space<vmem>>, vector<1x1x8x8x128xbf16>
    %16 = vector.shape_cast %15 : vector<1x1x8x8x128xbf16> to vector<8x8x128xbf16>
    %c1_i32_15 = arith.constant 1 : i32
    %17 = arith.addi %0, %c1_i32_15 : i32
    %c0_16 = arith.constant 0 : index
    %c0_17 = arith.constant 0 : index
    %18 = arith.index_cast %17 : i32 to index
    %c1_18 = arith.constant 1 : index
    %c0_19 = arith.constant 0 : index
    %19 = vector.load %arg2[%c0_16, %c0_17, %18, %c1_18, %c0_19] : memref<1x1x10x10x128xbf16, #tpu.memory_space<vmem>>, vector<1x1x8x8x128xbf16>
    %20 = vector.shape_cast %19 : vector<1x1x8x8x128xbf16> to vector<8x8x128xbf16>
    %c1_i32_20 = arith.constant 1 : i32
    %21 = arith.addi %0, %c1_i32_20 : i32
    %c0_21 = arith.constant 0 : index
    %c0_22 = arith.constant 0 : index
    %22 = arith.index_cast %21 : i32 to index
    %c2_23 = arith.constant 2 : index
    %c0_24 = arith.constant 0 : index
    %23 = vector.load %arg2[%c0_21, %c0_22, %22, %c2_23, %c0_24] : memref<1x1x10x10x128xbf16, #tpu.memory_space<vmem>>, vector<1x1x8x8x128xbf16>
    %24 = vector.shape_cast %23 : vector<1x1x8x8x128xbf16> to vector<8x8x128xbf16>
    %c2_i32 = arith.constant 2 : i32
    %25 = arith.addi %0, %c2_i32 : i32
    %c0_25 = arith.constant 0 : index
    %c0_26 = arith.constant 0 : index
    %26 = arith.index_cast %25 : i32 to index
    %c0_27 = arith.constant 0 : index
    %c0_28 = arith.constant 0 : index
    %27 = vector.load %arg2[%c0_25, %c0_26, %26, %c0_27, %c0_28] : memref<1x1x10x10x128xbf16, #tpu.memory_space<vmem>>, vector<1x1x8x8x128xbf16>
    %28 = vector.shape_cast %27 : vector<1x1x8x8x128xbf16> to vector<8x8x128xbf16>
    %c2_i32_29 = arith.constant 2 : i32
    %29 = arith.addi %0, %c2_i32_29 : i32
    %c0_30 = arith.constant 0 : index
    %c0_31 = arith.constant 0 : index
    %30 = arith.index_cast %29 : i32 to index
    %c1_32 = arith.constant 1 : index
    %c0_33 = arith.constant 0 : index
    %31 = vector.load %arg2[%c0_30, %c0_31, %30, %c1_32, %c0_33] : memref<1x1x10x10x128xbf16, #tpu.memory_space<vmem>>, vector<1x1x8x8x128xbf16>
    %32 = vector.shape_cast %31 : vector<1x1x8x8x128xbf16> to vector<8x8x128xbf16>
    %c2_i32_34 = arith.constant 2 : i32
    %33 = arith.addi %0, %c2_i32_34 : i32
    %c0_35 = arith.constant 0 : index
    %c0_36 = arith.constant 0 : index
    %34 = arith.index_cast %33 : i32 to index
    %c2_37 = arith.constant 2 : index
    %c0_38 = arith.constant 0 : index
    %35 = vector.load %arg2[%c0_35, %c0_36, %34, %c2_37, %c0_38] : memref<1x1x10x10x128xbf16, #tpu.memory_space<vmem>>, vector<1x1x8x8x128xbf16>
    %36 = vector.shape_cast %35 : vector<1x1x8x8x128xbf16> to vector<8x8x128xbf16>
    %37 = tpu.concatenate %4, %8, %12, %16, %20, %24, %28, %32, %36 in 2 : vector<8x8x128xbf16>, vector<8x8x128xbf16>, vector<8x8x128xbf16>, vector<8x8x128xbf16>, vector<8x8x128xbf16>, vector<8x8x128xbf16>, vector<8x8x128xbf16>, vector<8x8x128xbf16>, vector<8x8x128xbf16> -> vector<8x8x1152xbf16>
    %38 = vector.shape_cast %37 : vector<8x8x1152xbf16> to vector<64x1152xbf16>
    %c0_39 = arith.constant 0 : index
    %c0_40 = arith.constant 0 : index
    %39 = vector.load %arg3[%c0_39, %c0_40] : memref<1152x128xbf16, #tpu.memory_space<vmem>>, vector<1152x128xbf16>
    %cst = arith.constant dense<0.000000e+00> : vector<64x128xf32>
    %40 = tpu.matmul %38, %39, %cst {dimension_numbers = #tpu.dot_dimension_numbers<[1], [0], [0], [1], [0, 0, 1, 1], [], []>} : vector<64x1152xbf16>, vector<1152x128xbf16>, vector<64x128xf32> -> vector<64x128xf32>
    %41 = arith.truncf %40 : vector<64x128xf32> to vector<64x128xbf16>
    %42 = vector.shape_cast %41 : vector<64x128xbf16> to vector<1x8x8x128xbf16>
    %c0_41 = arith.constant 0 : index
    %c0_42 = arith.constant 0 : index
    %c0_43 = arith.constant 0 : index
    %c0_44 = arith.constant 0 : index
    %43 = vector.load %arg4[%c0_41, %c0_42, %c0_43, %c0_44] : memref<1x8x8x128xbf16, #tpu.memory_space<vmem>>, vector<1x8x8x128xbf16>
    tpu.vector_store %arg4[%c0_41, %c0_42, %c0_43, %c0_44], %42 {strides = array<i32>} : memref<1x8x8x128xbf16, #tpu.memory_space<vmem>>, vector<1x8x8x128xbf16>,
    %cst_45 = arith.constant dense<0.000000e+00> : vector<128xf32>
    %44 = vector.multi_reduction <add>, %40, %cst_45 [0] : vector<64x128xf32> to vector<128xf32>
    %45 = vector.shape_cast %44 : vector<128xf32> to vector<1x128xf32>
    %46 = arith.mulf %40, %40 : vector<64x128xf32>
    %cst_46 = arith.constant dense<0.000000e+00> : vector<128xf32>
    %47 = vector.multi_reduction <add>, %46, %cst_46 [0] : vector<64x128xf32> to vector<128xf32>
    %48 = vector.shape_cast %47 : vector<128xf32> to vector<1x128xf32>
    %49 = tpu.concatenate %45, %48 in 0 : vector<1x128xf32>, vector<1x128xf32> -> vector<2x128xf32>
    %50 = vector.shape_cast %49 : vector<2x128xf32> to vector<1x1x2x128xf32>
    %c0_47 = arith.constant 0 : index
    %c0_48 = arith.constant 0 : index
    %c0_49 = arith.constant 0 : index
    %c0_50 = arith.constant 0 : index
    %51 = vector.load %arg5[%c0_47, %c0_48, %c0_49, %c0_50] : memref<1x1x2x128xf32, #tpu.memory_space<vmem>>, vector<1x1x2x128xf32>
    tpu.vector_store %arg5[%c0_47, %c0_48, %c0_49, %c0_50], %50 {strides = array<i32>} : memref<1x1x2x128xf32, #tpu.memory_space<vmem>>, vector<1x1x2x128xf32>,
    return
  }
  func.func @transform_0(%arg0: i32, %arg1: i32) -> (i32, i32, i32, i32, i32) {
    %c0_i32 = arith.constant 0 : i32
    %c0_i32_0 = arith.constant 0 : i32
    %c0_i32_1 = arith.constant 0 : i32
    %c0_i32_2 = arith.constant 0 : i32
    %c0_i32_3 = arith.constant 0 : i32
    return %arg0, %c0_i32, %c0_i32_0, %c0_i32_1, %c0_i32_2 : i32, i32, i32, i32, i32
  }
  func.func @transform_1(%arg0: i32, %arg1: i32) -> (i32, i32) {
    %c0_i32 = arith.constant 0 : i32
    %c0_i32_0 = arith.constant 0 : i32
    %c0_i32_1 = arith.constant 0 : i32
    return %c0_i32, %c0_i32_0 : i32, i32
  }
  func.func @transform_2(%arg0: i32, %arg1: i32) -> (i32, i32, i32, i32) {
    %c0_i32 = arith.constant 0 : i32
    %c0_i32_0 = arith.constant 0 : i32
    %c0_i32_1 = arith.constant 0 : i32
    return %arg0, %arg1, %c0_i32, %c0_i32_0 : i32, i32, i32, i32
  }
  func.func @transform_3(%arg0: i32, %arg1: i32) -> (i32, i32, i32, i32) {
    %c0_i32 = arith.constant 0 : i32
    %c0_i32_0 = arith.constant 0 : i32
    %c0_i32_1 = arith.constant 0 : i32
    return %arg0, %arg1, %c0_i32, %c0_i32_0 : i32, i32, i32, i32
  }
}

module attributes {stable_mosaic.version = 11 : i64} {
  func.func @_bn_add_relu_kernel(%arg0: i32, %arg1: i32, %arg2: memref<1x8x8x128xbf16, #tpu.memory_space<vmem>>, %arg3: memref<1x128xf32, #tpu.memory_space<vmem>>, %arg4: memref<1x128xf32, #tpu.memory_space<vmem>>, %arg5: memref<1x8x8x128xbf16, #tpu.memory_space<vmem>>, %arg6: memref<1x128xf32, #tpu.memory_space<vmem>>, %arg7: memref<1x128xf32, #tpu.memory_space<vmem>>, %arg8: memref<1x8x8x128xf32, #tpu.memory_space<vmem>>) attributes {dimension_semantics = [#tpu.dimension_semantics<parallel>, #tpu.dimension_semantics<arbitrary>], iteration_bounds = array<i64: 2, 1>, scalar_prefetch = 0 : i64, scratch_operands = 0 : i64, tpu.core_type = #tpu.core_type<tc>, window_params = [{transform_indices = @transform_0, window_bounds = array<i64: 1, 8, 8, 128>}, {pipeline_mode = #tpu.pipeline_mode<synchronous>, transform_indices = @transform_1, window_bounds = array<i64: 1, 128>}, {pipeline_mode = #tpu.pipeline_mode<synchronous>, transform_indices = @transform_2, window_bounds = array<i64: 1, 128>}, {transform_indices = @transform_3, window_bounds = array<i64: 1, 8, 8, 128>}, {pipeline_mode = #tpu.pipeline_mode<synchronous>, transform_indices = @transform_4, window_bounds = array<i64: 1, 128>}, {pipeline_mode = #tpu.pipeline_mode<synchronous>, transform_indices = @transform_5, window_bounds = array<i64: 1, 128>}, {transform_indices = @transform_6, window_bounds = array<i64: 1, 8, 8, 128>}]} {
    %c0 = arith.constant 0 : index
    %c0_0 = arith.constant 0 : index
    %c0_1 = arith.constant 0 : index
    %c0_2 = arith.constant 0 : index
    %0 = vector.load %arg2[%c0, %c0_0, %c0_1, %c0_2] : memref<1x8x8x128xbf16, #tpu.memory_space<vmem>>, vector<1x8x8x128xbf16>
    %1 = arith.extf %0 : vector<1x8x8x128xbf16> to vector<1x8x8x128xf32>
    %c0_3 = arith.constant 0 : index
    %c0_4 = arith.constant 0 : index
    %2 = vector.load %arg3[%c0_3, %c0_4] : memref<1x128xf32, #tpu.memory_space<vmem>>, vector<1x128xf32>
    %3 = vector.shape_cast %2 : vector<1x128xf32> to vector<1x1x1x128xf32>
    %4 = vector.broadcast %3 : vector<1x1x1x128xf32> to vector<1x8x8x128xf32>
    %5 = arith.mulf %1, %4 : vector<1x8x8x128xf32>
    %c0_5 = arith.constant 0 : index
    %c0_6 = arith.constant 0 : index
    %6 = vector.load %arg4[%c0_5, %c0_6] : memref<1x128xf32, #tpu.memory_space<vmem>>, vector<1x128xf32>
    %7 = vector.shape_cast %6 : vector<1x128xf32> to vector<1x1x1x128xf32>
    %8 = vector.broadcast %7 : vector<1x1x1x128xf32> to vector<1x8x8x128xf32>
    %9 = arith.addf %5, %8 : vector<1x8x8x128xf32>
    %c0_7 = arith.constant 0 : index
    %c0_8 = arith.constant 0 : index
    %c0_9 = arith.constant 0 : index
    %c0_10 = arith.constant 0 : index
    %10 = vector.load %arg5[%c0_7, %c0_8, %c0_9, %c0_10] : memref<1x8x8x128xbf16, #tpu.memory_space<vmem>>, vector<1x8x8x128xbf16>
    %11 = arith.extf %10 : vector<1x8x8x128xbf16> to vector<1x8x8x128xf32>
    %c0_11 = arith.constant 0 : index
    %c0_12 = arith.constant 0 : index
    %12 = vector.load %arg6[%c0_11, %c0_12] : memref<1x128xf32, #tpu.memory_space<vmem>>, vector<1x128xf32>
    %13 = vector.shape_cast %12 : vector<1x128xf32> to vector<1x1x1x128xf32>
    %14 = vector.broadcast %13 : vector<1x1x1x128xf32> to vector<1x8x8x128xf32>
    %15 = arith.mulf %11, %14 : vector<1x8x8x128xf32>
    %c0_13 = arith.constant 0 : index
    %c0_14 = arith.constant 0 : index
    %16 = vector.load %arg7[%c0_13, %c0_14] : memref<1x128xf32, #tpu.memory_space<vmem>>, vector<1x128xf32>
    %17 = vector.shape_cast %16 : vector<1x128xf32> to vector<1x1x1x128xf32>
    %18 = vector.broadcast %17 : vector<1x1x1x128xf32> to vector<1x8x8x128xf32>
    %19 = arith.addf %15, %18 : vector<1x8x8x128xf32>
    %20 = arith.addf %9, %19 : vector<1x8x8x128xf32>
    %cst = arith.constant 0.000000e+00 : f32
    %21 = vector.broadcast %cst : f32 to vector<1x8x8x128xf32>
    %22 = arith.maximumf %20, %21 : vector<1x8x8x128xf32>
    %c0_15 = arith.constant 0 : index
    %c0_16 = arith.constant 0 : index
    %c0_17 = arith.constant 0 : index
    %c0_18 = arith.constant 0 : index
    %23 = vector.load %arg8[%c0_15, %c0_16, %c0_17, %c0_18] : memref<1x8x8x128xf32, #tpu.memory_space<vmem>>, vector<1x8x8x128xf32>
    tpu.vector_store %arg8[%c0_15, %c0_16, %c0_17, %c0_18], %22 {strides = array<i32>} : memref<1x8x8x128xf32, #tpu.memory_space<vmem>>, vector<1x8x8x128xf32>,
    return
  }
  func.func @transform_0(%arg0: i32, %arg1: i32) -> (i32, i32, i32, i32) {
    %c0_i32 = arith.constant 0 : i32
    %c0_i32_0 = arith.constant 0 : i32
    %c0_i32_1 = arith.constant 0 : i32
    return %arg0, %arg1, %c0_i32, %c0_i32_0 : i32, i32, i32, i32
  }
  func.func @transform_1(%arg0: i32, %arg1: i32) -> (i32, i32) {
    %c0_i32 = arith.constant 0 : i32
    %c0_i32_0 = arith.constant 0 : i32
    %c0_i32_1 = arith.constant 0 : i32
    return %c0_i32, %c0_i32_0 : i32, i32
  }
  func.func @transform_2(%arg0: i32, %arg1: i32) -> (i32, i32) {
    %c0_i32 = arith.constant 0 : i32
    %c0_i32_0 = arith.constant 0 : i32
    %c0_i32_1 = arith.constant 0 : i32
    return %c0_i32, %c0_i32_0 : i32, i32
  }
  func.func @transform_3(%arg0: i32, %arg1: i32) -> (i32, i32, i32, i32) {
    %c0_i32 = arith.constant 0 : i32
    %c0_i32_0 = arith.constant 0 : i32
    %c0_i32_1 = arith.constant 0 : i32
    return %arg0, %arg1, %c0_i32, %c0_i32_0 : i32, i32, i32, i32
  }
  func.func @transform_4(%arg0: i32, %arg1: i32) -> (i32, i32) {
    %c0_i32 = arith.constant 0 : i32
    %c0_i32_0 = arith.constant 0 : i32
    %c0_i32_1 = arith.constant 0 : i32
    return %c0_i32, %c0_i32_0 : i32, i32
  }
  func.func @transform_5(%arg0: i32, %arg1: i32) -> (i32, i32) {
    %c0_i32 = arith.constant 0 : i32
    %c0_i32_0 = arith.constant 0 : i32
    %c0_i32_1 = arith.constant 0 : i32
    return %c0_i32, %c0_i32_0 : i32, i32
  }
  func.func @transform_6(%arg0: i32, %arg1: i32) -> (i32, i32, i32, i32) {
    %c0_i32 = arith.constant 0 : i32
    %c0_i32_0 = arith.constant 0 : i32
    %c0_i32_1 = arith.constant 0 : i32
    return %arg0, %arg1, %c0_i32, %c0_i32_0 : i32, i32, i32, i32
  }
}

</mosaic_0001>

<llo_original>
// kernel: bottleneck_block.5
$region0: #{bottleneck_block.5}
  #allocation0 [shape = 'u32[]', space=smem, size = 0x4, offset = 0x4, fixed_abs, tag = 'smem constant byte address 0x4 - core index']
  #allocation1 [shape = 'u32[144,128]{1,0:T(1,128)}', space=vmem, size = 0x12000, scoped, tag = 'internal scratch']
  %s0 = inlined_call_operand.hbm [shape: bf16[2,8,8,128], index: 0, kind: input, shape index: {}]
  %s1 = inlined_call_operand.hbm [shape: f32[1,128], index: 1, kind: input, shape index: {}]
  %s2 = inlined_call_operand.hbm [shape: f32[1,128], index: 2, kind: input, shape index: {}]
  %s3 = inlined_call_operand.hbm [shape: bf16[2,10,10,128], index: 3, kind: output, shape index: {}]
  %s4 = sld [smem:[#allocation0]]
  $region57: #{bottleneck_block.5} parent=0
    _
  %s6 = ssub.s32 1, %s4
  %s7 = scalar_select 0, %s6, %s4
  $region1: #{bottleneck_block.5} parent=0
    #allocation2 [shape = 'u8[32768]{0}', space=vmem, size = 0x8000, scoped, tag = 'input window, operand 0']
    #allocation3 [shape = 's32[2]{0}', space=sflag, size = 0x8, scoped, tag = 'scoped memory for bottleneck_block.5']
    #allocation4 [shape = 's32[2]{0}', space=sflag, size = 0x8, scoped, tag = 'scoped memory for bottleneck_block.5']
    #allocation5 [shape = 'u8[512]{0}', space=vmem, size = 0x400, scoped, tag = 'input window, operand 1, single buffered']
    #allocation6 [shape = 's32[1]{0}', space=sflag, size = 0x4, scoped, tag = 'scoped memory for bottleneck_block.5']
    #allocation7 [shape = 'u8[512]{0}', space=vmem, size = 0x400, scoped, tag = 'input window, operand 2, single buffered']
    #allocation8 [shape = 'u8[81920]{0}', space=vmem, size = 0x14000, scoped, tag = 'output window, operand 0']
    %8 = vsyncpa [#allocation3], 0
    %s9 = scalar_lea.sflag [#allocation3], 1
    %10 = vsyncpa %s9, 0
    %11 = vsyncpa [#allocation6], 0
    %12 = vsyncpa [#allocation4], 0
    %s13 = scalar_lea.sflag [#allocation4], 1
    %14 = vsyncpa %s13, 0
    loop: start=0, step=1, limit=4
    $region2: #{bottleneck_block.5} parent=1 // loop_pre_header
      _
    $region3: #{bottleneck_block.5} parent=1 // loop_header
      %s16 = sphi 0, %s20
      %p17 = scmp.ge.s32.totalorder %s16, 4
      %s26 = sphi 0, %s28
      %s29 = sphi 0, %s26
      %s30 = sphi 0, %s29
      %s46 = sphi 0, %s30
      %s50 = sphi 0, %s50
      %s52 = sphi 0, %s50
      %s53 = sphi 0, %s52
      %s67 = sphi 0, %s53
      %s71 = sphi 0, %s71
      %s73 = sphi 0, %s71
      %s74 = sphi 0, %s73
      %s88 = sphi 0, %s74
      %s94 = sphi 0, %s96
      %s97 = sphi 0, %s94
      %s98 = sphi 0, %s97
      %s114 = sphi 0, %s98
    $region4: #{bottleneck_block.5} parent=1 // loop_header_branch
      %19 = sbr.rel (%p17) target = $region8
    $region5: #{bottleneck_block.5} parent=1 // loop_body
      %s21 = ssub.s32 %s16, 1
      %s22 = ssub.s32 %s16, 2
      %s23 = sadd.s32 %s16, 1
      %s24 = ssub.s32 %s16, %s23
      %p25 = scmp.eq.s32.totalorder %s24, 0
      %s27 = sadd.s32 %s26, 1
      %s28 = scalar_select %p25, %s26, %s27
      %p31 = pneg %p25
      %p32 = scmp.eq.s32.totalorder %s16, 1
      %p33 = por %p31, %p32
      %p34 = scmp.ne.s32.totalorder %s26, %s29
      %p35 = scmp.eq.s32.totalorder %s16, 0
      %p36 = por %p34, %p35
      %p37 = scmp.ne.s32.totalorder %s26, %s29
      %p38 = scmp.eq.s32.totalorder %s21, 1
      %p39 = por %p37, %p38
      %p40 = scmp.ne.s32.totalorder %s29, %s30
      %p41 = scmp.eq.s32.totalorder %s21, 0
      %p42 = por %p40, %p41
      %p43 = scmp.ne.s32.totalorder %s29, %s30
      %p44 = scmp.eq.s32.totalorder %s22, 1
      %p45 = por %p43, %p44
      %p47 = scmp.ne.s32.totalorder %s30, %s46
      %p48 = scmp.eq.s32.totalorder %s22, 0
      %p49 = por %p47, %p48
      %s51 = sadd.s32 %s50, 1
      %p54 = scmp.eq.s32.totalorder %s16, 1
      %p55 = scmp.ne.s32.totalorder %s50, %s52
      %p56 = scmp.eq.s32.totalorder %s16, 0
      %p57 = por %p55, %p56
      %p58 = scmp.ne.s32.totalorder %s50, %s52
      %p59 = scmp.eq.s32.totalorder %s21, 1
      %p60 = por %p58, %p59
      %p61 = scmp.ne.s32.totalorder %s52, %s53
      %p62 = scmp.eq.s32.totalorder %s21, 0
      %p63 = por %p61, %p62
      %p64 = scmp.ne.s32.totalorder %s52, %s53
      %p65 = scmp.eq.s32.totalorder %s22, 1
      %p66 = por %p64, %p65
      %p68 = scmp.ne.s32.totalorder %s53, %s67
      %p69 = scmp.eq.s32.totalorder %s22, 0
      %p70 = por %p68, %p69
      %s72 = sadd.s32 %s71, 1
      %p75 = scmp.eq.s32.totalorder %s16, 1
      %p76 = scmp.ne.s32.totalorder %s71, %s73
      %p77 = scmp.eq.s32.totalorder %s16, 0
      %p78 = por %p76, %p77
      %p79 = scmp.ne.s32.totalorder %s71, %s73
      %p80 = scmp.eq.s32.totalorder %s21, 1
      %p81 = por %p79, %p80
      %p82 = scmp.ne.s32.totalorder %s73, %s74
      %p83 = scmp.eq.s32.totalorder %s21, 0
      %p84 = por %p82, %p83
      %p85 = scmp.ne.s32.totalorder %s73, %s74
      %p86 = scmp.eq.s32.totalorder %s22, 1
      %p87 = por %p85, %p86
      %p89 = scmp.ne.s32.totalorder %s74, %s88
      %p90 = scmp.eq.s32.totalorder %s22, 0
      %p91 = por %p89, %p90
      %s92 = ssub.s32 %s16, %s23
      %p93 = scmp.eq.s32.totalorder %s92, 0
      %s95 = sadd.s32 %s94, 1
      %s96 = scalar_select %p93, %s94, %s95
      %p99 = pneg %p93
      %p100 = scmp.eq.s32.totalorder %s16, 1
      %p101 = por %p99, %p100
      %p102 = scmp.ne.s32.totalorder %s94, %s97
      %p103 = scmp.eq.s32.totalorder %s16, 0
      %p104 = por %p102, %p103
      %p105 = scmp.ne.s32.totalorder %s94, %s97
      %p106 = scmp.eq.s32.totalorder %s21, 1
      %p107 = por %p105, %p106
      %p108 = scmp.ne.s32.totalorder %s97, %s98
      %p109 = scmp.eq.s32.totalorder %s21, 0
      %p110 = por %p108, %p109
      %p111 = scmp.ne.s32.totalorder %s97, %s98
      %p112 = scmp.eq.s32.totalorder %s22, 1
      %p113 = por %p111, %p112
      %p115 = scmp.ne.s32.totalorder %s98, %s114
      %p116 = scmp.eq.s32.totalorder %s22, 0
      %p117 = por %p115, %p116
      %p118 = scmp.le.s32.totalorder 1, %s16
      %p119 = scmp.lt.s32.totalorder %s16, 3
      %p120 = pnand %p118, %p119
      %p121 = pneg %p120
      // Predicated region
      $region9: #{bottleneck_block.5} parent=5 // pred_check
        _
      $region10: #{bottleneck_block.5} parent=5 // pred_check_branch
        %123 = sbr.rel (%p120) target = $region12
      $region11: #{bottleneck_block.5} parent=5 // pred_region
        %s124 = ssub.s32 %s16, 1
        // Predicated region
        $region13: #{bottleneck_block.5} parent=11 // pred_check
          %p125 = pneg %p63
        $region14: #{bottleneck_block.5} parent=11 // pred_check_branch
          %127 = sbr.rel (%p125) target = $region16
        $region15: #{bottleneck_block.5} parent=11 // pred_region
          %s129 = ssub.s32 16, 16
          %130 = vsyncadd [#allocation6], %s129
          %s132 = sshll.u32 [#allocation5], 4
          %s133 = int_to_ptr.vmem [resolvable:$true] %s132
          %135 = dma.hbm_to_vmem [thread:$0]  %s1, 16, %s133, [#allocation6]
        $region16: #{bottleneck_block.5} parent=11 // pred_fallthru
          _
        // Predicated region
        $region17: #{bottleneck_block.5} parent=11 // pred_check
          %p136 = pneg %p84
        $region18: #{bottleneck_block.5} parent=11 // pred_check_branch
          %138 = sbr.rel (%p136) target = $region20
        $region19: #{bottleneck_block.5} parent=11 // pred_region
          %s140 = ssub.s32 16, 16
          %141 = vsyncadd [#allocation6], %s140
          %s143 = sshll.u32 [#allocation7], 4
          %s144 = int_to_ptr.vmem [resolvable:$true] %s143
          %146 = dma.hbm_to_vmem [thread:$0]  %s2, 16, %s144, [#allocation6]
        $region20: #{bottleneck_block.5} parent=11 // pred_fallthru
          _
      $region12: #{bottleneck_block.5} parent=5 // pred_fallthru
        _
      %p147 = scmp.lt.s32.totalorder %s16, 2
      // Predicated region
      $region21: #{bottleneck_block.5} parent=5 // pred_check
        %p148 = pneg %p147
      $region22: #{bottleneck_block.5} parent=5 // pred_check_branch
        %150 = sbr.rel (%p148) target = $region24
      $region23: #{bottleneck_block.5} parent=5 // pred_region
        // Predicated region
        $region25: #{bottleneck_block.5} parent=23 // pred_check
          %p151 = pneg %p36
        $region26: #{bottleneck_block.5} parent=23 // pred_check_branch
          %153 = sbr.rel (%p151) target = $region28
        $region27: #{bottleneck_block.5} parent=23 // pred_region
          %s154 = sand.u32 %s26, 1
          %s155 = scalar_lea.sflag [#allocation3], %s154
          %s156 = sand.u32 %s26, 1
          %s157 = smul.addr %s156, 32
          %s158 = scalar_lea.vmem [#allocation2], %s157
          %s160 = ssub.s32 512, 512
          %161 = vsyncadd %s155, %s160
          %s162 = smul.addr %s16, 8
          %s163 = smul.addr %s162, 64
          %s164 = scalar_lea.hbm %s0, %s163
          %s165 = sshll.u32 %s158, 4
          %s166 = int_to_ptr.vmem [resolvable:$true] %s165
          %171 = dma.hbm_to_vmem [thread:$0]  %s164, 512, %s166, %s155, 64, 64, 4
        $region28: #{bottleneck_block.5} parent=23 // pred_fallthru
          _
      $region24: #{bottleneck_block.5} parent=5 // pred_fallthru
        _
      %p172 = scmp.le.s32.totalorder 1, %s16
      %p173 = scmp.lt.s32.totalorder %s16, 3
      %p174 = pnand %p172, %p173
      %p175 = pneg %p174
      // Predicated region
      $region29: #{bottleneck_block.5} parent=5 // pred_check
        _
      $region30: #{bottleneck_block.5} parent=5 // pred_check_branch
        %177 = sbr.rel (%p174) target = $region32
      $region31: #{bottleneck_block.5} parent=5 // pred_region
        %s178 = ssub.s32 %s16, 1
        %s179 = sand.u32 %s29, 1
        %s180 = scalar_lea.sflag [#allocation3], %s179
        %s181 = sand.u32 %s29, 1
        %s182 = smul.addr %s181, 32
        %s183 = scalar_lea.vmem [#allocation2], %s182
        // Predicated region
        $region33: #{bottleneck_block.5} parent=31 // pred_check
          %p184 = pneg %p42
        $region34: #{bottleneck_block.5} parent=31 // pred_check_branch
          %186 = sbr.rel (%p184) target = $region36
        $region35: #{bottleneck_block.5} parent=31 // pred_region
          %187 = dma.done %s180, 512
        $region36: #{bottleneck_block.5} parent=31 // pred_fallthru
          _
        // Predicated region
        $region37: #{bottleneck_block.5} parent=31 // pred_check
          %p188 = pneg %p63
        $region38: #{bottleneck_block.5} parent=31 // pred_check_branch
          %190 = sbr.rel (%p188) target = $region40
        $region39: #{bottleneck_block.5} parent=31 // pred_region
          %191 = dma.done [#allocation6], 16
        $region40: #{bottleneck_block.5} parent=31 // pred_fallthru
          _
        // Predicated region
        $region41: #{bottleneck_block.5} parent=31 // pred_check
          %p192 = pneg %p84
        $region42: #{bottleneck_block.5} parent=31 // pred_check_branch
          %194 = sbr.rel (%p192) target = $region44
        $region43: #{bottleneck_block.5} parent=31 // pred_region
          %195 = dma.done [#allocation6], 16
        $region44: #{bottleneck_block.5} parent=31 // pred_fallthru
          _
        %s196 = sand.u32 %s29, 1
        %s197 = scalar_lea.sflag [#allocation3], %s196
        %s198 = sand.u32 %s29, 1
        %s199 = smul.addr %s198, 32
        %s200 = scalar_lea.vmem [#allocation2], %s199
        %p201 = pneg %p42
        %p202 = pneg %p39
        %p203 = pneg %p63
        %p204 = pneg %p60
        %p205 = pneg %p84
        %p206 = pneg %p81
        %p207 = pneg %p110
        %p208 = pneg %p107
        %s209 = sand.u32 %s97, 1
        %s210 = scalar_lea.sflag [#allocation4], %s209
        %s211 = sand.u32 %s97, 1
        %s212 = smul.addr %s211, 80
        %s213 = scalar_lea.vmem [#allocation8], %s212
        %v215 = vld [vmem:[%s183] sm:$0xf]
        %v216 = vld [vmem:[%s183 + $0x4] sm:$0xf]
        %v217 = vld [vmem:[%s183 + $0x8] sm:$0xf]
        %v218 = vld [vmem:[%s183 + $0xc] sm:$0xf]
        %v219 = vld [vmem:[%s183 + $0x10] sm:$0xf]
        %v220 = vld [vmem:[%s183 + $0x14] sm:$0xf]
        %v221 = vld [vmem:[%s183 + $0x18] sm:$0xf]
        %v222 = vld [vmem:[%s183 + $0x1c] sm:$0xf]
        %v223 = vunpack.c.l.bf16 %v215
        %v224 = vunpack.c.l.bf16 %v216
        %v225 = vunpack.c.l.bf16 %v217
        %v226 = vunpack.c.l.bf16 %v218
        %v227 = vunpack.c.l.bf16 %v219
        %v228 = vunpack.c.l.bf16 %v220
        %v229 = vunpack.c.l.bf16 %v221
        %v230 = vunpack.c.l.bf16 %v222
        %v231 = vld [vmem:[#allocation5] sm:$0x1]
        %v233 = vlaneseq
        %v234 = vshrl.u32 %v233, 7
        %v235 = vsub.s32 0, %v234
        %v236 = vrot.slane %v231, %v235
        %v238 = vmul.f32 %v223, %v236
        %v239 = vmul.f32 %v224, %v236
        %v240 = vmul.f32 %v225, %v236
        %v241 = vmul.f32 %v226, %v236
        %v242 = vmul.f32 %v227, %v236
        %v243 = vmul.f32 %v228, %v236
        %v244 = vmul.f32 %v229, %v236
        %v245 = vmul.f32 %v230, %v236
        %v246 = vld [vmem:[#allocation7] sm:$0x1]
        %v248 = vlaneseq
        %v249 = vshrl.u32 %v248, 7
        %v250 = vsub.s32 0, %v249
        %v251 = vrot.slane %v246, %v250
        %v253 = vadd.f32 %v238, %v251
        %v254 = vadd.f32 %v239, %v251
        %v255 = vadd.f32 %v240, %v251
        %v256 = vadd.f32 %v241, %v251
        %v257 = vadd.f32 %v242, %v251
        %v258 = vadd.f32 %v243, %v251
        %v259 = vadd.f32 %v244, %v251
        %v260 = vadd.f32 %v245, %v251
        %v261 = vmax.f32 %v253, 0.0
        %v262 = vmax.f32 %v254, 0.0
        %v263 = vmax.f32 %v255, 0.0
        %v264 = vmax.f32 %v256, 0.0
        %v265 = vmax.f32 %v257, 0.0
        %v266 = vmax.f32 %v258, 0.0
        %v267 = vmax.f32 %v259, 0.0
        %v268 = vmax.f32 %v260, 0.0
        %v269 = vpack.c.bf16 %v261, %v261
        %v270 = vpack.c.bf16 %v262, %v262
        %v271 = vpack.c.bf16 %v263, %v263
        %v272 = vpack.c.bf16 %v264, %v264
        %v273 = vpack.c.bf16 %v265, %v265
        %v274 = vpack.c.bf16 %v266, %v266
        %v275 = vpack.c.bf16 %v267, %v267
        %v276 = vpack.c.bf16 %v268, %v268
        %277 = vst [vmem:[%s213] sm:$0xf] 0
        %278 = vst [vmem:[%s213 + $0x4] sm:$0x1] 0
        %279 = vst [vmem:[%s213 + $0x8] sm:$0xf] 0
        %280 = vst [vmem:[%s213 + $0xc] sm:$0x1] 0
        %281 = vst [vmem:[%s213 + $0x10] sm:$0xf] 0
        %282 = vst [vmem:[%s213 + $0x14] sm:$0x1] 0
        %283 = vst [vmem:[%s213 + $0x18] sm:$0xf] 0
        %284 = vst [vmem:[%s213 + $0x1c] sm:$0x1] 0
        %285 = vst [vmem:[%s213 + $0x20] sm:$0xf] 0
        %286 = vst [vmem:[%s213 + $0x24] sm:$0x1] 0
        %287 = vst [vmem:[%s213 + $0x28] sm:$0xf] 0
        %288 = vst [vmem:[%s213 + $0x2c] sm:$0x1] 0
        %289 = vst [vmem:[%s213 + $0x30] sm:$0xf] 0
        %290 = vst [vmem:[%s213 + $0x34] sm:$0x1] 0
        %291 = vst [vmem:[%s213 + $0x38] sm:$0xf] 0
        %292 = vst [vmem:[%s213 + $0x3c] sm:$0x1] 0
        %293 = vst [vmem:[%s213 + $0x40] sm:$0xf] 0
        %294 = vst [vmem:[%s213 + $0x44] sm:$0x1] 0
        %295 = vst [vmem:[%s213 + $0x48] sm:$0xf] 0
        %296 = vst [vmem:[%s213 + $0x4c] sm:$0x1] 0
        %v305 = vunpack.c.l.b16 %v269
        %v306 = vunpack.c.l.b16 %v270
        %v307 = vunpack.c.l.b16 %v271
        %v308 = vunpack.c.l.b16 %v272
        %v309 = vunpack.c.l.b16 %v273
        %v310 = vunpack.c.l.b16 %v274
        %v311 = vunpack.c.l.b16 %v275
        %v312 = vunpack.c.l.b16 %v276
        %v313 = vpack.c.b16 %v305, %v305
        %v314 = vpack.c.b16 %v306, %v306
        %v315 = vpack.c.b16 %v307, %v307
        %v316 = vpack.c.b16 %v308, %v308
        %v317 = vpack.c.b16 %v309, %v309
        %v318 = vpack.c.b16 %v310, %v310
        %v319 = vpack.c.b16 %v311, %v311
        %v320 = vpack.c.b16 %v312, %v312
        %v322 = vshrl.u32 %v313, 16
        %v324 = vrot.slane %v322, 7
        %v325 = vshll.u32 %v313, 16
        %v327 = vor.u32 %v324, %v325
        %v328 = vrot.slane %v324, 4
        %v330 = vshrl.u32 %v314, 16
        %v332 = vrot.slane %v330, 7
        %v333 = vshll.u32 %v314, 16
        %v335 = vor.u32 %v332, %v333
        %v336 = vrot.slane %v332, 4
        %v338 = vshrl.u32 %v315, 16
        %v340 = vrot.slane %v338, 7
        %v341 = vshll.u32 %v315, 16
        %v343 = vor.u32 %v340, %v341
        %v344 = vrot.slane %v340, 4
        %v346 = vshrl.u32 %v316, 16
        %v348 = vrot.slane %v346, 7
        %v349 = vshll.u32 %v316, 16
        %v351 = vor.u32 %v348, %v349
        %v352 = vrot.slane %v348, 4
        %v354 = vshrl.u32 %v317, 16
        %v356 = vrot.slane %v354, 7
        %v357 = vshll.u32 %v317, 16
        %v359 = vor.u32 %v356, %v357
        %v360 = vrot.slane %v356, 4
        %v362 = vshrl.u32 %v318, 16
        %v364 = vrot.slane %v362, 7
        %v365 = vshll.u32 %v318, 16
        %v367 = vor.u32 %v364, %v365
        %v368 = vrot.slane %v364, 4
        %v370 = vshrl.u32 %v319, 16
        %v372 = vrot.slane %v370, 7
        %v373 = vshll.u32 %v319, 16
        %v375 = vor.u32 %v372, %v373
        %v376 = vrot.slane %v372, 4
        %v378 = vshrl.u32 %v320, 16
        %v380 = vrot.slane %v378, 7
        %v381 = vshll.u32 %v320, 16
        %v383 = vor.u32 %v380, %v381
        %v384 = vrot.slane %v380, 4
        %s401 = scalar_lea.vmem %s213, 8 [#allocation8]
        %vm402 = vcmask 1043456
        %vm403 = vsmask.f32 7938
        %vm404 = vmand %vm402, %vm403
        %v405 = vld [vmem:[%s401] sm:$0xf]
        %v406 = vsel %vm404, %v327, %v405
        %407 = vst [vmem:[%s401] sm:$0xf] %v406
        %vm408 = vcmask 1040384
        %vm409 = vsmask.f32 256
        %vm410 = vmand %vm408, %vm409
        %v411 = vld [vmem:[%s401 + $0x4] sm:$0x1]
        %v412 = vsel %vm410, %v328, %v411
        %413 = vst [vmem:[%s401 + $0x4] sm:$0x1] %v412
        %v414 = vld [vmem:[%s401 + $0x8] sm:$0xf]
        %v415 = vsel %vm404, %v335, %v414
        %416 = vst [vmem:[%s401 + $0x8] sm:$0xf] %v415
        %v417 = vld [vmem:[%s401 + $0xc] sm:$0x1]
        %v418 = vsel %vm410, %v336, %v417
        %419 = vst [vmem:[%s401 + $0xc] sm:$0x1] %v418
        %v420 = vld [vmem:[%s401 + $0x10] sm:$0xf]
        %v421 = vsel %vm404, %v343, %v420
        %422 = vst [vmem:[%s401 + $0x10] sm:$0xf] %v421
        %v423 = vld [vmem:[%s401 + $0x14] sm:$0x1]
        %v424 = vsel %vm410, %v344, %v423
        %425 = vst [vmem:[%s401 + $0x14] sm:$0x1] %v424
        %v426 = vld [vmem:[%s401 + $0x18] sm:$0xf]
        %v427 = vsel %vm404, %v351, %v426
        %428 = vst [vmem:[%s401 + $0x18] sm:$0xf] %v427
        %v429 = vld [vmem:[%s401 + $0x1c] sm:$0x1]
        %v430 = vsel %vm410, %v352, %v429
        %431 = vst [vmem:[%s401 + $0x1c] sm:$0x1] %v430
        %v432 = vld [vmem:[%s401 + $0x20] sm:$0xf]
        %v433 = vsel %vm404, %v359, %v432
        %434 = vst [vmem:[%s401 + $0x20] sm:$0xf] %v433
        %v435 = vld [vmem:[%s401 + $0x24] sm:$0x1]
        %v436 = vsel %vm410, %v360, %v435
        %437 = vst [vmem:[%s401 + $0x24] sm:$0x1] %v436
        %v438 = vld [vmem:[%s401 + $0x28] sm:$0xf]
        %v439 = vsel %vm404, %v367, %v438
        %440 = vst [vmem:[%s401 + $0x28] sm:$0xf] %v439
        %v441 = vld [vmem:[%s401 + $0x2c] sm:$0x1]
        %v442 = vsel %vm410, %v368, %v441
        %443 = vst [vmem:[%s401 + $0x2c] sm:$0x1] %v442
        %v444 = vld [vmem:[%s401 + $0x30] sm:$0xf]
        %v445 = vsel %vm404, %v375, %v444
        %446 = vst [vmem:[%s401 + $0x30] sm:$0xf] %v445
        %v447 = vld [vmem:[%s401 + $0x34] sm:$0x1]
        %v448 = vsel %vm410, %v376, %v447
        %449 = vst [vmem:[%s401 + $0x34] sm:$0x1] %v448
        %v450 = vld [vmem:[%s401 + $0x38] sm:$0xf]
        %v451 = vsel %vm404, %v383, %v450
        %452 = vst [vmem:[%s401 + $0x38] sm:$0xf] %v451
        %v453 = vld [vmem:[%s401 + $0x3c] sm:$0x1]
        %v454 = vsel %vm410, %v384, %v453
        %455 = vst [vmem:[%s401 + $0x3c] sm:$0x1] %v454
        %s456 = sand.u32 %s97, 1
        %s457 = scalar_lea.sflag [#allocation4], %s456
        %s458 = sand.u32 %s97, 1
        %s459 = smul.addr %s458, 80
        %s460 = scalar_lea.vmem [#allocation8], %s459
        // Predicated region
        $region45: #{bottleneck_block.5} parent=31 // pred_check
          %p461 = pneg %p107
        $region46: #{bottleneck_block.5} parent=31 // pred_check_branch
          %463 = sbr.rel (%p461) target = $region48
        $region47: #{bottleneck_block.5} parent=31 // pred_region
          %s465 = ssub.s32 1280, 1280
          %466 = vsyncadd %s457, %s465
          %s467 = smul.addr %s21, 20
          %s468 = smul.addr %s467, 64
          %s469 = scalar_lea.hbm %s3, %s468
          %s470 = sshll.u32 %s460, 4
          %s471 = int_to_ptr.vmem [resolvable:$true] %s470
          %476 = dma.vmem_to_hbm [thread:$0]  %s471, 1280, %s469, %s457, 64, 64, 4
        $region48: #{bottleneck_block.5} parent=31 // pred_fallthru
          _
      $region32: #{bottleneck_block.5} parent=5 // pred_fallthru
        _
      %p477 = scmp.le.s32.totalorder 2, %s16
      // Predicated region
      $region49: #{bottleneck_block.5} parent=5 // pred_check
        %p478 = pneg %p477
      $region50: #{bottleneck_block.5} parent=5 // pred_check_branch
        %480 = sbr.rel (%p478) target = $region52
      $region51: #{bottleneck_block.5} parent=5 // pred_region
        %s481 = ssub.s32 %s16, 2
        // Predicated region
        $region53: #{bottleneck_block.5} parent=51 // pred_check
          %p482 = pneg %p113
        $region54: #{bottleneck_block.5} parent=51 // pred_check_branch
          %484 = sbr.rel (%p482) target = $region56
        $region55: #{bottleneck_block.5} parent=51 // pred_region
          %s485 = sand.u32 %s98, 1
          %s486 = scalar_lea.sflag [#allocation4], %s485
          %s487 = sand.u32 %s98, 1
          %s488 = smul.addr %s487, 80
          %s489 = scalar_lea.vmem [#allocation8], %s488
          %490 = dma.done %s486, 1280
        $region56: #{bottleneck_block.5} parent=51 // pred_fallthru
          _
      $region52: #{bottleneck_block.5} parent=5 // pred_fallthru
        _
    $region6: #{bottleneck_block.5} parent=1 // loop_footer
      %s20 = sadd.s32 1, %s16
    $region7: #{bottleneck_block.5} parent=1 // loop_footer_branch
      %15 = sbr.rel target = $region3
    $region8: #{bottleneck_block.5} parent=1 // loop_exit
      _
    %491 = vsyncpa [#allocation3], 1
    %s492 = scalar_lea.sflag [#allocation3], 1
    %493 = vsyncpa %s492, 1
    %494 = vsyncpa [#allocation6], 1
    %495 = vsyncpa [#allocation4], 1
    %s496 = scalar_lea.sflag [#allocation4], 1
    %497 = vsyncpa %s496, 1

// kernel: bottleneck_block.7
$region0: #{bottleneck_block.7}
  #allocation0 [shape = 'u32[]', space=smem, size = 0x4, offset = 0x4, fixed_abs, tag = 'smem constant byte address 0x4 - core index']
  #allocation1 [shape = 'u32[144,128]{1,0:T(1,128)}', space=vmem, size = 0x12000, scoped, tag = 'internal scratch']
  %s0 = inlined_call_operand.hbm [shape: bf16[2,8,8,128], index: 0, kind: input, shape index: {}]
  %s1 = inlined_call_operand.hbm [shape: f32[1,128], index: 1, kind: input, shape index: {}]
  %s2 = inlined_call_operand.hbm [shape: f32[1,128], index: 2, kind: input, shape index: {}]
  %s3 = inlined_call_operand.hbm [shape: bf16[2,8,8,128], index: 3, kind: input, shape index: {}]
  %s4 = inlined_call_operand.hbm [shape: f32[1,128], index: 4, kind: input, shape index: {}]
  %s5 = inlined_call_operand.hbm [shape: f32[1,128], index: 5, kind: input, shape index: {}]
  %s6 = inlined_call_operand.hbm [shape: f32[2,8,8,128], index: 6, kind: output, shape index: {}]
  %s7 = sld [smem:[#allocation0]]
  $region81: #{bottleneck_block.7} parent=0
    _
  %s9 = ssub.s32 1, %s7
  %s10 = scalar_select 0, %s9, %s7
  $region1: #{bottleneck_block.7} parent=0
    #allocation2 [shape = 'u8[32768]{0}', space=vmem, size = 0x8000, scoped, tag = 'input window, operand 0']
    #allocation3 [shape = 's32[2]{0}', space=sflag, size = 0x8, scoped, tag = 'scoped memory for bottleneck_block.7']
    #allocation4 [shape = 's32[2]{0}', space=sflag, size = 0x8, scoped, tag = 'scoped memory for bottleneck_block.7']
    #allocation5 [shape = 'u8[512]{0}', space=vmem, size = 0x400, scoped, tag = 'input window, operand 1, single buffered']
    #allocation6 [shape = 's32[1]{0}', space=sflag, size = 0x4, scoped, tag = 'scoped memory for bottleneck_block.7']
    #allocation7 [shape = 'u8[512]{0}', space=vmem, size = 0x400, scoped, tag = 'input window, operand 2, single buffered']
    #allocation8 [shape = 'u8[32768]{0}', space=vmem, size = 0x8000, scoped, tag = 'input window, operand 3']
    #allocation9 [shape = 's32[2]{0}', space=sflag, size = 0x8, scoped, tag = 'scoped memory for bottleneck_block.7']
    #allocation10 [shape = 'u8[512]{0}', space=vmem, size = 0x400, scoped, tag = 'input window, operand 4, single buffered']
    #allocation11 [shape = 'u8[512]{0}', space=vmem, size = 0x400, scoped, tag = 'input window, operand 5, single buffered']
    #allocation12 [shape = 's32[1]{0}', space=sflag, size = 0x4, scoped, tag = 'scoped memory for bottleneck_block.7']
    #allocation13 [shape = 'u8[65536]{0}', space=vmem, size = 0x10000, scoped, tag = 'output window, operand 0']
    %11 = vsyncpa [#allocation3], 0
    %s12 = scalar_lea.sflag [#allocation3], 1
    %13 = vsyncpa %s12, 0
    %14 = vsyncpa [#allocation6], 0
    %15 = vsyncpa [#allocation9], 0
    %s16 = scalar_lea.sflag [#allocation9], 1
    %17 = vsyncpa %s16, 0
    %18 = vsyncpa [#allocation12], 0
    %19 = vsyncpa [#allocation4], 0
    %s20 = scalar_lea.sflag [#allocation4], 1
    %21 = vsyncpa %s20, 0
    loop: start=0, step=1, limit=4
    $region2: #{bottleneck_block.7} parent=1 // loop_pre_header
      _
    $region3: #{bottleneck_block.7} parent=1 // loop_header
      %s23 = sphi 0, %s27
      %p24 = scmp.ge.s32.totalorder %s23, 4
      %s30 = sphi 0, %s42
      %s31 = sphi 0, %s38
      %s32 = sphi 0, %s30
      %s33 = sphi 0, %s31
      %s34 = sphi 0, %s32
      %s35 = sphi 0, %s33
      %s47 = sphi 0, %s49
      %s50 = sphi 0, %s47
      %s51 = sphi 0, %s50
      %s67 = sphi 0, %s51
      %s71 = sphi 0, %s71
      %s73 = sphi 0, %s71
      %s74 = sphi 0, %s73
      %s88 = sphi 0, %s74
      %s92 = sphi 0, %s92
      %s94 = sphi 0, %s92
      %s95 = sphi 0, %s94
      %s109 = sphi 0, %s95
      %s117 = sphi 0, %s119
      %s120 = sphi 0, %s117
      %s121 = sphi 0, %s120
      %s137 = sphi 0, %s121
      %s141 = sphi 0, %s141
      %s143 = sphi 0, %s141
      %s144 = sphi 0, %s143
      %s158 = sphi 0, %s144
      %s162 = sphi 0, %s162
      %s164 = sphi 0, %s162
      %s165 = sphi 0, %s164
      %s179 = sphi 0, %s165
      %s187 = sphi 0, %s189
      %s190 = sphi 0, %s187
      %s191 = sphi 0, %s190
      %s207 = sphi 0, %s191
    $region4: #{bottleneck_block.7} parent=1 // loop_header_branch
      %26 = sbr.rel (%p24) target = $region8
    $region5: #{bottleneck_block.7} parent=1 // loop_body
      %s28 = ssub.s32 %s23, 1
      %s29 = ssub.s32 %s23, 2
      %s36 = sadd.s32 1, %s31
      %p37 = scmp.ge.s32.totalorder %s36, 1
      %s38 = scalar_select %p37, 0, %s36
      %s39 = sadd.s32 1, %s30
      %s40 = scalar_select %p37, %s39, %s30
      %p41 = scmp.ge.s32.totalorder %s40, 2
      %s42 = scalar_select %p41, 0, %s40
      %s43 = ssub.s32 %s30, %s42
      %s44 = ssub.s32 %s31, %s38
      %s45 = sor.u32 %s43, %s44
      %p46 = scmp.eq.s32.totalorder %s45, 0
      %s48 = sadd.s32 %s47, 1
      %s49 = scalar_select %p46, %s47, %s48
      %p52 = pneg %p46
      %p53 = scmp.eq.s32.totalorder %s23, 1
      %p54 = por %p52, %p53
      %p55 = scmp.ne.s32.totalorder %s47, %s50
      %p56 = scmp.eq.s32.totalorder %s23, 0
      %p57 = por %p55, %p56
      %p58 = scmp.ne.s32.totalorder %s47, %s50
      %p59 = scmp.eq.s32.totalorder %s28, 1
      %p60 = por %p58, %p59
      %p61 = scmp.ne.s32.totalorder %s50, %s51
      %p62 = scmp.eq.s32.totalorder %s28, 0
      %p63 = por %p61, %p62
      %p64 = scmp.ne.s32.totalorder %s50, %s51
      %p65 = scmp.eq.s32.totalorder %s29, 1
      %p66 = por %p64, %p65
      %p68 = scmp.ne.s32.totalorder %s51, %s67
      %p69 = scmp.eq.s32.totalorder %s29, 0
      %p70 = por %p68, %p69
      %s72 = sadd.s32 %s71, 1
      %p75 = scmp.eq.s32.totalorder %s23, 1
      %p76 = scmp.ne.s32.totalorder %s71, %s73
      %p77 = scmp.eq.s32.totalorder %s23, 0
      %p78 = por %p76, %p77
      %p79 = scmp.ne.s32.totalorder %s71, %s73
      %p80 = scmp.eq.s32.totalorder %s28, 1
      %p81 = por %p79, %p80
      %p82 = scmp.ne.s32.totalorder %s73, %s74
      %p83 = scmp.eq.s32.totalorder %s28, 0
      %p84 = por %p82, %p83
      %p85 = scmp.ne.s32.totalorder %s73, %s74
      %p86 = scmp.eq.s32.totalorder %s29, 1
      %p87 = por %p85, %p86
      %p89 = scmp.ne.s32.totalorder %s74, %s88
      %p90 = scmp.eq.s32.totalorder %s29, 0
      %p91 = por %p89, %p90
      %s93 = sadd.s32 %s92, 1
      %p96 = scmp.eq.s32.totalorder %s23, 1
      %p97 = scmp.ne.s32.totalorder %s92, %s94
      %p98 = scmp.eq.s32.totalorder %s23, 0
      %p99 = por %p97, %p98
      %p100 = scmp.ne.s32.totalorder %s92, %s94
      %p101 = scmp.eq.s32.totalorder %s28, 1
      %p102 = por %p100, %p101
      %p103 = scmp.ne.s32.totalorder %s94, %s95
      %p104 = scmp.eq.s32.totalorder %s28, 0
      %p105 = por %p103, %p104
      %p106 = scmp.ne.s32.totalorder %s94, %s95
      %p107 = scmp.eq.s32.totalorder %s29, 1
      %p108 = por %p106, %p107
      %p110 = scmp.ne.s32.totalorder %s95, %s109
      %p111 = scmp.eq.s32.totalorder %s29, 0
      %p112 = por %p110, %p111
      %s113 = ssub.s32 %s30, %s42
      %s114 = ssub.s32 %s31, %s38
      %s115 = sor.u32 %s113, %s114
      %p116 = scmp.eq.s32.totalorder %s115, 0
      %s118 = sadd.s32 %s117, 1
      %s119 = scalar_select %p116, %s117, %s118
      %p122 = pneg %p116
      %p123 = scmp.eq.s32.totalorder %s23, 1
      %p124 = por %p122, %p123
      %p125 = scmp.ne.s32.totalorder %s117, %s120
      %p126 = scmp.eq.s32.totalorder %s23, 0
      %p127 = por %p125, %p126
      %p128 = scmp.ne.s32.totalorder %s117, %s120
      %p129 = scmp.eq.s32.totalorder %s28, 1
      %p130 = por %p128, %p129
      %p131 = scmp.ne.s32.totalorder %s120, %s121
      %p132 = scmp.eq.s32.totalorder %s28, 0
      %p133 = por %p131, %p132
      %p134 = scmp.ne.s32.totalorder %s120, %s121
      %p135 = scmp.eq.s32.totalorder %s29, 1
      %p136 = por %p134, %p135
      %p138 = scmp.ne.s32.totalorder %s121, %s137
      %p139 = scmp.eq.s32.totalorder %s29, 0
      %p140 = por %p138, %p139
      %s142 = sadd.s32 %s141, 1
      %p145 = scmp.eq.s32.totalorder %s23, 1
      %p146 = scmp.ne.s32.totalorder %s141, %s143
      %p147 = scmp.eq.s32.totalorder %s23, 0
      %p148 = por %p146, %p147
      %p149 = scmp.ne.s32.totalorder %s141, %s143
      %p150 = scmp.eq.s32.totalorder %s28, 1
      %p151 = por %p149, %p150
      %p152 = scmp.ne.s32.totalorder %s143, %s144
      %p153 = scmp.eq.s32.totalorder %s28, 0
      %p154 = por %p152, %p153
      %p155 = scmp.ne.s32.totalorder %s143, %s144
      %p156 = scmp.eq.s32.totalorder %s29, 1
      %p157 = por %p155, %p156
      %p159 = scmp.ne.s32.totalorder %s144, %s158
      %p160 = scmp.eq.s32.totalorder %s29, 0
      %p161 = por %p159, %p160
      %s163 = sadd.s32 %s162, 1
      %p166 = scmp.eq.s32.totalorder %s23, 1
      %p167 = scmp.ne.s32.totalorder %s162, %s164
      %p168 = scmp.eq.s32.totalorder %s23, 0
      %p169 = por %p167, %p168
      %p170 = scmp.ne.s32.totalorder %s162, %s164
      %p171 = scmp.eq.s32.totalorder %s28, 1
      %p172 = por %p170, %p171
      %p173 = scmp.ne.s32.totalorder %s164, %s165
      %p174 = scmp.eq.s32.totalorder %s28, 0
      %p175 = por %p173, %p174
      %p176 = scmp.ne.s32.totalorder %s164, %s165
      %p177 = scmp.eq.s32.totalorder %s29, 1
      %p178 = por %p176, %p177
      %p180 = scmp.ne.s32.totalorder %s165, %s179
      %p181 = scmp.eq.s32.totalorder %s29, 0
      %p182 = por %p180, %p181
      %s183 = ssub.s32 %s30, %s42
      %s184 = ssub.s32 %s31, %s38
      %s185 = sor.u32 %s183, %s184
      %p186 = scmp.eq.s32.totalorder %s185, 0
      %s188 = sadd.s32 %s187, 1
      %s189 = scalar_select %p186, %s187, %s188
      %p192 = pneg %p186
      %p193 = scmp.eq.s32.totalorder %s23, 1
      %p194 = por %p192, %p193
      %p195 = scmp.ne.s32.totalorder %s187, %s190
      %p196 = scmp.eq.s32.totalorder %s23, 0
      %p197 = por %p195, %p196
      %p198 = scmp.ne.s32.totalorder %s187, %s190
      %p199 = scmp.eq.s32.totalorder %s28, 1
      %p200 = por %p198, %p199
      %p201 = scmp.ne.s32.totalorder %s190, %s191
      %p202 = scmp.eq.s32.totalorder %s28, 0
      %p203 = por %p201, %p202
      %p204 = scmp.ne.s32.totalorder %s190, %s191
      %p205 = scmp.eq.s32.totalorder %s29, 1
      %p206 = por %p204, %p205
      %p208 = scmp.ne.s32.totalorder %s191, %s207
      %p209 = scmp.eq.s32.totalorder %s29, 0
      %p210 = por %p208, %p209
      %p211 = scmp.le.s32.totalorder 1, %s23
      %p212 = scmp.lt.s32.totalorder %s23, 3
      %p213 = pnand %p211, %p212
      %p214 = pneg %p213
      // Predicated region
      $region9: #{bottleneck_block.7} parent=5 // pred_check
        _
      $region10: #{bottleneck_block.7} parent=5 // pred_check_branch
        %216 = sbr.rel (%p213) target = $region12
      $region11: #{bottleneck_block.7} parent=5 // pred_region
        %s217 = ssub.s32 %s23, 1
        // Predicated region
        $region13: #{bottleneck_block.7} parent=11 // pred_check
          %p218 = pneg %p84
        $region14: #{bottleneck_block.7} parent=11 // pred_check_branch
          %220 = sbr.rel (%p218) target = $region16
        $region15: #{bottleneck_block.7} parent=11 // pred_region
          %s222 = ssub.s32 16, 16
          %223 = vsyncadd [#allocation6], %s222
          %s225 = sshll.u32 [#allocation5], 4
          %s226 = int_to_ptr.vmem [resolvable:$true] %s225
          %228 = dma.hbm_to_vmem [thread:$0]  %s1, 16, %s226, [#allocation6]
        $region16: #{bottleneck_block.7} parent=11 // pred_fallthru
          _
        // Predicated region
        $region17: #{bottleneck_block.7} parent=11 // pred_check
          %p229 = pneg %p105
        $region18: #{bottleneck_block.7} parent=11 // pred_check_branch
          %231 = sbr.rel (%p229) target = $region20
        $region19: #{bottleneck_block.7} parent=11 // pred_region
          %s233 = ssub.s32 16, 16
          %234 = vsyncadd [#allocation6], %s233
          %s236 = sshll.u32 [#allocation7], 4
          %s237 = int_to_ptr.vmem [resolvable:$true] %s236
          %239 = dma.hbm_to_vmem [thread:$0]  %s2, 16, %s237, [#allocation6]
        $region20: #{bottleneck_block.7} parent=11 // pred_fallthru
          _
        // Predicated region
        $region21: #{bottleneck_block.7} parent=11 // pred_check
          %p240 = pneg %p154
        $region22: #{bottleneck_block.7} parent=11 // pred_check_branch
          %242 = sbr.rel (%p240) target = $region24
        $region23: #{bottleneck_block.7} parent=11 // pred_region
          %s244 = ssub.s32 16, 16
          %245 = vsyncadd [#allocation9], %s244
          %s247 = sshll.u32 [#allocation10], 4
          %s248 = int_to_ptr.vmem [resolvable:$true] %s247
          %250 = dma.hbm_to_vmem [thread:$0]  %s4, 16, %s248, [#allocation9]
        $region24: #{bottleneck_block.7} parent=11 // pred_fallthru
          _
        // Predicated region
        $region25: #{bottleneck_block.7} parent=11 // pred_check
          %p251 = pneg %p175
        $region26: #{bottleneck_block.7} parent=11 // pred_check_branch
          %253 = sbr.rel (%p251) target = $region28
        $region27: #{bottleneck_block.7} parent=11 // pred_region
          %s255 = ssub.s32 16, 16
          %256 = vsyncadd [#allocation12], %s255
          %s258 = sshll.u32 [#allocation11], 4
          %s259 = int_to_ptr.vmem [resolvable:$true] %s258
          %261 = dma.hbm_to_vmem [thread:$0]  %s5, 16, %s259, [#allocation12]
        $region28: #{bottleneck_block.7} parent=11 // pred_fallthru
          _
      $region12: #{bottleneck_block.7} parent=5 // pred_fallthru
        _
      %p262 = scmp.lt.s32.totalorder %s23, 2
      // Predicated region
      $region29: #{bottleneck_block.7} parent=5 // pred_check
        %p263 = pneg %p262
      $region30: #{bottleneck_block.7} parent=5 // pred_check_branch
        %265 = sbr.rel (%p263) target = $region32
      $region31: #{bottleneck_block.7} parent=5 // pred_region
        // Predicated region
        $region33: #{bottleneck_block.7} parent=31 // pred_check
          %p266 = pneg %p57
        $region34: #{bottleneck_block.7} parent=31 // pred_check_branch
          %268 = sbr.rel (%p266) target = $region36
        $region35: #{bottleneck_block.7} parent=31 // pred_region
          %s269 = sand.u32 %s47, 1
          %s270 = scalar_lea.sflag [#allocation3], %s269
          %s271 = sand.u32 %s47, 1
          %s272 = smul.addr %s271, 32
          %s273 = scalar_lea.vmem [#allocation2], %s272
          %s274 = smul.u32 8, %s31
          %s276 = ssub.s32 512, 512
          %277 = vsyncadd %s270, %s276
          %s278 = smul.addr %s30, 8
          %s279 = sadd.s32 %s274, %s278
          %s280 = smul.addr %s279, 64
          %s281 = scalar_lea.hbm %s0, %s280
          %s282 = sshll.u32 %s273, 4
          %s283 = int_to_ptr.vmem [resolvable:$true] %s282
          %288 = dma.hbm_to_vmem [thread:$0]  %s281, 512, %s283, %s270, 64, 64, 4
        $region36: #{bottleneck_block.7} parent=31 // pred_fallthru
          _
        // Predicated region
        $region37: #{bottleneck_block.7} parent=31 // pred_check
          %p289 = pneg %p127
        $region38: #{bottleneck_block.7} parent=31 // pred_check_branch
          %291 = sbr.rel (%p289) target = $region40
        $region39: #{bottleneck_block.7} parent=31 // pred_region
          %s292 = sand.u32 %s23, 1
          %s293 = scalar_lea.sflag [#allocation9], %s292
          %s294 = sand.u32 %s117, 1
          %s295 = smul.addr %s294, 32
          %s296 = scalar_lea.vmem [#allocation8], %s295
          %s297 = smul.u32 8, %s31
          %s299 = ssub.s32 512, 512
          %300 = vsyncadd %s293, %s299
          %s301 = smul.addr %s30, 8
          %s302 = sadd.s32 %s297, %s301
          %s303 = smul.addr %s302, 64
          %s304 = scalar_lea.hbm %s3, %s303
          %s305 = sshll.u32 %s296, 4
          %s306 = int_to_ptr.vmem [resolvable:$true] %s305
          %311 = dma.hbm_to_vmem [thread:$0]  %s304, 512, %s306, %s293, 64, 64, 4
        $region40: #{bottleneck_block.7} parent=31 // pred_fallthru
          _
      $region32: #{bottleneck_block.7} parent=5 // pred_fallthru
        _
      %p312 = scmp.le.s32.totalorder 1, %s23
      %p313 = scmp.lt.s32.totalorder %s23, 3
      %p314 = pnand %p312, %p313
      %p315 = pneg %p314
      // Predicated region
      $region41: #{bottleneck_block.7} parent=5 // pred_check
        _
      $region42: #{bottleneck_block.7} parent=5 // pred_check_branch
        %317 = sbr.rel (%p314) target = $region44
      $region43: #{bottleneck_block.7} parent=5 // pred_region
        %s318 = ssub.s32 %s23, 1
        %s319 = sand.u32 %s50, 1
        %s320 = scalar_lea.sflag [#allocation3], %s319
        %s321 = sand.u32 %s50, 1
        %s322 = smul.addr %s321, 32
        %s323 = scalar_lea.vmem [#allocation2], %s322
        // Predicated region
        $region45: #{bottleneck_block.7} parent=43 // pred_check
          %p324 = pneg %p63
        $region46: #{bottleneck_block.7} parent=43 // pred_check_branch
          %326 = sbr.rel (%p324) target = $region48
        $region47: #{bottleneck_block.7} parent=43 // pred_region
          %327 = dma.done %s320, 512
        $region48: #{bottleneck_block.7} parent=43 // pred_fallthru
          _
        // Predicated region
        $region49: #{bottleneck_block.7} parent=43 // pred_check
          %p328 = pneg %p84
        $region50: #{bottleneck_block.7} parent=43 // pred_check_branch
          %330 = sbr.rel (%p328) target = $region52
        $region51: #{bottleneck_block.7} parent=43 // pred_region
          %331 = dma.done [#allocation6], 16
        $region52: #{bottleneck_block.7} parent=43 // pred_fallthru
          _
        // Predicated region
        $region53: #{bottleneck_block.7} parent=43 // pred_check
          %p332 = pneg %p105
        $region54: #{bottleneck_block.7} parent=43 // pred_check_branch
          %334 = sbr.rel (%p332) target = $region56
        $region55: #{bottleneck_block.7} parent=43 // pred_region
          %335 = dma.done [#allocation6], 16
        $region56: #{bottleneck_block.7} parent=43 // pred_fallthru
          _
        %s336 = sand.u32 %s28, 1
        %s337 = scalar_lea.sflag [#allocation9], %s336
        %s338 = sand.u32 %s120, 1
        %s339 = smul.addr %s338, 32
        %s340 = scalar_lea.vmem [#allocation8], %s339
        // Predicated region
        $region57: #{bottleneck_block.7} parent=43 // pred_check
          %p341 = pneg %p133
        $region58: #{bottleneck_block.7} parent=43 // pred_check_branch
          %343 = sbr.rel (%p341) target = $region60
        $region59: #{bottleneck_block.7} parent=43 // pred_region
          %344 = dma.done %s337, 512
        $region60: #{bottleneck_block.7} parent=43 // pred_fallthru
          _
        // Predicated region
        $region61: #{bottleneck_block.7} parent=43 // pred_check
          %p345 = pneg %p154
        $region62: #{bottleneck_block.7} parent=43 // pred_check_branch
          %347 = sbr.rel (%p345) target = $region64
        $region63: #{bottleneck_block.7} parent=43 // pred_region
          %348 = dma.done [#allocation9], 16
        $region64: #{bottleneck_block.7} parent=43 // pred_fallthru
          _
        // Predicated region
        $region65: #{bottleneck_block.7} parent=43 // pred_check
          %p349 = pneg %p175
        $region66: #{bottleneck_block.7} parent=43 // pred_check_branch
          %351 = sbr.rel (%p349) target = $region68
        $region67: #{bottleneck_block.7} parent=43 // pred_region
          %352 = dma.done [#allocation12], 16
        $region68: #{bottleneck_block.7} parent=43 // pred_fallthru
          _
        %s353 = sand.u32 %s50, 1
        %s354 = scalar_lea.sflag [#allocation3], %s353
        %s355 = sand.u32 %s50, 1
        %s356 = smul.addr %s355, 32
        %s357 = scalar_lea.vmem [#allocation2], %s356
        %p358 = pneg %p63
        %p359 = pneg %p60
        %p360 = pneg %p84
        %p361 = pneg %p81
        %p362 = pneg %p105
        %p363 = pneg %p102
        %s364 = sand.u32 %s28, 1
        %s365 = scalar_lea.sflag [#allocation9], %s364
        %s366 = sand.u32 %s120, 1
        %s367 = smul.addr %s366, 32
        %s368 = scalar_lea.vmem [#allocation8], %s367
        %p369 = pneg %p133
        %p370 = pneg %p130
        %p371 = pneg %p154
        %p372 = pneg %p151
        %p373 = pneg %p175
        %p374 = pneg %p172
        %p375 = pneg %p203
        %p376 = pneg %p200
        %s377 = sand.u32 %s190, 1
        %s378 = scalar_lea.sflag [#allocation4], %s377
        %s379 = sand.u32 %s190, 1
        %s380 = smul.addr %s379, 64
        %s381 = scalar_lea.vmem [#allocation13], %s380
        %s382 = smul.u32 8, %s33
        %s383 = smul.u32 8, %s33
        %s384 = smul.u32 8, %s33
        %v385 = vld [vmem:[%s323] sm:$0xf]
        %v386 = vld [vmem:[%s323 + $0x4] sm:$0xf]
        %v387 = vld [vmem:[%s323 + $0x8] sm:$0xf]
        %v388 = vld [vmem:[%s323 + $0xc] sm:$0xf]
        %v389 = vld [vmem:[%s323 + $0x10] sm:$0xf]
        %v390 = vld [vmem:[%s323 + $0x14] sm:$0xf]
        %v391 = vld [vmem:[%s323 + $0x18] sm:$0xf]
        %v392 = vld [vmem:[%s323 + $0x1c] sm:$0xf]
        %v393 = vunpack.c.l.bf16 %v385
        %v394 = vunpack.c.l.bf16 %v386
        %v395 = vunpack.c.l.bf16 %v387
        %v396 = vunpack.c.l.bf16 %v388
        %v397 = vunpack.c.l.bf16 %v389
        %v398 = vunpack.c.l.bf16 %v390
        %v399 = vunpack.c.l.bf16 %v391
        %v400 = vunpack.c.l.bf16 %v392
        %v401 = vld [vmem:[#allocation5] sm:$0x1]
        %v403 = vlaneseq
        %v404 = vshrl.u32 %v403, 7
        %v405 = vsub.s32 0, %v404
        %v406 = vrot.slane %v401, %v405
        %v408 = vmul.f32 %v393, %v406
        %v409 = vmul.f32 %v394, %v406
        %v410 = vmul.f32 %v395, %v406
        %v411 = vmul.f32 %v396, %v406
        %v412 = vmul.f32 %v397, %v406
        %v413 = vmul.f32 %v398, %v406
        %v414 = vmul.f32 %v399, %v406
        %v415 = vmul.f32 %v400, %v406
        %v416 = vld [vmem:[#allocation7] sm:$0x1]
        %v418 = vlaneseq
        %v419 = vshrl.u32 %v418, 7
        %v420 = vsub.s32 0, %v419
        %v421 = vrot.slane %v416, %v420
        %v423 = vadd.f32 %v408, %v421
        %v424 = vadd.f32 %v409, %v421
        %v425 = vadd.f32 %v410, %v421
        %v426 = vadd.f32 %v411, %v421
        %v427 = vadd.f32 %v412, %v421
        %v428 = vadd.f32 %v413, %v421
        %v429 = vadd.f32 %v414, %v421
        %v430 = vadd.f32 %v415, %v421
        %v431 = vld [vmem:[%s340] sm:$0xf]
        %v432 = vld [vmem:[%s340 + $0x4] sm:$0xf]
        %v433 = vld [vmem:[%s340 + $0x8] sm:$0xf]
        %v434 = vld [vmem:[%s340 + $0xc] sm:$0xf]
        %v435 = vld [vmem:[%s340 + $0x10] sm:$0xf]
        %v436 = vld [vmem:[%s340 + $0x14] sm:$0xf]
        %v437 = vld [vmem:[%s340 + $0x18] sm:$0xf]
        %v438 = vld [vmem:[%s340 + $0x1c] sm:$0xf]
        %v439 = vunpack.c.l.bf16 %v431
        %v440 = vunpack.c.l.bf16 %v432
        %v441 = vunpack.c.l.bf16 %v433
        %v442 = vunpack.c.l.bf16 %v434
        %v443 = vunpack.c.l.bf16 %v435
        %v444 = vunpack.c.l.bf16 %v436
        %v445 = vunpack.c.l.bf16 %v437
        %v446 = vunpack.c.l.bf16 %v438
        %v447 = vld [vmem:[#allocation10] sm:$0x1]
        %v449 = vlaneseq
        %v450 = vshrl.u32 %v449, 7
        %v451 = vsub.s32 0, %v450
        %v452 = vrot.slane %v447, %v451
        %v454 = vmul.f32 %v439, %v452
        %v455 = vmul.f32 %v440, %v452
        %v456 = vmul.f32 %v441, %v452
        %v457 = vmul.f32 %v442, %v452
        %v458 = vmul.f32 %v443, %v452
        %v459 = vmul.f32 %v444, %v452
        %v460 = vmul.f32 %v445, %v452
        %v461 = vmul.f32 %v446, %v452
        %v462 = vld [vmem:[#allocation11] sm:$0x1]
        %v464 = vlaneseq
        %v465 = vshrl.u32 %v464, 7
        %v466 = vsub.s32 0, %v465
        %v467 = vrot.slane %v462, %v466
        %v469 = vadd.f32 %v454, %v467
        %v470 = vadd.f32 %v455, %v467
        %v471 = vadd.f32 %v456, %v467
        %v472 = vadd.f32 %v457, %v467
        %v473 = vadd.f32 %v458, %v467
        %v474 = vadd.f32 %v459, %v467
        %v475 = vadd.f32 %v460, %v467
        %v476 = vadd.f32 %v461, %v467
        %v477 = vadd.f32 %v423, %v469
        %v478 = vadd.f32 %v424, %v470
        %v479 = vadd.f32 %v425, %v471
        %v480 = vadd.f32 %v426, %v472
        %v481 = vadd.f32 %v427, %v473
        %v482 = vadd.f32 %v428, %v474
        %v483 = vadd.f32 %v429, %v475
        %v484 = vadd.f32 %v430, %v476
        %v485 = vmax.f32 %v477, 0.0
        %v486 = vmax.f32 %v478, 0.0
        %v487 = vmax.f32 %v479, 0.0
        %v488 = vmax.f32 %v480, 0.0
        %v489 = vmax.f32 %v481, 0.0
        %v490 = vmax.f32 %v482, 0.0
        %v491 = vmax.f32 %v483, 0.0
        %v492 = vmax.f32 %v484, 0.0
        %493 = vst [vmem:[%s381] sm:$0xff] %v485
        %494 = vst [vmem:[%s381 + $0x8] sm:$0xff] %v486
        %495 = vst [vmem:[%s381 + $0x10] sm:$0xff] %v487
        %496 = vst [vmem:[%s381 + $0x18] sm:$0xff] %v488
        %497 = vst [vmem:[%s381 + $0x20] sm:$0xff] %v489
        %498 = vst [vmem:[%s381 + $0x28] sm:$0xff] %v490
        %499 = vst [vmem:[%s381 + $0x30] sm:$0xff] %v491
        %500 = vst [vmem:[%s381 + $0x38] sm:$0xff] %v492
        %s501 = sand.u32 %s190, 1
        %s502 = scalar_lea.sflag [#allocation4], %s501
        %s503 = sand.u32 %s190, 1
        %s504 = smul.addr %s503, 64
        %s505 = scalar_lea.vmem [#allocation13], %s504
        // Predicated region
        $region69: #{bottleneck_block.7} parent=43 // pred_check
          %p506 = pneg %p200
        $region70: #{bottleneck_block.7} parent=43 // pred_check_branch
          %508 = sbr.rel (%p506) target = $region72
        $region71: #{bottleneck_block.7} parent=43 // pred_region
          %s509 = smul.u32 8, %s33
          %s511 = ssub.s32 1024, 1024
          %512 = vsyncadd %s502, %s511
          %s513 = smul.addr %s32, 8
          %s514 = sadd.s32 %s509, %s513
          %s515 = smul.addr %s514, 128
          %s516 = scalar_lea.hbm %s6, %s515
          %s517 = sshll.u32 %s505, 4
          %s518 = int_to_ptr.vmem [resolvable:$true] %s517
          %523 = dma.vmem_to_hbm [thread:$0]  %s518, 1024, %s516, %s502, 128, 128, 8
        $region72: #{bottleneck_block.7} parent=43 // pred_fallthru
          _
      $region44: #{bottleneck_block.7} parent=5 // pred_fallthru
        _
      %p524 = scmp.le.s32.totalorder 2, %s23
      // Predicated region
      $region73: #{bottleneck_block.7} parent=5 // pred_check
        %p525 = pneg %p524
      $region74: #{bottleneck_block.7} parent=5 // pred_check_branch
        %527 = sbr.rel (%p525) target = $region76
      $region75: #{bottleneck_block.7} parent=5 // pred_region
        %s528 = ssub.s32 %s23, 2
        // Predicated region
        $region77: #{bottleneck_block.7} parent=75 // pred_check
          %p529 = pneg %p206
        $region78: #{bottleneck_block.7} parent=75 // pred_check_branch
          %531 = sbr.rel (%p529) target = $region80
        $region79: #{bottleneck_block.7} parent=75 // pred_region
          %s532 = sand.u32 %s191, 1
          %s533 = scalar_lea.sflag [#allocation4], %s532
          %s534 = sand.u32 %s191, 1
          %s535 = smul.addr %s534, 64
          %s536 = scalar_lea.vmem [#allocation13], %s535
          %537 = dma.done %s533, 1024
        $region80: #{bottleneck_block.7} parent=75 // pred_fallthru
          _
      $region76: #{bottleneck_block.7} parent=5 // pred_fallthru
        _
    $region6: #{bottleneck_block.7} parent=1 // loop_footer
      %s27 = sadd.s32 1, %s23
    $region7: #{bottleneck_block.7} parent=1 // loop_footer_branch
      %22 = sbr.rel target = $region3
    $region8: #{bottleneck_block.7} parent=1 // loop_exit
      _
    %538 = vsyncpa [#allocation3], 1
    %s539 = scalar_lea.sflag [#allocation3], 1
    %540 = vsyncpa %s539, 1
    %541 = vsyncpa [#allocation6], 1
    %542 = vsyncpa [#allocation9], 1
    %s543 = scalar_lea.sflag [#allocation9], 1
    %544 = vsyncpa %s543, 1
    %545 = vsyncpa [#allocation12], 1
    %546 = vsyncpa [#allocation4], 1
    %s547 = scalar_lea.sflag [#allocation4], 1
    %548 = vsyncpa %s547, 1

// kernel: bottleneck_block.4
$region0: #{bottleneck_block.4}
  #allocation0 [shape = 'u32[]', space=smem, size = 0x4, offset = 0x4, fixed_abs, tag = 'smem constant byte address 0x4 - core index']
  #allocation1 [shape = 'u32[144,128]{1,0:T(1,128)}', space=vmem, size = 0x12000, scoped, tag = 'internal scratch']
  %s0 = inlined_call_operand.hbm [shape: bf16[2,4,9,9,128], index: 0, kind: input, shape index: {}]
  %s1 = inlined_call_operand.hbm [shape: bf16[1152,128], index: 1, kind: input, shape index: {}]
  %s2 = inlined_call_operand.hbm [shape: bf16[128,128], index: 2, kind: input, shape index: {}]
  %s3 = inlined_call_operand.hbm [shape: bf16[2,8,8,128], index: 3, kind: output, shape index: {0}]
  %s4 = inlined_call_operand.hbm [shape: f32[2,1,2,128], index: 4, kind: output, shape index: {1}]
  %s5 = inlined_call_operand.hbm [shape: bf16[2,8,8,128], index: 5, kind: output, shape index: {2}]
  %s6 = inlined_call_operand.hbm [shape: f32[2,1,2,128], index: 6, kind: output, shape index: {3}]
  %7 = xla_tuple %s3, %s4, %s5, %s6
  %s8 = sld [smem:[#allocation0]]
  $region81: #{bottleneck_block.4} parent=0
    _
  %s10 = ssub.s32 1, %s8
  %s11 = scalar_select 0, %s10, %s8
  $region1: #{bottleneck_block.4} parent=0
    #allocation2 [shape = 'u8[147456]{0}', space=vmem, size = 0x24000, scoped, tag = 'input window, operand 0, single buffered']
    #allocation3 [shape = 's32[2]{0}', space=sflag, size = 0x8, scoped, tag = 'scoped memory for bottleneck_block.4']
    #allocation4 [shape = 's32[2]{0}', space=sflag, size = 0x8, scoped, tag = 'scoped memory for bottleneck_block.4']
    #allocation5 [shape = 'u8[294912]{0}', space=vmem, size = 0x48000, scoped, tag = 'input window, operand 1, single buffered']
    #allocation6 [shape = 's32[1]{0}', space=sflag, size = 0x4, scoped, tag = 'scoped memory for bottleneck_block.4']
    #allocation7 [shape = 'u8[32768]{0}', space=vmem, size = 0x8000, scoped, tag = 'input window, operand 2, single buffered']
    #allocation8 [shape = 'u8[32768]{0}', space=vmem, size = 0x8000, scoped, tag = 'output window, operand 0']
    #allocation9 [shape = 'u8[2048]{0}', space=vmem, size = 0x800, scoped, tag = 'output window, operand 1']
    #allocation10 [shape = 's32[2]{0}', space=sflag, size = 0x8, scoped, tag = 'scoped memory for bottleneck_block.4']
    #allocation11 [shape = 'u8[32768]{0}', space=vmem, size = 0x8000, scoped, tag = 'output window, operand 2']
    #allocation12 [shape = 'u8[2048]{0}', space=vmem, size = 0x800, scoped, tag = 'output window, operand 3']
    #allocation13 [shape = 's32[2]{0}', space=sflag, size = 0x8, scoped, tag = 'scoped memory for bottleneck_block.4']
    %12 = vsyncpa [#allocation3], 0
    %13 = vsyncpa [#allocation6], 0
    %14 = vsyncpa [#allocation4], 0
    %s15 = scalar_lea.sflag [#allocation4], 1
    %16 = vsyncpa %s15, 0
    %17 = vsyncpa [#allocation10], 0
    %s18 = scalar_lea.sflag [#allocation10], 1
    %19 = vsyncpa %s18, 0
    %20 = vsyncpa [#allocation13], 0
    %s21 = scalar_lea.sflag [#allocation13], 1
    %22 = vsyncpa %s21, 0
    loop: start=0, step=1, limit=4
    $region2: #{bottleneck_block.4} parent=1 // loop_pre_header
      _
    $region3: #{bottleneck_block.4} parent=1 // loop_header
      %s24 = sphi 0, %s28
      %p25 = scmp.ge.s32.totalorder %s24, 4
      %s31 = sphi 0, %s43
      %s32 = sphi 0, %s39
      %s33 = sphi 0, %s31
      %s34 = sphi 0, %s32
      %s35 = sphi 0, %s33
      %s36 = sphi 0, %s34
      %s46 = sphi 0, %s48
      %s49 = sphi 0, %s46
      %s50 = sphi 0, %s49
      %s66 = sphi 0, %s50
      %s70 = sphi 0, %s70
      %s72 = sphi 0, %s70
      %s73 = sphi 0, %s72
      %s87 = sphi 0, %s73
      %s91 = sphi 0, %s91
      %s93 = sphi 0, %s91
      %s94 = sphi 0, %s93
      %s108 = sphi 0, %s94
      %s116 = sphi 0, %s118
      %s119 = sphi 0, %s116
      %s120 = sphi 0, %s119
      %s136 = sphi 0, %s120
      %s144 = sphi 0, %s146
      %s147 = sphi 0, %s144
      %s148 = sphi 0, %s147
      %s164 = sphi 0, %s148
      %s172 = sphi 0, %s174
      %s175 = sphi 0, %s172
      %s176 = sphi 0, %s175
      %s192 = sphi 0, %s176
      %s200 = sphi 0, %s202
      %s203 = sphi 0, %s200
      %s204 = sphi 0, %s203
      %s220 = sphi 0, %s204
    $region4: #{bottleneck_block.4} parent=1 // loop_header_branch
      %27 = sbr.rel (%p25) target = $region8
    $region5: #{bottleneck_block.4} parent=1 // loop_body
      %s29 = ssub.s32 %s24, 1
      %s30 = ssub.s32 %s24, 2
      %s37 = sadd.s32 1, %s32
      %p38 = scmp.ge.s32.totalorder %s37, 1
      %s39 = scalar_select %p38, 0, %s37
      %s40 = sadd.s32 1, %s31
      %s41 = scalar_select %p38, %s40, %s31
      %p42 = scmp.ge.s32.totalorder %s41, 2
      %s43 = scalar_select %p42, 0, %s41
      %s44 = ssub.s32 %s31, %s43
      %p45 = scmp.eq.s32.totalorder %s44, 0
      %s47 = sadd.s32 %s46, 1
      %s48 = scalar_select %p45, %s46, %s47
      %p51 = pneg %p45
      %p52 = scmp.eq.s32.totalorder %s24, 1
      %p53 = por %p51, %p52
      %p54 = scmp.ne.s32.totalorder %s46, %s49
      %p55 = scmp.eq.s32.totalorder %s24, 0
      %p56 = por %p54, %p55
      %p57 = scmp.ne.s32.totalorder %s46, %s49
      %p58 = scmp.eq.s32.totalorder %s29, 1
      %p59 = por %p57, %p58
      %p60 = scmp.ne.s32.totalorder %s49, %s50
      %p61 = scmp.eq.s32.totalorder %s29, 0
      %p62 = por %p60, %p61
      %p63 = scmp.ne.s32.totalorder %s49, %s50
      %p64 = scmp.eq.s32.totalorder %s30, 1
      %p65 = por %p63, %p64
      %p67 = scmp.ne.s32.totalorder %s50, %s66
      %p68 = scmp.eq.s32.totalorder %s30, 0
      %p69 = por %p67, %p68
      %s71 = sadd.s32 %s70, 1
      %p74 = scmp.eq.s32.totalorder %s24, 1
      %p75 = scmp.ne.s32.totalorder %s70, %s72
      %p76 = scmp.eq.s32.totalorder %s24, 0
      %p77 = por %p75, %p76
      %p78 = scmp.ne.s32.totalorder %s70, %s72
      %p79 = scmp.eq.s32.totalorder %s29, 1
      %p80 = por %p78, %p79
      %p81 = scmp.ne.s32.totalorder %s72, %s73
      %p82 = scmp.eq.s32.totalorder %s29, 0
      %p83 = por %p81, %p82
      %p84 = scmp.ne.s32.totalorder %s72, %s73
      %p85 = scmp.eq.s32.totalorder %s30, 1
      %p86 = por %p84, %p85
      %p88 = scmp.ne.s32.totalorder %s73, %s87
      %p89 = scmp.eq.s32.totalorder %s30, 0
      %p90 = por %p88, %p89
      %s92 = sadd.s32 %s91, 1
      %p95 = scmp.eq.s32.totalorder %s24, 1
      %p96 = scmp.ne.s32.totalorder %s91, %s93
      %p97 = scmp.eq.s32.totalorder %s24, 0
      %p98 = por %p96, %p97
      %p99 = scmp.ne.s32.totalorder %s91, %s93
      %p100 = scmp.eq.s32.totalorder %s29, 1
      %p101 = por %p99, %p100
      %p102 = scmp.ne.s32.totalorder %s93, %s94
      %p103 = scmp.eq.s32.totalorder %s29, 0
      %p104 = por %p102, %p103
      %p105 = scmp.ne.s32.totalorder %s93, %s94
      %p106 = scmp.eq.s32.totalorder %s30, 1
      %p107 = por %p105, %p106
      %p109 = scmp.ne.s32.totalorder %s94, %s108
      %p110 = scmp.eq.s32.totalorder %s30, 0
      %p111 = por %p109, %p110
      %s112 = ssub.s32 %s31, %s43
      %s113 = ssub.s32 %s32, %s39
      %s114 = sor.u32 %s112, %s113
      %p115 = scmp.eq.s32.totalorder %s114, 0
      %s117 = sadd.s32 %s116, 1
      %s118 = scalar_select %p115, %s116, %s117
      %p121 = pneg %p115
      %p122 = scmp.eq.s32.totalorder %s24, 1
      %p123 = por %p121, %p122
      %p124 = scmp.ne.s32.totalorder %s116, %s119
      %p125 = scmp.eq.s32.totalorder %s24, 0
      %p126 = por %p124, %p125
      %p127 = scmp.ne.s32.totalorder %s116, %s119
      %p128 = scmp.eq.s32.totalorder %s29, 1
      %p129 = por %p127, %p128
      %p130 = scmp.ne.s32.totalorder %s119, %s120
      %p131 = scmp.eq.s32.totalorder %s29, 0
      %p132 = por %p130, %p131
      %p133 = scmp.ne.s32.totalorder %s119, %s120
      %p134 = scmp.eq.s32.totalorder %s30, 1
      %p135 = por %p133, %p134
      %p137 = scmp.ne.s32.totalorder %s120, %s136
      %p138 = scmp.eq.s32.totalorder %s30, 0
      %p139 = por %p137, %p138
      %s140 = ssub.s32 %s31, %s43
      %s141 = ssub.s32 %s32, %s39
      %s142 = sor.u32 %s140, %s141
      %p143 = scmp.eq.s32.totalorder %s142, 0
      %s145 = sadd.s32 %s144, 1
      %s146 = scalar_select %p143, %s144, %s145
      %p149 = pneg %p143
      %p150 = scmp.eq.s32.totalorder %s24, 1
      %p151 = por %p149, %p150
      %p152 = scmp.ne.s32.totalorder %s144, %s147
      %p153 = scmp.eq.s32.totalorder %s24, 0
      %p154 = por %p152, %p153
      %p155 = scmp.ne.s32.totalorder %s144, %s147
      %p156 = scmp.eq.s32.totalorder %s29, 1
      %p157 = por %p155, %p156
      %p158 = scmp.ne.s32.totalorder %s147, %s148
      %p159 = scmp.eq.s32.totalorder %s29, 0
      %p160 = por %p158, %p159
      %p161 = scmp.ne.s32.totalorder %s147, %s148
      %p162 = scmp.eq.s32.totalorder %s30, 1
      %p163 = por %p161, %p162
      %p165 = scmp.ne.s32.totalorder %s148, %s164
      %p166 = scmp.eq.s32.totalorder %s30, 0
      %p167 = por %p165, %p166
      %s168 = ssub.s32 %s31, %s43
      %s169 = ssub.s32 %s32, %s39
      %s170 = sor.u32 %s168, %s169
      %p171 = scmp.eq.s32.totalorder %s170, 0
      %s173 = sadd.s32 %s172, 1
      %s174 = scalar_select %p171, %s172, %s173
      %p177 = pneg %p171
      %p178 = scmp.eq.s32.totalorder %s24, 1
      %p179 = por %p177, %p178
      %p180 = scmp.ne.s32.totalorder %s172, %s175
      %p181 = scmp.eq.s32.totalorder %s24, 0
      %p182 = por %p180, %p181
      %p183 = scmp.ne.s32.totalorder %s172, %s175
      %p184 = scmp.eq.s32.totalorder %s29, 1
      %p185 = por %p183, %p184
      %p186 = scmp.ne.s32.totalorder %s175, %s176
      %p187 = scmp.eq.s32.totalorder %s29, 0
      %p188 = por %p186, %p187
      %p189 = scmp.ne.s32.totalorder %s175, %s176
      %p190 = scmp.eq.s32.totalorder %s30, 1
      %p191 = por %p189, %p190
      %p193 = scmp.ne.s32.totalorder %s176, %s192
      %p194 = scmp.eq.s32.totalorder %s30, 0
      %p195 = por %p193, %p194
      %s196 = ssub.s32 %s31, %s43
      %s197 = ssub.s32 %s32, %s39
      %s198 = sor.u32 %s196, %s197
      %p199 = scmp.eq.s32.totalorder %s198, 0
      %s201 = sadd.s32 %s200, 1
      %s202 = scalar_select %p199, %s200, %s201
      %p205 = pneg %p199
      %p206 = scmp.eq.s32.totalorder %s24, 1
      %p207 = por %p205, %p206
      %p208 = scmp.ne.s32.totalorder %s200, %s203
      %p209 = scmp.eq.s32.totalorder %s24, 0
      %p210 = por %p208, %p209
      %p211 = scmp.ne.s32.totalorder %s200, %s203
      %p212 = scmp.eq.s32.totalorder %s29, 1
      %p213 = por %p211, %p212
      %p214 = scmp.ne.s32.totalorder %s203, %s204
      %p215 = scmp.eq.s32.totalorder %s29, 0
      %p216 = por %p214, %p215
      %p217 = scmp.ne.s32.totalorder %s203, %s204
      %p218 = scmp.eq.s32.totalorder %s30, 1
      %p219 = por %p217, %p218
      %p221 = scmp.ne.s32.totalorder %s204, %s220
      %p222 = scmp.eq.s32.totalorder %s30, 0
      %p223 = por %p221, %p222
      %p224 = scmp.le.s32.totalorder 1, %s24
      %p225 = scmp.lt.s32.totalorder %s24, 3
      %p226 = pnand %p224, %p225
      %p227 = pneg %p226
      // Predicated region
      $region9: #{bottleneck_block.4} parent=5 // pred_check
        _
      $region10: #{bottleneck_block.4} parent=5 // pred_check_branch
        %229 = sbr.rel (%p226) target = $region12
      $region11: #{bottleneck_block.4} parent=5 // pred_region
        %s230 = ssub.s32 %s24, 1
        // Predicated region
        $region13: #{bottleneck_block.4} parent=11 // pred_check
          %p231 = pneg %p62
        $region14: #{bottleneck_block.4} parent=11 // pred_check_branch
          %233 = sbr.rel (%p231) target = $region16
        $region15: #{bottleneck_block.4} parent=11 // pred_region
          %s235 = ssub.s32 4608, 4608
          %236 = vsyncadd [#allocation3], %s235
          %s237 = smul.addr %s33, 72
          %s238 = smul.addr %s237, 64
          %s239 = scalar_lea.hbm %s0, %s238
          %s240 = sshll.u32 [#allocation2], 4
          %s241 = int_to_ptr.vmem [resolvable:$true] %s240
          %246 = dma.hbm_to_vmem [thread:$0]  %s239, 4608, %s241, [#allocation3], 64, 64, 4
        $region16: #{bottleneck_block.4} parent=11 // pred_fallthru
          _
        // Predicated region
        $region17: #{bottleneck_block.4} parent=11 // pred_check
          %p247 = pneg %p83
        $region18: #{bottleneck_block.4} parent=11 // pred_check_branch
          %249 = sbr.rel (%p247) target = $region20
        $region19: #{bottleneck_block.4} parent=11 // pred_region
          %s251 = ssub.s32 9216, 9216
          %252 = vsyncadd [#allocation6], %s251
          %s253 = sshll.u32 [#allocation5], 4
          %s254 = int_to_ptr.vmem [resolvable:$true] %s253
          %259 = dma.hbm_to_vmem [thread:$0]  %s1, 9216, %s254, [#allocation6], 64, 64, 4
        $region20: #{bottleneck_block.4} parent=11 // pred_fallthru
          _
        // Predicated region
        $region21: #{bottleneck_block.4} parent=11 // pred_check
          %p260 = pneg %p104
        $region22: #{bottleneck_block.4} parent=11 // pred_check_branch
          %262 = sbr.rel (%p260) target = $region24
        $region23: #{bottleneck_block.4} parent=11 // pred_region
          %s264 = ssub.s32 1024, 1024
          %265 = vsyncadd [#allocation6], %s264
          %s266 = sshll.u32 [#allocation7], 4
          %s267 = int_to_ptr.vmem [resolvable:$true] %s266
          %272 = dma.hbm_to_vmem [thread:$0]  %s2, 1024, %s267, [#allocation6], 64, 64, 4
        $region24: #{bottleneck_block.4} parent=11 // pred_fallthru
          _
      $region12: #{bottleneck_block.4} parent=5 // pred_fallthru
        _
      %p273 = scmp.lt.s32.totalorder %s24, 2
      // Predicated region
      $region25: #{bottleneck_block.4} parent=5 // pred_check
        %p274 = pneg %p273
      $region26: #{bottleneck_block.4} parent=5 // pred_check_branch
        %276 = sbr.rel (%p274) target = $region28
      $region27: #{bottleneck_block.4} parent=5 // pred_region
        _
      $region28: #{bottleneck_block.4} parent=5 // pred_fallthru
        _
      %p277 = scmp.le.s32.totalorder 1, %s24
      %p278 = scmp.lt.s32.totalorder %s24, 3
      %p279 = pnand %p277, %p278
      %p280 = pneg %p279
      // Predicated region
      $region29: #{bottleneck_block.4} parent=5 // pred_check
        _
      $region30: #{bottleneck_block.4} parent=5 // pred_check_branch
        %282 = sbr.rel (%p279) target = $region32
      $region31: #{bottleneck_block.4} parent=5 // pred_region
        %s283 = ssub.s32 %s24, 1
        // Predicated region
        $region33: #{bottleneck_block.4} parent=31 // pred_check
          %p284 = pneg %p62
        $region34: #{bottleneck_block.4} parent=31 // pred_check_branch
          %286 = sbr.rel (%p284) target = $region36
        $region35: #{bottleneck_block.4} parent=31 // pred_region
          %287 = dma.done [#allocation3], 4608
        $region36: #{bottleneck_block.4} parent=31 // pred_fallthru
          _
        // Predicated region
        $region37: #{bottleneck_block.4} parent=31 // pred_check
          %p288 = pneg %p83
        $region38: #{bottleneck_block.4} parent=31 // pred_check_branch
          %290 = sbr.rel (%p288) target = $region40
        $region39: #{bottleneck_block.4} parent=31 // pred_region
          %291 = dma.done [#allocation6], 9216
        $region40: #{bottleneck_block.4} parent=31 // pred_fallthru
          _
        // Predicated region
        $region41: #{bottleneck_block.4} parent=31 // pred_check
          %p292 = pneg %p104
        $region42: #{bottleneck_block.4} parent=31 // pred_check_branch
          %294 = sbr.rel (%p292) target = $region44
        $region43: #{bottleneck_block.4} parent=31 // pred_region
          %295 = dma.done [#allocation6], 1024
        $region44: #{bottleneck_block.4} parent=31 // pred_fallthru
          _
        %p296 = pneg %p62
        %p297 = pneg %p59
        %p298 = pneg %p83
        %p299 = pneg %p80
        %p300 = pneg %p104
        %p301 = pneg %p101
        %p302 = pneg %p132
        %p303 = pneg %p129
        %s304 = sand.u32 %s119, 1
        %s305 = scalar_lea.sflag [#allocation4], %s304
        %s306 = sand.u32 %s119, 1
        %s307 = smul.addr %s306, 32
        %s308 = scalar_lea.vmem [#allocation8], %s307
        %p309 = pneg %p160
        %p310 = pneg %p157
        %s311 = sand.u32 %s29, 1
        %s312 = scalar_lea.sflag [#allocation10], %s311
        %s313 = sand.u32 %s147, 1
        %s314 = smul.addr %s313, 2
        %s315 = scalar_lea.vmem [#allocation9], %s314
        %p316 = pneg %p188
        %p317 = pneg %p185
        %s318 = sand.u32 %s29, 1
        %s319 = scalar_lea.sflag [#allocation10], %s318
        %s320 = sand.u32 %s175, 1
        %s321 = smul.addr %s320, 32
        %s322 = scalar_lea.vmem [#allocation11], %s321
        %p323 = pneg %p216
        %p324 = pneg %p213
        %s325 = sand.u32 %s203, 1
        %s326 = scalar_lea.sflag [#allocation13], %s325
        %s327 = sand.u32 %s203, 1
        %s328 = smul.addr %s327, 2
        %s329 = scalar_lea.vmem [#allocation12], %s328
        %s330 = smul.u32 8, %s34
        %s331 = smul.u32 8, %s34
        %s333 = smul.u32 %s34, 8
        %s334 = smul.u32 %s333, 2
        %s335 = smul.addr %s334, 4
        %s336 = scalar_lea.vmem [#allocation2], %s335
        %v337 = vld [vmem:[%s336] sm:$0xf]
        %v338 = vld [vmem:[%s336 + $0x8] sm:$0xf]
        %v339 = vld [vmem:[%s336 + $0x10] sm:$0xf]
        %v340 = vld [vmem:[%s336 + $0x18] sm:$0xf]
        %v341 = vld [vmem:[%s336 + $0x20] sm:$0xf]
        %v342 = vld [vmem:[%s336 + $0x28] sm:$0xf]
        %v343 = vld [vmem:[%s336 + $0x30] sm:$0xf]
        %v344 = vld [vmem:[%s336 + $0x38] sm:$0xf]
        %s345 = sadd.s32 %s334, 18
        %s346 = smul.addr %s345, 4
        %s347 = scalar_lea.vmem [#allocation2], %s346
        %v348 = vld [vmem:[%s347] sm:$0xf]
        %v349 = vld [vmem:[%s347 + $0x8] sm:$0xf]
        %v350 = vld [vmem:[%s347 + $0x10] sm:$0xf]
        %v351 = vld [vmem:[%s347 + $0x18] sm:$0xf]
        %v352 = vld [vmem:[%s347 + $0x20] sm:$0xf]
        %v353 = vld [vmem:[%s347 + $0x28] sm:$0xf]
        %v354 = vld [vmem:[%s347 + $0x30] sm:$0xf]
        %v355 = vld [vmem:[%s347 + $0x38] sm:$0xf]
        %v356 = vld [vmem:[%s336 + $0x4] sm:$0x1]
        %v357 = vld [vmem:[%s336 + $0xc] sm:$0x1]
        %v358 = vld [vmem:[%s336 + $0x14] sm:$0x1]
        %v359 = vld [vmem:[%s336 + $0x1c] sm:$0x1]
        %v360 = vld [vmem:[%s336 + $0x24] sm:$0x1]
        %v361 = vld [vmem:[%s336 + $0x2c] sm:$0x1]
        %v362 = vld [vmem:[%s336 + $0x34] sm:$0x1]
        %v363 = vld [vmem:[%s336 + $0x3c] sm:$0x1]
        %s364 = sadd.s32 %s334, 36
        %s365 = smul.addr %s364, 4
        %s366 = scalar_lea.vmem [#allocation2], %s365
        %v367 = vld [vmem:[%s366] sm:$0xf]
        %v368 = vld [vmem:[%s366 + $0x8] sm:$0xf]
        %v369 = vld [vmem:[%s366 + $0x10] sm:$0xf]
        %v370 = vld [vmem:[%s366 + $0x18] sm:$0xf]
        %v371 = vld [vmem:[%s366 + $0x20] sm:$0xf]
        %v372 = vld [vmem:[%s366 + $0x28] sm:$0xf]
        %v373 = vld [vmem:[%s366 + $0x30] sm:$0xf]
        %v374 = vld [vmem:[%s366 + $0x38] sm:$0xf]
        %s375 = sadd.s32 %s334, 54
        %s376 = smul.addr %s375, 4
        %s377 = scalar_lea.vmem [#allocation2], %s376
        %v378 = vld [vmem:[%s377] sm:$0xf]
        %v379 = vld [vmem:[%s377 + $0x8] sm:$0xf]
        %v380 = vld [vmem:[%s377 + $0x10] sm:$0xf]
        %v381 = vld [vmem:[%s377 + $0x18] sm:$0xf]
        %v382 = vld [vmem:[%s377 + $0x20] sm:$0xf]
        %v383 = vld [vmem:[%s377 + $0x28] sm:$0xf]
        %v384 = vld [vmem:[%s377 + $0x30] sm:$0xf]
        %v385 = vld [vmem:[%s377 + $0x38] sm:$0xf]
        %v386 = vld [vmem:[%s366 + $0x4] sm:$0x1]
        %v387 = vld [vmem:[%s366 + $0xc] sm:$0x1]
        %v388 = vld [vmem:[%s366 + $0x14] sm:$0x1]
        %v389 = vld [vmem:[%s366 + $0x1c] sm:$0x1]
        %v390 = vld [vmem:[%s366 + $0x24] sm:$0x1]
        %v391 = vld [vmem:[%s366 + $0x2c] sm:$0x1]
        %v392 = vld [vmem:[%s366 + $0x34] sm:$0x1]
        %v393 = vld [vmem:[%s366 + $0x3c] sm:$0x1]
        %s394 = sadd.s32 %s333, 1
        %s395 = smul.u32 %s394, 2
        %s396 = smul.addr %s395, 4
        %s397 = scalar_lea.vmem [#allocation2], %s396
        %v398 = vld [vmem:[%s397] sm:$0xf]
        %v399 = vld [vmem:[%s397 + $0x8] sm:$0xf]
        %v400 = vld [vmem:[%s397 + $0x10] sm:$0xf]
        %v401 = vld [vmem:[%s397 + $0x18] sm:$0xf]
        %v402 = vld [vmem:[%s397 + $0x20] sm:$0xf]
        %v403 = vld [vmem:[%s397 + $0x28] sm:$0xf]
        %v404 = vld [vmem:[%s397 + $0x30] sm:$0xf]
        %v405 = vld [vmem:[%s397 + $0x38] sm:$0xf]
        %s406 = sadd.s32 %s395, 18
        %s407 = smul.addr %s406, 4
        %s408 = scalar_lea.vmem [#allocation2], %s407
        %v409 = vld [vmem:[%s408] sm:$0xf]
        %v410 = vld [vmem:[%s408 + $0x8] sm:$0xf]
        %v411 = vld [vmem:[%s408 + $0x10] sm:$0xf]
        %v412 = vld [vmem:[%s408 + $0x18] sm:$0xf]
        %v413 = vld [vmem:[%s408 + $0x20] sm:$0xf]
        %v414 = vld [vmem:[%s408 + $0x28] sm:$0xf]
        %v415 = vld [vmem:[%s408 + $0x30] sm:$0xf]
        %v416 = vld [vmem:[%s408 + $0x38] sm:$0xf]
        %v417 = vld [vmem:[%s397 + $0x4] sm:$0x1]
        %v418 = vld [vmem:[%s397 + $0xc] sm:$0x1]
        %v419 = vld [vmem:[%s397 + $0x14] sm:$0x1]
        %v420 = vld [vmem:[%s397 + $0x1c] sm:$0x1]
        %v421 = vld [vmem:[%s397 + $0x24] sm:$0x1]
        %v422 = vld [vmem:[%s397 + $0x2c] sm:$0x1]
        %v423 = vld [vmem:[%s397 + $0x34] sm:$0x1]
        %v424 = vld [vmem:[%s397 + $0x3c] sm:$0x1]
        %v441 = vunpack.c.l.b16 %v337
        %v442 = vunpack.c.l.b16 %v356
        %v443 = vunpack.c.l.b16 %v338
        %v444 = vunpack.c.l.b16 %v357
        %v445 = vunpack.c.l.b16 %v339
        %v446 = vunpack.c.l.b16 %v358
        %v447 = vunpack.c.l.b16 %v340
        %v448 = vunpack.c.l.b16 %v359
        %v449 = vunpack.c.l.b16 %v341
        %v450 = vunpack.c.l.b16 %v360
        %v451 = vunpack.c.l.b16 %v342
        %v452 = vunpack.c.l.b16 %v361
        %v453 = vunpack.c.l.b16 %v343
        %v454 = vunpack.c.l.b16 %v362
        %v455 = vunpack.c.l.b16 %v344
        %v456 = vunpack.c.l.b16 %v363
        %v457 = vpack.c.b16 %v442, %v441
        %v458 = vpack.c.b16 %v444, %v443
        %v459 = vpack.c.b16 %v446, %v445
        %v460 = vpack.c.b16 %v448, %v447
        %v461 = vpack.c.b16 %v450, %v449
        %v462 = vpack.c.b16 %v452, %v451
        %v463 = vpack.c.b16 %v454, %v453
        %v464 = vpack.c.b16 %v456, %v455
        %v466 = vshrl.u32 %v457, 16
        %v468 = vshll.u32 %v457, 16
        %v470 = vrot.slane %v468, 1
        %v471 = vor.u32 %v466, %v470
        %v473 = vshrl.u32 %v458, 16
        %v475 = vshll.u32 %v458, 16
        %v477 = vrot.slane %v475, 1
        %v478 = vor.u32 %v473, %v477
        %v480 = vshrl.u32 %v459, 16
        %v482 = vshll.u32 %v459, 16
        %v484 = vrot.slane %v482, 1
        %v485 = vor.u32 %v480, %v484
        %v487 = vshrl.u32 %v460, 16
        %v489 = vshll.u32 %v460, 16
        %v491 = vrot.slane %v489, 1
        %v492 = vor.u32 %v487, %v491
        %v494 = vshrl.u32 %v461, 16
        %v496 = vshll.u32 %v461, 16
        %v498 = vrot.slane %v496, 1
        %v499 = vor.u32 %v494, %v498
        %v501 = vshrl.u32 %v462, 16
        %v503 = vshll.u32 %v462, 16
        %v505 = vrot.slane %v503, 1
        %v506 = vor.u32 %v501, %v505
        %v508 = vshrl.u32 %v463, 16
        %v510 = vshll.u32 %v463, 16
        %v512 = vrot.slane %v510, 1
        %v513 = vor.u32 %v508, %v512
        %v515 = vshrl.u32 %v464, 16
        %v517 = vshll.u32 %v464, 16
        %v519 = vrot.slane %v517, 1
        %v520 = vor.u32 %v515, %v519
        %v537 = vunpack.c.l.b16 %v367
        %v538 = vunpack.c.l.b16 %v386
        %v539 = vunpack.c.l.b16 %v368
        %v540 = vunpack.c.l.b16 %v387
        %v541 = vunpack.c.l.b16 %v369
        %v542 = vunpack.c.l.b16 %v388
        %v543 = vunpack.c.l.b16 %v370
        %v544 = vunpack.c.l.b16 %v389
        %v545 = vunpack.c.l.b16 %v371
        %v546 = vunpack.c.l.b16 %v390
        %v547 = vunpack.c.l.b16 %v372
        %v548 = vunpack.c.l.b16 %v391
        %v549 = vunpack.c.l.b16 %v373
        %v550 = vunpack.c.l.b16 %v392
        %v551 = vunpack.c.l.b16 %v374
        %v552 = vunpack.c.l.b16 %v393
        %v553 = vpack.c.b16 %v538, %v537
        %v554 = vpack.c.b16 %v540, %v539
        %v555 = vpack.c.b16 %v542, %v541
        %v556 = vpack.c.b16 %v544, %v543
        %v557 = vpack.c.b16 %v546, %v545
        %v558 = vpack.c.b16 %v548, %v547
        %v559 = vpack.c.b16 %v550, %v549
        %v560 = vpack.c.b16 %v552, %v551
        %v562 = vshrl.u32 %v553, 16
        %v564 = vshll.u32 %v553, 16
        %v566 = vrot.slane %v564, 1
        %v567 = vor.u32 %v562, %v566
        %v569 = vshrl.u32 %v554, 16
        %v571 = vshll.u32 %v554, 16
        %v573 = vrot.slane %v571, 1
        %v574 = vor.u32 %v569, %v573
        %v576 = vshrl.u32 %v555, 16
        %v578 = vshll.u32 %v555, 16
        %v580 = vrot.slane %v578, 1
        %v581 = vor.u32 %v576, %v580
        %v583 = vshrl.u32 %v556, 16
        %v585 = vshll.u32 %v556, 16
        %v587 = vrot.slane %v585, 1
        %v588 = vor.u32 %v583, %v587
        %v590 = vshrl.u32 %v557, 16
        %v592 = vshll.u32 %v557, 16
        %v594 = vrot.slane %v592, 1
        %v595 = vor.u32 %v590, %v594
        %v597 = vshrl.u32 %v558, 16
        %v599 = vshll.u32 %v558, 16
        %v601 = vrot.slane %v599, 1
        %v602 = vor.u32 %v597, %v601
        %v604 = vshrl.u32 %v559, 16
        %v606 = vshll.u32 %v559, 16
        %v608 = vrot.slane %v606, 1
        %v609 = vor.u32 %v604, %v608
        %v611 = vshrl.u32 %v560, 16
        %v613 = vshll.u32 %v560, 16
        %v615 = vrot.slane %v613, 1
        %v616 = vor.u32 %v611, %v615
        %v633 = vunpack.c.l.b16 %v398
        %v634 = vunpack.c.l.b16 %v417
        %v635 = vunpack.c.l.b16 %v399
        %v636 = vunpack.c.l.b16 %v418
        %v637 = vunpack.c.l.b16 %v400
        %v638 = vunpack.c.l.b16 %v419
        %v639 = vunpack.c.l.b16 %v401
        %v640 = vunpack.c.l.b16 %v420
        %v641 = vunpack.c.l.b16 %v402
        %v642 = vunpack.c.l.b16 %v421
        %v643 = vunpack.c.l.b16 %v403
        %v644 = vunpack.c.l.b16 %v422
        %v645 = vunpack.c.l.b16 %v404
        %v646 = vunpack.c.l.b16 %v423
        %v647 = vunpack.c.l.b16 %v405
        %v648 = vunpack.c.l.b16 %v424
        %v649 = vpack.c.b16 %v634, %v633
        %v650 = vpack.c.b16 %v636, %v635
        %v651 = vpack.c.b16 %v638, %v637
        %v652 = vpack.c.b16 %v640, %v639
        %v653 = vpack.c.b16 %v642, %v641
        %v654 = vpack.c.b16 %v644, %v643
        %v655 = vpack.c.b16 %v646, %v645
        %v656 = vpack.c.b16 %v648, %v647
        %v658 = vshrl.u32 %v649, 16
        %v660 = vshll.u32 %v649, 16
        %v662 = vrot.slane %v660, 1
        %v663 = vor.u32 %v658, %v662
        %v665 = vshrl.u32 %v650, 16
        %v667 = vshll.u32 %v650, 16
        %v669 = vrot.slane %v667, 1
        %v670 = vor.u32 %v665, %v669
        %v672 = vshrl.u32 %v651, 16
        %v674 = vshll.u32 %v651, 16
        %v676 = vrot.slane %v674, 1
        %v677 = vor.u32 %v672, %v676
        %v679 = vshrl.u32 %v652, 16
        %v681 = vshll.u32 %v652, 16
        %v683 = vrot.slane %v681, 1
        %v684 = vor.u32 %v679, %v683
        %v686 = vshrl.u32 %v653, 16
        %v688 = vshll.u32 %v653, 16
        %v690 = vrot.slane %v688, 1
        %v691 = vor.u32 %v686, %v690
        %v693 = vshrl.u32 %v654, 16
        %v695 = vshll.u32 %v654, 16
        %v697 = vrot.slane %v695, 1
        %v698 = vor.u32 %v693, %v697
        %v700 = vshrl.u32 %v655, 16
        %v702 = vshll.u32 %v655, 16
        %v704 = vrot.slane %v702, 1
        %v705 = vor.u32 %v700, %v704
        %v707 = vshrl.u32 %v656, 16
        %v709 = vshll.u32 %v656, 16
        %v711 = vrot.slane %v709, 1
        %v712 = vor.u32 %v707, %v711
        %v737 = vunpack.c.l.b16 %v348
        %v738 = vunpack.c.l.b16 %v471
        %v739 = vunpack.c.l.b16 %v378
        %v740 = vunpack.c.l.b16 %v567
        %v741 = vunpack.c.l.b16 %v409
        %v742 = vunpack.c.l.b16 %v663
        %v743 = vunpack.c.l.b16 %v349
        %v744 = vunpack.c.l.b16 %v478
        %v745 = vunpack.c.l.b16 %v379
        %v746 = vunpack.c.l.b16 %v574
        %v747 = vunpack.c.l.b16 %v410
        %v748 = vunpack.c.l.b16 %v670
        %v749 = vunpack.c.l.b16 %v350
        %v750 = vunpack.c.l.b16 %v485
        %v751 = vunpack.c.l.b16 %v380
        %v752 = vunpack.c.l.b16 %v581
        %v753 = vunpack.c.l.b16 %v411
        %v754 = vunpack.c.l.b16 %v677
        %v755 = vunpack.c.l.b16 %v351
        %v756 = vunpack.c.l.b16 %v492
        %v757 = vunpack.c.l.b16 %v381
        %v758 = vunpack.c.l.b16 %v588
        %v759 = vunpack.c.l.b16 %v412
        %v760 = vunpack.c.l.b16 %v684
        %v761 = vunpack.c.l.b16 %v352
        %v762 = vunpack.c.l.b16 %v499
        %v763 = vunpack.c.l.b16 %v382
        %v764 = vunpack.c.l.b16 %v595
        %v765 = vunpack.c.l.b16 %v413
        %v766 = vunpack.c.l.b16 %v691
        %v767 = vunpack.c.l.b16 %v353
        %v768 = vunpack.c.l.b16 %v506
        %v769 = vunpack.c.l.b16 %v383
        %v770 = vunpack.c.l.b16 %v602
        %v771 = vunpack.c.l.b16 %v414
        %v772 = vunpack.c.l.b16 %v698
        %v773 = vunpack.c.l.b16 %v354
        %v774 = vunpack.c.l.b16 %v513
        %v775 = vunpack.c.l.b16 %v384
        %v776 = vunpack.c.l.b16 %v609
        %v777 = vunpack.c.l.b16 %v415
        %v778 = vunpack.c.l.b16 %v705
        %v779 = vunpack.c.l.b16 %v355
        %v780 = vunpack.c.l.b16 %v520
        %v781 = vunpack.c.l.b16 %v385
        %v782 = vunpack.c.l.b16 %v616
        %v783 = vunpack.c.l.b16 %v416
        %v784 = vunpack.c.l.b16 %v712
        %v785 = vld [vmem:[#allocation5] sm:$0xf]
        %v786 = vld [vmem:[#allocation5 + $0x4] sm:$0xf]
        %v787 = vld [vmem:[#allocation5 + $0x8] sm:$0xf]
        %v788 = vld [vmem:[#allocation5 + $0xc] sm:$0xf]
        %v789 = vld [vmem:[#allocation5 + $0x10] sm:$0xf]
        %v790 = vld [vmem:[#allocation5 + $0x14] sm:$0xf]
        %v791 = vld [vmem:[#allocation5 + $0x18] sm:$0xf]
        %v792 = vld [vmem:[#allocation5 + $0x1c] sm:$0xf]
        %v793 = vld [vmem:[#allocation5 + $0x20] sm:$0xf]
        %v794 = vld [vmem:[#allocation5 + $0x24] sm:$0xf]
        %v795 = vld [vmem:[#allocation5 + $0x28] sm:$0xf]
        %v796 = vld [vmem:[#allocation5 + $0x2c] sm:$0xf]
        %v797 = vld [vmem:[#allocation5 + $0x30] sm:$0xf]
        %v798 = vld [vmem:[#allocation5 + $0x34] sm:$0xf]
        %v799 = vld [vmem:[#allocation5 + $0x38] sm:$0xf]
        %v800 = vld [vmem:[#allocation5 + $0x3c] sm:$0xf]
        %v801 = vld [vmem:[#allocation5 + $0x40] sm:$0xf]
        %v802 = vld [vmem:[#allocation5 + $0x44] sm:$0xf]
        %v803 = vld [vmem:[#allocation5 + $0x48] sm:$0xf]
        %v804 = vld [vmem:[#allocation5 + $0x4c] sm:$0xf]
        %v805 = vld [vmem:[#allocation5 + $0x50] sm:$0xf]
        %v806 = vld [vmem:[#allocation5 + $0x54] sm:$0xf]
        %v807 = vld [vmem:[#allocation5 + $0x58] sm:$0xf]
        %v808 = vld [vmem:[#allocation5 + $0x5c] sm:$0xf]
        %v809 = vld [vmem:[#allocation5 + $0x60] sm:$0xf]
        %v810 = vld [vmem:[#allocation5 + $0x64] sm:$0xf]
        %v811 = vld [vmem:[#allocation5 + $0x68] sm:$0xf]
        %v812 = vld [vmem:[#allocation5 + $0x6c] sm:$0xf]
        %v813 = vld [vmem:[#allocation5 + $0x70] sm:$0xf]
        %v814 = vld [vmem:[#allocation5 + $0x74] sm:$0xf]
        %v815 = vld [vmem:[#allocation5 + $0x78] sm:$0xf]
        %v816 = vld [vmem:[#allocation5 + $0x7c] sm:$0xf]
        %v817 = vld [vmem:[#allocation5 + $0x80] sm:$0xf]
        %v818 = vld [vmem:[#allocation5 + $0x84] sm:$0xf]
        %v819 = vld [vmem:[#allocation5 + $0x88] sm:$0xf]
        %v820 = vld [vmem:[#allocation5 + $0x8c] sm:$0xf]
        %v821 = vld [vmem:[#allocation5 + $0x90] sm:$0xf]
        %v822 = vld [vmem:[#allocation5 + $0x94] sm:$0xf]
        %v823 = vld [vmem:[#allocation5 + $0x98] sm:$0xf]
        %v824 = vld [vmem:[#allocation5 + $0x9c] sm:$0xf]
        %v825 = vld [vmem:[#allocation5 + $0xa0] sm:$0xf]
        %v826 = vld [vmem:[#allocation5 + $0xa4] sm:$0xf]
        %v827 = vld [vmem:[#allocation5 + $0xa8] sm:$0xf]
        %v828 = vld [vmem:[#allocation5 + $0xac] sm:$0xf]
        %v829 = vld [vmem:[#allocation5 + $0xb0] sm:$0xf]
        %v830 = vld [vmem:[#allocation5 + $0xb4] sm:$0xf]
        %v831 = vld [vmem:[#allocation5 + $0xb8] sm:$0xf]
        %v832 = vld [vmem:[#allocation5 + $0xbc] sm:$0xf]
        %v833 = vld [vmem:[#allocation5 + $0xc0] sm:$0xf]
        %v834 = vld [vmem:[#allocation5 + $0xc4] sm:$0xf]
        %v835 = vld [vmem:[#allocation5 + $0xc8] sm:$0xf]
        %v836 = vld [vmem:[#allocation5 + $0xcc] sm:$0xf]
        %v837 = vld [vmem:[#allocation5 + $0xd0] sm:$0xf]
        %v838 = vld [vmem:[#allocation5 + $0xd4] sm:$0xf]
        %v839 = vld [vmem:[#allocation5 + $0xd8] sm:$0xf]
        %v840 = vld [vmem:[#allocation5 + $0xdc] sm:$0xf]
        %v841 = vld [vmem:[#allocation5 + $0xe0] sm:$0xf]
        %v842 = vld [vmem:[#allocation5 + $0xe4] sm:$0xf]
        %v843 = vld [vmem:[#allocation5 + $0xe8] sm:$0xf]
        %v844 = vld [vmem:[#allocation5 + $0xec] sm:$0xf]
        %v845 = vld [vmem:[#allocation5 + $0xf0] sm:$0xf]
        %v846 = vld [vmem:[#allocation5 + $0xf4] sm:$0xf]
        %v847 = vld [vmem:[#allocation5 + $0xf8] sm:$0xf]
        %v848 = vld [vmem:[#allocation5 + $0xfc] sm:$0xf]
        %v849 = vld [vmem:[#allocation5 + $0x100] sm:$0xf]
        %v850 = vld [vmem:[#allocation5 + $0x104] sm:$0xf]
        %v851 = vld [vmem:[#allocation5 + $0x108] sm:$0xf]
        %v852 = vld [vmem:[#allocation5 + $0x10c] sm:$0xf]
        %v853 = vld [vmem:[#allocation5 + $0x110] sm:$0xf]
        %v854 = vld [vmem:[#allocation5 + $0x114] sm:$0xf]
        %v855 = vld [vmem:[#allocation5 + $0x118] sm:$0xf]
        %v856 = vld [vmem:[#allocation5 + $0x11c] sm:$0xf]
        %v857 = vld [vmem:[#allocation5 + $0x120] sm:$0xf]
        %v858 = vld [vmem:[#allocation5 + $0x124] sm:$0xf]
        %v859 = vld [vmem:[#allocation5 + $0x128] sm:$0xf]
        %v860 = vld [vmem:[#allocation5 + $0x12c] sm:$0xf]
        %v861 = vld [vmem:[#allocation5 + $0x130] sm:$0xf]
        %v862 = vld [vmem:[#allocation5 + $0x134] sm:$0xf]
        %v863 = vld [vmem:[#allocation5 + $0x138] sm:$0xf]
        %v864 = vld [vmem:[#allocation5 + $0x13c] sm:$0xf]
        %v865 = vld [vmem:[#allocation5 + $0x140] sm:$0xf]
        %v866 = vld [vmem:[#allocation5 + $0x144] sm:$0xf]
        %v867 = vld [vmem:[#allocation5 + $0x148] sm:$0xf]
        %v868 = vld [vmem:[#allocation5 + $0x14c] sm:$0xf]
        %v869 = vld [vmem:[#allocation5 + $0x150] sm:$0xf]
        %v870 = vld [vmem:[#allocation5 + $0x154] sm:$0xf]
        %v871 = vld [vmem:[#allocation5 + $0x158] sm:$0xf]
        %v872 = vld [vmem:[#allocation5 + $0x15c] sm:$0xf]
        %v873 = vld [vmem:[#allocation5 + $0x160] sm:$0xf]
        %v874 = vld [vmem:[#allocation5 + $0x164] sm:$0xf]
        %v875 = vld [vmem:[#allocation5 + $0x168] sm:$0xf]
        %v876 = vld [vmem:[#allocation5 + $0x16c] sm:$0xf]
        %v877 = vld [vmem:[#allocation5 + $0x170] sm:$0xf]
        %v878 = vld [vmem:[#allocation5 + $0x174] sm:$0xf]
        %v879 = vld [vmem:[#allocation5 + $0x178] sm:$0xf]
        %v880 = vld [vmem:[#allocation5 + $0x17c] sm:$0xf]
        %v881 = vld [vmem:[#allocation5 + $0x180] sm:$0xf]
        %v882 = vld [vmem:[#allocation5 + $0x184] sm:$0xf]
        %v883 = vld [vmem:[#allocation5 + $0x188] sm:$0xf]
        %v884 = vld [vmem:[#allocation5 + $0x18c] sm:$0xf]
        %v885 = vld [vmem:[#allocation5 + $0x190] sm:$0xf]
        %v886 = vld [vmem:[#allocation5 + $0x194] sm:$0xf]
        %v887 = vld [vmem:[#allocation5 + $0x198] sm:$0xf]
        %v888 = vld [vmem:[#allocation5 + $0x19c] sm:$0xf]
        %v889 = vld [vmem:[#allocation5 + $0x1a0] sm:$0xf]
        %v890 = vld [vmem:[#allocation5 + $0x1a4] sm:$0xf]
        %v891 = vld [vmem:[#allocation5 + $0x1a8] sm:$0xf]
        %v892 = vld [vmem:[#allocation5 + $0x1ac] sm:$0xf]
        %v893 = vld [vmem:[#allocation5 + $0x1b0] sm:$0xf]
        %v894 = vld [vmem:[#allocation5 + $0x1b4] sm:$0xf]
        %v895 = vld [vmem:[#allocation5 + $0x1b8] sm:$0xf]
        %v896 = vld [vmem:[#allocation5 + $0x1bc] sm:$0xf]
        %v897 = vld [vmem:[#allocation5 + $0x1c0] sm:$0xf]
        %v898 = vld [vmem:[#allocation5 + $0x1c4] sm:$0xf]
        %v899 = vld [vmem:[#allocation5 + $0x1c8] sm:$0xf]
        %v900 = vld [vmem:[#allocation5 + $0x1cc] sm:$0xf]
        %v901 = vld [vmem:[#allocation5 + $0x1d0] sm:$0xf]
        %v902 = vld [vmem:[#allocation5 + $0x1d4] sm:$0xf]
        %v903 = vld [vmem:[#allocation5 + $0x1d8] sm:$0xf]
        %v904 = vld [vmem:[#allocation5 + $0x1dc] sm:$0xf]
        %v905 = vld [vmem:[#allocation5 + $0x1e0] sm:$0xf]
        %v906 = vld [vmem:[#allocation5 + $0x1e4] sm:$0xf]
        %v907 = vld [vmem:[#allocation5 + $0x1e8] sm:$0xf]
        %v908 = vld [vmem:[#allocation5 + $0x1ec] sm:$0xf]
        %v909 = vld [vmem:[#allocation5 + $0x1f0] sm:$0xf]
        %v910 = vld [vmem:[#allocation5 + $0x1f4] sm:$0xf]
        %v911 = vld [vmem:[#allocation5 + $0x1f8] sm:$0xf]
        %v912 = vld [vmem:[#allocation5 + $0x1fc] sm:$0xf]
        %v913 = vld [vmem:[#allocation5 + $0x200] sm:$0xf]
        %v914 = vld [vmem:[#allocation5 + $0x204] sm:$0xf]
        %v915 = vld [vmem:[#allocation5 + $0x208] sm:$0xf]
        %v916 = vld [vmem:[#allocation5 + $0x20c] sm:$0xf]
        %v917 = vld [vmem:[#allocation5 + $0x210] sm:$0xf]
        %v918 = vld [vmem:[#allocation5 + $0x214] sm:$0xf]
        %v919 = vld [vmem:[#allocation5 + $0x218] sm:$0xf]
        %v920 = vld [vmem:[#allocation5 + $0x21c] sm:$0xf]
        %v921 = vld [vmem:[#allocation5 + $0x220] sm:$0xf]
        %v922 = vld [vmem:[#allocation5 + $0x224] sm:$0xf]
        %v923 = vld [vmem:[#allocation5 + $0x228] sm:$0xf]
        %v924 = vld [vmem:[#allocation5 + $0x22c] sm:$0xf]
        %v925 = vld [vmem:[#allocation5 + $0x230] sm:$0xf]
        %v926 = vld [vmem:[#allocation5 + $0x234] sm:$0xf]
        %v927 = vld [vmem:[#allocation5 + $0x238] sm:$0xf]
        %v928 = vld [vmem:[#allocation5 + $0x23c] sm:$0xf]
        %v929 = vpack.c.b16 %v443, %v441
        %v930 = vpack.c.b16 %v743, %v737
        %v931 = vpack.c.b16 %v744, %v738
        %v932 = vpack.c.b16 %v539, %v537
        %v933 = vpack.c.b16 %v745, %v739
        %v934 = vpack.c.b16 %v746, %v740
        %v935 = vpack.c.b16 %v635, %v633
        %v936 = vpack.c.b16 %v747, %v741
        %v937 = vpack.c.b16 %v748, %v742
        %v938 = vpack.c.b16 %v447, %v445
        %v939 = vpack.c.b16 %v755, %v749
        %v940 = vpack.c.b16 %v756, %v750
        %v941 = vpack.c.b16 %v543, %v541
        %v942 = vpack.c.b16 %v757, %v751
        %v943 = vpack.c.b16 %v758, %v752
        %v944 = vpack.c.b16 %v639, %v637
        %v945 = vpack.c.b16 %v759, %v753
        %v946 = vpack.c.b16 %v760, %v754
        %v947 = vpack.c.b16 %v451, %v449
        %v948 = vpack.c.b16 %v767, %v761
        %v949 = vpack.c.b16 %v768, %v762
        %v950 = vpack.c.b16 %v547, %v545
        %v951 = vpack.c.b16 %v769, %v763
        %v952 = vpack.c.b16 %v770, %v764
        %v953 = vpack.c.b16 %v643, %v641
        %v954 = vpack.c.b16 %v771, %v765
        %v955 = vpack.c.b16 %v772, %v766
        %v956 = vpack.c.b16 %v455, %v453
        %v957 = vpack.c.b16 %v779, %v773
        %v958 = vpack.c.b16 %v780, %v774
        %v959 = vpack.c.b16 %v551, %v549
        %v960 = vpack.c.b16 %v781, %v775
        %v961 = vpack.c.b16 %v782, %v776
        %v962 = vpack.c.b16 %v647, %v645
        %v963 = vpack.c.b16 %v783, %v777
        %v964 = vpack.c.b16 %v784, %v778
        %v1145 = vunpack.c.l.b16 %v785
        %v1146 = vunpack.c.l.b16 %v786
        %v1147 = vunpack.c.l.b16 %v787
        %v1148 = vunpack.c.l.b16 %v788
        %v1149 = vunpack.c.l.b16 %v789
        %v1150 = vunpack.c.l.b16 %v790
        %v1151 = vunpack.c.l.b16 %v791
        %v1152 = vunpack.c.l.b16 %v792
        %v1153 = vunpack.c.l.b16 %v793
        %v1154 = vunpack.c.l.b16 %v794
        %v1155 = vunpack.c.l.b16 %v795
        %v1156 = vunpack.c.l.b16 %v796
        %v1157 = vunpack.c.l.b16 %v797
        %v1158 = vunpack.c.l.b16 %v798
        %v1159 = vunpack.c.l.b16 %v799
        %v1160 = vunpack.c.l.b16 %v800
        %v1161 = vunpack.c.l.b16 %v801
        %v1162 = vunpack.c.l.b16 %v802
        %v1163 = vunpack.c.l.b16 %v803
        %v1164 = vunpack.c.l.b16 %v804
        %v1165 = vunpack.c.l.b16 %v805
        %v1166 = vunpack.c.l.b16 %v806
        %v1167 = vunpack.c.l.b16 %v807
        %v1168 = vunpack.c.l.b16 %v808
        %v1169 = vunpack.c.l.b16 %v809
        %v1170 = vunpack.c.l.b16 %v810
        %v1171 = vunpack.c.l.b16 %v811
        %v1172 = vunpack.c.l.b16 %v812
        %v1173 = vunpack.c.l.b16 %v813
        %v1174 = vunpack.c.l.b16 %v814
        %v1175 = vunpack.c.l.b16 %v815
        %v1176 = vunpack.c.l.b16 %v816
        %v1177 = vunpack.c.l.b16 %v817
        %v1178 = vunpack.c.l.b16 %v818
        %v1179 = vunpack.c.l.b16 %v819
        %v1180 = vunpack.c.l.b16 %v820
        %v1181 = vunpack.c.l.b16 %v821
        %v1182 = vunpack.c.l.b16 %v822
        %v1183 = vunpack.c.l.b16 %v823
        %v1184 = vunpack.c.l.b16 %v824
        %v1185 = vunpack.c.l.b16 %v825
        %v1186 = vunpack.c.l.b16 %v826
        %v1187 = vunpack.c.l.b16 %v827
        %v1188 = vunpack.c.l.b16 %v828
        %v1189 = vunpack.c.l.b16 %v829
        %v1190 = vunpack.c.l.b16 %v830
        %v1191 = vunpack.c.l.b16 %v831
        %v1192 = vunpack.c.l.b16 %v832
        %v1193 = vunpack.c.l.b16 %v833
        %v1194 = vunpack.c.l.b16 %v834
        %v1195 = vunpack.c.l.b16 %v835
        %v1196 = vunpack.c.l.b16 %v836
        %v1197 = vunpack.c.l.b16 %v837
        %v1198 = vunpack.c.l.b16 %v838
        %v1199 = vunpack.c.l.b16 %v839
        %v1200 = vunpack.c.l.b16 %v840
        %v1201 = vunpack.c.l.b16 %v841
        %v1202 = vunpack.c.l.b16 %v842
        %v1203 = vunpack.c.l.b16 %v843
        %v1204 = vunpack.c.l.b16 %v844
        %v1205 = vunpack.c.l.b16 %v845
        %v1206 = vunpack.c.l.b16 %v846
        %v1207 = vunpack.c.l.b16 %v847
        %v1208 = vunpack.c.l.b16 %v848
        %v1209 = vunpack.c.l.b16 %v849
        %v1210 = vunpack.c.l.b16 %v850
        %v1211 = vunpack.c.l.b16 %v851
        %v1212 = vunpack.c.l.b16 %v852
        %v1213 = vunpack.c.l.b16 %v853
        %v1214 = vunpack.c.l.b16 %v854
        %v1215 = vunpack.c.l.b16 %v855
        %v1216 = vunpack.c.l.b16 %v856
        %v1217 = vunpack.c.l.b16 %v857
        %v1218 = vunpack.c.l.b16 %v858
        %v1219 = vunpack.c.l.b16 %v859
        %v1220 = vunpack.c.l.b16 %v860
        %v1221 = vunpack.c.l.b16 %v861
        %v1222 = vunpack.c.l.b16 %v862
        %v1223 = vunpack.c.l.b16 %v863
        %v1224 = vunpack.c.l.b16 %v864
        %v1225 = vunpack.c.l.b16 %v865
        %v1226 = vunpack.c.l.b16 %v866
        %v1227 = vunpack.c.l.b16 %v867
        %v1228 = vunpack.c.l.b16 %v868
        %v1229 = vunpack.c.l.b16 %v869
        %v1230 = vunpack.c.l.b16 %v870
        %v1231 = vunpack.c.l.b16 %v871
        %v1232 = vunpack.c.l.b16 %v872
        %v1233 = vunpack.c.l.b16 %v873
        %v1234 = vunpack.c.l.b16 %v874
        %v1235 = vunpack.c.l.b16 %v875
        %v1236 = vunpack.c.l.b16 %v876
        %v1237 = vunpack.c.l.b16 %v877
        %v1238 = vunpack.c.l.b16 %v878
        %v1239 = vunpack.c.l.b16 %v879
        %v1240 = vunpack.c.l.b16 %v880
        %v1241 = vunpack.c.l.b16 %v881
        %v1242 = vunpack.c.l.b16 %v882
        %v1243 = vunpack.c.l.b16 %v883
        %v1244 = vunpack.c.l.b16 %v884
        %v1245 = vunpack.c.l.b16 %v885
        %v1246 = vunpack.c.l.b16 %v886
        %v1247 = vunpack.c.l.b16 %v887
        %v1248 = vunpack.c.l.b16 %v888
        %v1249 = vunpack.c.l.b16 %v889
        %v1250 = vunpack.c.l.b16 %v890
        %v1251 = vunpack.c.l.b16 %v891
        %v1252 = vunpack.c.l.b16 %v892
        %v1253 = vunpack.c.l.b16 %v893
        %v1254 = vunpack.c.l.b16 %v894
        %v1255 = vunpack.c.l.b16 %v895
        %v1256 = vunpack.c.l.b16 %v896
        %v1257 = vunpack.c.l.b16 %v897
        %v1258 = vunpack.c.l.b16 %v898
        %v1259 = vunpack.c.l.b16 %v899
        %v1260 = vunpack.c.l.b16 %v900
        %v1261 = vunpack.c.l.b16 %v901
        %v1262 = vunpack.c.l.b16 %v902
        %v1263 = vunpack.c.l.b16 %v903
        %v1264 = vunpack.c.l.b16 %v904
        %v1265 = vunpack.c.l.b16 %v905
        %v1266 = vunpack.c.l.b16 %v906
        %v1267 = vunpack.c.l.b16 %v907
        %v1268 = vunpack.c.l.b16 %v908
        %v1269 = vunpack.c.l.b16 %v909
        %v1270 = vunpack.c.l.b16 %v910
        %v1271 = vunpack.c.l.b16 %v911
        %v1272 = vunpack.c.l.b16 %v912
        %v1273 = vunpack.c.l.b16 %v913
        %v1274 = vunpack.c.l.b16 %v914
        %v1275 = vunpack.c.l.b16 %v915
        %v1276 = vunpack.c.l.b16 %v916
        %v1277 = vunpack.c.l.b16 %v917
        %v1278 = vunpack.c.l.b16 %v918
        %v1279 = vunpack.c.l.b16 %v919
        %v1280 = vunpack.c.l.b16 %v920
        %v1281 = vunpack.c.l.b16 %v921
        %v1282 = vunpack.c.l.b16 %v922
        %v1283 = vunpack.c.l.b16 %v923
        %v1284 = vunpack.c.l.b16 %v924
        %v1285 = vunpack.c.l.b16 %v925
        %v1286 = vunpack.c.l.b16 %v926
        %v1287 = vunpack.c.l.b16 %v927
        %v1288 = vunpack.c.l.b16 %v928
        %v1289 = vpack.c.b16 %v1146, %v1145
        %v1290 = vpack.c.b16 %v1148, %v1147
        %v1291 = vpack.c.b16 %v1150, %v1149
        %v1292 = vpack.c.b16 %v1152, %v1151
        %v1293 = vpack.c.b16 %v1154, %v1153
        %v1294 = vpack.c.b16 %v1156, %v1155
        %v1295 = vpack.c.b16 %v1158, %v1157
        %v1296 = vpack.c.b16 %v1160, %v1159
        %v1297 = vpack.c.b16 %v1162, %v1161
        %v1298 = vpack.c.b16 %v1164, %v1163
        %v1299 = vpack.c.b16 %v1166, %v1165
        %v1300 = vpack.c.b16 %v1168, %v1167
        %v1301 = vpack.c.b16 %v1170, %v1169
        %v1302 = vpack.c.b16 %v1172, %v1171
        %v1303 = vpack.c.b16 %v1174, %v1173
        %v1304 = vpack.c.b16 %v1176, %v1175
        %v1305 = vpack.c.b16 %v1178, %v1177
        %v1306 = vpack.c.b16 %v1180, %v1179
        %v1307 = vpack.c.b16 %v1182, %v1181
        %v1308 = vpack.c.b16 %v1184, %v1183
        %v1309 = vpack.c.b16 %v1186, %v1185
        %v1310 = vpack.c.b16 %v1188, %v1187
        %v1311 = vpack.c.b16 %v1190, %v1189
        %v1312 = vpack.c.b16 %v1192, %v1191
        %v1313 = vpack.c.b16 %v1194, %v1193
        %v1314 = vpack.c.b16 %v1196, %v1195
        %v1315 = vpack.c.b16 %v1198, %v1197
        %v1316 = vpack.c.b16 %v1200, %v1199
        %v1317 = vpack.c.b16 %v1202, %v1201
        %v1318 = vpack.c.b16 %v1204, %v1203
        %v1319 = vpack.c.b16 %v1206, %v1205
        %v1320 = vpack.c.b16 %v1208, %v1207
        %v1321 = vpack.c.b16 %v1210, %v1209
        %v1322 = vpack.c.b16 %v1212, %v1211
        %v1323 = vpack.c.b16 %v1214, %v1213
        %v1324 = vpack.c.b16 %v1216, %v1215
        %v1325 = vpack.c.b16 %v1218, %v1217
        %v1326 = vpack.c.b16 %v1220, %v1219
        %v1327 = vpack.c.b16 %v1222, %v1221
        %v1328 = vpack.c.b16 %v1224, %v1223
        %v1329 = vpack.c.b16 %v1226, %v1225
        %v1330 = vpack.c.b16 %v1228, %v1227
        %v1331 = vpack.c.b16 %v1230, %v1229
        %v1332 = vpack.c.b16 %v1232, %v1231
        %v1333 = vpack.c.b16 %v1234, %v1233
        %v1334 = vpack.c.b16 %v1236, %v1235
        %v1335 = vpack.c.b16 %v1238, %v1237
        %v1336 = vpack.c.b16 %v1240, %v1239
        %v1337 = vpack.c.b16 %v1242, %v1241
        %v1338 = vpack.c.b16 %v1244, %v1243
        %v1339 = vpack.c.b16 %v1246, %v1245
        %v1340 = vpack.c.b16 %v1248, %v1247
        %v1341 = vpack.c.b16 %v1250, %v1249
        %v1342 = vpack.c.b16 %v1252, %v1251
        %v1343 = vpack.c.b16 %v1254, %v1253
        %v1344 = vpack.c.b16 %v1256, %v1255
        %v1345 = vpack.c.b16 %v1258, %v1257
        %v1346 = vpack.c.b16 %v1260, %v1259
        %v1347 = vpack.c.b16 %v1262, %v1261
        %v1348 = vpack.c.b16 %v1264, %v1263
        %v1349 = vpack.c.b16 %v1266, %v1265
        %v1350 = vpack.c.b16 %v1268, %v1267
        %v1351 = vpack.c.b16 %v1270, %v1269
        %v1352 = vpack.c.b16 %v1272, %v1271
        %v1353 = vpack.c.b16 %v1274, %v1273
        %v1354 = vpack.c.b16 %v1276, %v1275
        %v1355 = vpack.c.b16 %v1278, %v1277
        %v1356 = vpack.c.b16 %v1280, %v1279
        %v1357 = vpack.c.b16 %v1282, %v1281
        %v1358 = vpack.c.b16 %v1284, %v1283
        %v1359 = vpack.c.b16 %v1286, %v1285
        %v1360 = vpack.c.b16 %v1288, %v1287
        %1433 = vmatprep.subr.bf16.mxu0 0
        %1434 = vmatpush1.bf16.msra.mxu0 %v1289
        %1435 = vmatprep.subr.bf16.mxu0 0
        %1436 = vmatpush1.bf16.msra.mxu0 %v1290
        %1437 = vmatprep.subr.bf16.mxu0 0
        %1438 = vmatpush1.bf16.msra.mxu0 %v1291
        %1439 = vmatprep.subr.bf16.mxu0 0
        %1440 = vmatpush1.bf16.msra.mxu0 %v1292
        %1441 = vmatprep.subr.bf16.mxu0 0
        %1442 = vmatpush1.bf16.msra.mxu0 %v1293
        %1443 = vmatprep.subr.bf16.mxu0 0
        %1444 = vmatpush1.bf16.msra.mxu0 %v1294
        %1445 = vmatprep.subr.bf16.mxu0 0
        %1446 = vmatpush1.bf16.msra.mxu0 %v1295
        %1447 = vmatprep.subr.bf16.mxu0 0
        %1448 = vmatpush1.bf16.msra.mxu0 %v1296
        %1449 = vmatprep.subr.bf16.mxu0 0
        %1450 = vmatpush1.bf16.msra.mxu0 %v1297
        %1451 = vmatprep.subr.bf16.mxu0 0
        %1452 = vmatpush1.bf16.msra.mxu0 %v1298
        %1453 = vmatprep.subr.bf16.mxu0 0
        %1454 = vmatpush1.bf16.msra.mxu0 %v1299
        %1455 = vmatprep.subr.bf16.mxu0 0
        %1456 = vmatpush1.bf16.msra.mxu0 %v1300
        %1457 = vmatprep.subr.bf16.mxu0 0
        %1458 = vmatpush1.bf16.msra.mxu0 %v1301
        %1459 = vmatprep.subr.bf16.mxu0 0
        %1460 = vmatpush1.bf16.msra.mxu0 %v1302
        %1461 = vmatprep.subr.bf16.mxu0 0
        %1462 = vmatpush1.bf16.msra.mxu0 %v1303
        %1463 = vmatprep.subr.bf16.mxu0 0
        %1464 = vmatpush1.bf16.msra.mxu0 %v1304
        %1465 = vmatprep.mubr.bf16.mxu0 %v930
        %1466 = vmatmul.mubr.bf16.gmra.mrb[0].mxu0 %v929
        %v1467 = vpop.f32.mrb[0].mxu0
        %v1468 = vadd.f32 0.0, %v1467
        %v1469 = vpop.f32.mrb[0].mxu0
        %v1470 = vpop.f32.mrb[0].mxu0
        %v1471 = vadd.f32 0.0, %v1470
        %v1472 = vpop.f32.mrb[0].mxu0
        %1473 = vmatprep.mubr.bf16.mxu0 %v939
        %1474 = vmatmul.mubr.bf16.gmra.mrb[0].mxu0 %v938
        %v1475 = vpop.f32.mrb[0].mxu0
        %v1476 = vadd.f32 0.0, %v1475
        %v1477 = vpop.f32.mrb[0].mxu0
        %v1478 = vpop.f32.mrb[0].mxu0
        %v1479 = vadd.f32 0.0, %v1478
        %v1480 = vpop.f32.mrb[0].mxu0
        %1481 = vmatprep.mubr.bf16.mxu0 %v948
        %1482 = vmatmul.mubr.bf16.gmra.mrb[0].mxu0 %v947
        %v1483 = vpop.f32.mrb[0].mxu0
        %v1484 = vadd.f32 0.0, %v1483
        %v1485 = vpop.f32.mrb[0].mxu0
        %v1486 = vpop.f32.mrb[0].mxu0
        %v1487 = vadd.f32 0.0, %v1486
        %v1488 = vpop.f32.mrb[0].mxu0
        %1489 = vmatprep.mubr.bf16.mxu0 %v957
        %1490 = vmatmul.mubr.bf16.gmra.mrb[0].mxu0 %v956
        %v1491 = vpop.f32.mrb[0].mxu0
        %v1492 = vadd.f32 0.0, %v1491
        %v1493 = vpop.f32.mrb[0].mxu0
        %v1494 = vpop.f32.mrb[0].mxu0
        %v1495 = vadd.f32 0.0, %v1494
        %v1496 = vpop.f32.mrb[0].mxu0
        %1497 = vdwg.mxu0
        %1498 = vmatprep.subr.bf16.mxu0 0
        %1499 = vmatpush1.bf16.msra.mxu0 %v1305
        %1500 = vmatprep.subr.bf16.mxu0 0
        %1501 = vmatpush1.bf16.msra.mxu0 %v1306
        %1502 = vmatprep.subr.bf16.mxu0 0
        %1503 = vmatpush1.bf16.msra.mxu0 %v1307
        %1504 = vmatprep.subr.bf16.mxu0 0
        %1505 = vmatpush1.bf16.msra.mxu0 %v1308
        %1506 = vmatprep.subr.bf16.mxu0 0
        %1507 = vmatpush1.bf16.msra.mxu0 %v1309
        %1508 = vmatprep.subr.bf16.mxu0 0
        %1509 = vmatpush1.bf16.msra.mxu0 %v1310
        %1510 = vmatprep.subr.bf16.mxu0 0
        %1511 = vmatpush1.bf16.msra.mxu0 %v1311
        %1512 = vmatprep.subr.bf16.mxu0 0
        %1513 = vmatpush1.bf16.msra.mxu0 %v1312
        %1514 = vmatprep.subr.bf16.mxu0 0
        %1515 = vmatpush1.bf16.msra.mxu0 %v1313
        %1516 = vmatprep.subr.bf16.mxu0 0
        %1517 = vmatpush1.bf16.msra.mxu0 %v1314
        %1518 = vmatprep.subr.bf16.mxu0 0
        %1519 = vmatpush1.bf16.msra.mxu0 %v1315
        %1520 = vmatprep.subr.bf16.mxu0 0
        %1521 = vmatpush1.bf16.msra.mxu0 %v1316
        %1522 = vmatprep.subr.bf16.mxu0 0
        %1523 = vmatpush1.bf16.msra.mxu0 %v1317
        %1524 = vmatprep.subr.bf16.mxu0 0
        %1525 = vmatpush1.bf16.msra.mxu0 %v1318
        %1526 = vmatprep.subr.bf16.mxu0 0
        %1527 = vmatpush1.bf16.msra.mxu0 %v1319
        %1528 = vmatprep.subr.bf16.mxu0 0
        %1529 = vmatpush1.bf16.msra.mxu0 %v1320
        %1530 = vmatprep.mubr.bf16.mxu0 %v932
        %1531 = vmatmul.mubr.bf16.gmra.mrb[0].mxu0 %v931
        %v1532 = vpop.f32.mrb[0].mxu0
        %v1533 = vadd.f32 %v1468, %v1532
        %v1534 = vpop.f32.mrb[0].mxu0
        %v1535 = vpop.f32.mrb[0].mxu0
        %v1536 = vadd.f32 %v1471, %v1535
        %v1537 = vpop.f32.mrb[0].mxu0
        %1538 = vmatprep.mubr.bf16.mxu0 %v941
        %1539 = vmatmul.mubr.bf16.gmra.mrb[0].mxu0 %v940
        %v1540 = vpop.f32.mrb[0].mxu0
        %v1541 = vadd.f32 %v1476, %v1540
        %v1542 = vpop.f32.mrb[0].mxu0
        %v1543 = vpop.f32.mrb[0].mxu0
        %v1544 = vadd.f32 %v1479, %v1543
        %v1545 = vpop.f32.mrb[0].mxu0
        %1546 = vmatprep.mubr.bf16.mxu0 %v950
        %1547 = vmatmul.mubr.bf16.gmra.mrb[0].mxu0 %v949
        %v1548 = vpop.f32.mrb[0].mxu0
        %v1549 = vadd.f32 %v1484, %v1548
        %v1550 = vpop.f32.mrb[0].mxu0
        %v1551 = vpop.f32.mrb[0].mxu0
        %v1552 = vadd.f32 %v1487, %v1551
        %v1553 = vpop.f32.mrb[0].mxu0
        %1554 = vmatprep.mubr.bf16.mxu0 %v959
        %1555 = vmatmul.mubr.bf16.gmra.mrb[0].mxu0 %v958
        %v1556 = vpop.f32.mrb[0].mxu0
        %v1557 = vadd.f32 %v1492, %v1556
        %v1558 = vpop.f32.mrb[0].mxu0
        %v1559 = vpop.f32.mrb[0].mxu0
        %v1560 = vadd.f32 %v1495, %v1559
        %v1561 = vpop.f32.mrb[0].mxu0
        %1562 = vdwg.mxu0
        %1563 = vmatprep.subr.bf16.mxu0 0
        %1564 = vmatpush1.bf16.msra.mxu0 %v1321
        %1565 = vmatprep.subr.bf16.mxu0 0
        %1566 = vmatpush1.bf16.msra.mxu0 %v1322
        %1567 = vmatprep.subr.bf16.mxu0 0
        %1568 = vmatpush1.bf16.msra.mxu0 %v1323
        %1569 = vmatprep.subr.bf16.mxu0 0
        %1570 = vmatpush1.bf16.msra.mxu0 %v1324
        %1571 = vmatprep.subr.bf16.mxu0 0
        %1572 = vmatpush1.bf16.msra.mxu0 %v1325
        %1573 = vmatprep.subr.bf16.mxu0 0
        %1574 = vmatpush1.bf16.msra.mxu0 %v1326
        %1575 = vmatprep.subr.bf16.mxu0 0
        %1576 = vmatpush1.bf16.msra.mxu0 %v1327
        %1577 = vmatprep.subr.bf16.mxu0 0
        %1578 = vmatpush1.bf16.msra.mxu0 %v1328
        %1579 = vmatprep.subr.bf16.mxu0 0
        %1580 = vmatpush1.bf16.msra.mxu0 %v1329
        %1581 = vmatprep.subr.bf16.mxu0 0
        %1582 = vmatpush1.bf16.msra.mxu0 %v1330
        %1583 = vmatprep.subr.bf16.mxu0 0
        %1584 = vmatpush1.bf16.msra.mxu0 %v1331
        %1585 = vmatprep.subr.bf16.mxu0 0
        %1586 = vmatpush1.bf16.msra.mxu0 %v1332
        %1587 = vmatprep.subr.bf16.mxu0 0
        %1588 = vmatpush1.bf16.msra.mxu0 %v1333
        %1589 = vmatprep.subr.bf16.mxu0 0
        %1590 = vmatpush1.bf16.msra.mxu0 %v1334
        %1591 = vmatprep.subr.bf16.mxu0 0
        %1592 = vmatpush1.bf16.msra.mxu0 %v1335
        %1593 = vmatprep.subr.bf16.mxu0 0
        %1594 = vmatpush1.bf16.msra.mxu0 %v1336
        %1595 = vmatprep.mubr.bf16.mxu0 %v934
        %1596 = vmatmul.mubr.bf16.gmra.mrb[0].mxu0 %v933
        %v1597 = vpop.f32.mrb[0].mxu0
        %v1598 = vadd.f32 %v1533, %v1597
        %v1599 = vpop.f32.mrb[0].mxu0
        %v1600 = vpop.f32.mrb[0].mxu0
        %v1601 = vadd.f32 %v1536, %v1600
        %v1602 = vpop.f32.mrb[0].mxu0
        %1603 = vmatprep.mubr.bf16.mxu0 %v943
        %1604 = vmatmul.mubr.bf16.gmra.mrb[0].mxu0 %v942
        %v1605 = vpop.f32.mrb[0].mxu0
        %v1606 = vadd.f32 %v1541, %v1605
        %v1607 = vpop.f32.mrb[0].mxu0
        %v1608 = vpop.f32.mrb[0].mxu0
        %v1609 = vadd.f32 %v1544, %v1608
        %v1610 = vpop.f32.mrb[0].mxu0
        %1611 = vmatprep.mubr.bf16.mxu0 %v952
        %1612 = vmatmul.mubr.bf16.gmra.mrb[0].mxu0 %v951
        %v1613 = vpop.f32.mrb[0].mxu0
        %v1614 = vadd.f32 %v1549, %v1613
        %v1615 = vpop.f32.mrb[0].mxu0
        %v1616 = vpop.f32.mrb[0].mxu0
        %v1617 = vadd.f32 %v1552, %v1616
        %v1618 = vpop.f32.mrb[0].mxu0
        %1619 = vmatprep.mubr.bf16.mxu0 %v961
        %1620 = vmatmul.mubr.bf16.gmra.mrb[0].mxu0 %v960
        %v1621 = vpop.f32.mrb[0].mxu0
        %v1622 = vadd.f32 %v1557, %v1621
        %v1623 = vpop.f32.mrb[0].mxu0
        %v1624 = vpop.f32.mrb[0].mxu0
        %v1625 = vadd.f32 %v1560, %v1624
        %v1626 = vpop.f32.mrb[0].mxu0
        %1627 = vdwg.mxu0
        %1628 = vmatprep.subr.bf16.mxu0 0
        %1629 = vmatpush1.bf16.msra.mxu0 %v1337
        %1630 = vmatprep.subr.bf16.mxu0 0
        %1631 = vmatpush1.bf16.msra.mxu0 %v1338
        %1632 = vmatprep.subr.bf16.mxu0 0
        %1633 = vmatpush1.bf16.msra.mxu0 %v1339
        %1634 = vmatprep.subr.bf16.mxu0 0
        %1635 = vmatpush1.bf16.msra.mxu0 %v1340
        %1636 = vmatprep.subr.bf16.mxu0 0
        %1637 = vmatpush1.bf16.msra.mxu0 %v1341
        %1638 = vmatprep.subr.bf16.mxu0 0
        %1639 = vmatpush1.bf16.msra.mxu0 %v1342
        %1640 = vmatprep.subr.bf16.mxu0 0
        %1641 = vmatpush1.bf16.msra.mxu0 %v1343
        %1642 = vmatprep.subr.bf16.mxu0 0
        %1643 = vmatpush1.bf16.msra.mxu0 %v1344
        %1644 = vmatprep.subr.bf16.mxu0 0
        %1645 = vmatpush1.bf16.msra.mxu0 %v1345
        %1646 = vmatprep.subr.bf16.mxu0 0
        %1647 = vmatpush1.bf16.msra.mxu0 %v1346
        %1648 = vmatprep.subr.bf16.mxu0 0
        %1649 = vmatpush1.bf16.msra.mxu0 %v1347
        %1650 = vmatprep.subr.bf16.mxu0 0
        %1651 = vmatpush1.bf16.msra.mxu0 %v1348
        %1652 = vmatprep.subr.bf16.mxu0 0
        %1653 = vmatpush1.bf16.msra.mxu0 %v1349
        %1654 = vmatprep.subr.bf16.mxu0 0
        %1655 = vmatpush1.bf16.msra.mxu0 %v1350
        %1656 = vmatprep.subr.bf16.mxu0 0
        %1657 = vmatpush1.bf16.msra.mxu0 %v1351
        %1658 = vmatprep.subr.bf16.mxu0 0
        %1659 = vmatpush1.bf16.msra.mxu0 %v1352
        %1660 = vmatprep.mubr.bf16.mxu0 %v936
        %1661 = vmatmul.mubr.bf16.gmra.mrb[0].mxu0 %v935
        %v1662 = vpop.f32.mrb[0].mxu0
        %v1663 = vadd.f32 %v1598, %v1662
        %v1664 = vpop.f32.mrb[0].mxu0
        %v1665 = vpop.f32.mrb[0].mxu0
        %v1666 = vadd.f32 %v1601, %v1665
        %v1667 = vpop.f32.mrb[0].mxu0
        %1668 = vmatprep.mubr.bf16.mxu0 %v945
        %1669 = vmatmul.mubr.bf16.gmra.mrb[0].mxu0 %v944
        %v1670 = vpop.f32.mrb[0].mxu0
        %v1671 = vadd.f32 %v1606, %v1670
        %v1672 = vpop.f32.mrb[0].mxu0
        %v1673 = vpop.f32.mrb[0].mxu0
        %v1674 = vadd.f32 %v1609, %v1673
        %v1675 = vpop.f32.mrb[0].mxu0
        %1676 = vmatprep.mubr.bf16.mxu0 %v954
        %1677 = vmatmul.mubr.bf16.gmra.mrb[0].mxu0 %v953
        %v1678 = vpop.f32.mrb[0].mxu0
        %v1679 = vadd.f32 %v1614, %v1678
        %v1680 = vpop.f32.mrb[0].mxu0
        %v1681 = vpop.f32.mrb[0].mxu0
        %v1682 = vadd.f32 %v1617, %v1681
        %v1683 = vpop.f32.mrb[0].mxu0
        %1684 = vmatprep.mubr.bf16.mxu0 %v963
        %1685 = vmatmul.mubr.bf16.gmra.mrb[0].mxu0 %v962
        %v1686 = vpop.f32.mrb[0].mxu0
        %v1687 = vadd.f32 %v1622, %v1686
        %v1688 = vpop.f32.mrb[0].mxu0
        %v1689 = vpop.f32.mrb[0].mxu0
        %v1690 = vadd.f32 %v1625, %v1689
        %v1691 = vpop.f32.mrb[0].mxu0
        %1692 = vdwg.mxu0
        %1693 = vmatprep.subr.bf16.mxu0 0
        %1694 = vmatpush1.bf16.msra.mxu0 %v1353
        %1695 = vmatprep.subr.bf16.mxu0 0
        %1696 = vmatpush1.bf16.msra.mxu0 %v1354
        %1697 = vmatprep.subr.bf16.mxu0 0
        %1698 = vmatpush1.bf16.msra.mxu0 %v1355
        %1699 = vmatprep.subr.bf16.mxu0 0
        %1700 = vmatpush1.bf16.msra.mxu0 %v1356
        %1701 = vmatprep.subr.bf16.mxu0 0
        %1702 = vmatpush1.bf16.msra.mxu0 %v1357
        %1703 = vmatprep.subr.bf16.mxu0 0
        %1704 = vmatpush1.bf16.msra.mxu0 %v1358
        %1705 = vmatprep.subr.bf16.mxu0 0
        %1706 = vmatpush1.bf16.msra.mxu0 %v1359
        %1707 = vmatprep.subr.bf16.mxu0 0
        %1708 = vmatpush1.bf16.msra.mxu0 %v1360
        %1709 = vmatprep.subr.bf16.mxu0 0
        %1710 = vmatpush1.bf16.msra.mxu0 0
        %1711 = vmatprep.subr.bf16.mxu0 0
        %1712 = vmatpush1.bf16.msra.mxu0 0
        %1713 = vmatprep.subr.bf16.mxu0 0
        %1714 = vmatpush1.bf16.msra.mxu0 0
        %1715 = vmatprep.subr.bf16.mxu0 0
        %1716 = vmatpush1.bf16.msra.mxu0 0
        %1717 = vmatprep.subr.bf16.mxu0 0
        %1718 = vmatpush1.bf16.msra.mxu0 0
        %1719 = vmatprep.subr.bf16.mxu0 0
        %1720 = vmatpush1.bf16.msra.mxu0 0
        %1721 = vmatprep.subr.bf16.mxu0 0
        %1722 = vmatpush1.bf16.msra.mxu0 0
        %1723 = vmatprep.subr.bf16.mxu0 0
        %1724 = vmatpush1.bf16.msra.mxu0 0
        %1725 = vmatprep.mubr.bf16.mxu0 0
        %1726 = vmatmul.mubr.bf16.gmra.mrb[0].mxu0 %v937
        %v1727 = vpop.f32.mrb[0].mxu0
        %v1728 = vadd.f32 %v1663, %v1727
        %v1729 = vpop.f32.mrb[0].mxu0
        %v1730 = vpop.f32.mrb[0].mxu0
        %v1731 = vadd.f32 %v1666, %v1730
        %v1732 = vpop.f32.mrb[0].mxu0
        %1733 = vmatprep.mubr.bf16.mxu0 0
        %1734 = vmatmul.mubr.bf16.gmra.mrb[0].mxu0 %v946
        %v1735 = vpop.f32.mrb[0].mxu0
        %v1736 = vadd.f32 %v1671, %v1735
        %v1737 = vpop.f32.mrb[0].mxu0
        %v1738 = vpop.f32.mrb[0].mxu0
        %v1739 = vadd.f32 %v1674, %v1738
        %v1740 = vpop.f32.mrb[0].mxu0
        %1741 = vmatprep.mubr.bf16.mxu0 0
        %1742 = vmatmul.mubr.bf16.gmra.mrb[0].mxu0 %v955
        %v1743 = vpop.f32.mrb[0].mxu0
        %v1744 = vadd.f32 %v1679, %v1743
        %v1745 = vpop.f32.mrb[0].mxu0
        %v1746 = vpop.f32.mrb[0].mxu0
        %v1747 = vadd.f32 %v1682, %v1746
        %v1748 = vpop.f32.mrb[0].mxu0
        %1749 = vmatprep.mubr.bf16.mxu0 0
        %1750 = vmatmul.mubr.bf16.gmra.mrb[0].mxu0 %v964
        %v1751 = vpop.f32.mrb[0].mxu0
        %v1752 = vadd.f32 %v1687, %v1751
        %v1753 = vpop.f32.mrb[0].mxu0
        %v1754 = vpop.f32.mrb[0].mxu0
        %v1755 = vadd.f32 %v1690, %v1754
        %v1756 = vpop.f32.mrb[0].mxu0
        %1757 = vdwg.mxu0
        %v1758 = vpack.c.bf16 %v1731, %v1728
        %v1759 = vpack.c.bf16 %v1739, %v1736
        %v1760 = vpack.c.bf16 %v1747, %v1744
        %v1761 = vpack.c.bf16 %v1755, %v1752
        %v1766 = vunpack.c.l.b16 %v1758
        %v1767 = vunpack.c.h.b16 %v1758
        %v1768 = vunpack.c.l.b16 %v1759
        %v1769 = vunpack.c.h.b16 %v1759
        %v1770 = vunpack.c.l.b16 %v1760
        %v1771 = vunpack.c.h.b16 %v1760
        %v1772 = vunpack.c.l.b16 %v1761
        %v1773 = vunpack.c.h.b16 %v1761
        %v1774 = vpack.c.b16 %v1766, %v1766
        %v1775 = vpack.c.b16 %v1767, %v1767
        %v1776 = vpack.c.b16 %v1768, %v1768
        %v1777 = vpack.c.b16 %v1769, %v1769
        %v1778 = vpack.c.b16 %v1770, %v1770
        %v1779 = vpack.c.b16 %v1771, %v1771
        %v1780 = vpack.c.b16 %v1772, %v1772
        %v1781 = vpack.c.b16 %v1773, %v1773
        %1790 = vst [vmem:[%s308] sm:$0xf] %v1774
        %1791 = vst [vmem:[%s308 + $0x4] sm:$0xf] %v1775
        %1792 = vst [vmem:[%s308 + $0x8] sm:$0xf] %v1776
        %1793 = vst [vmem:[%s308 + $0xc] sm:$0xf] %v1777
        %1794 = vst [vmem:[%s308 + $0x10] sm:$0xf] %v1778
        %1795 = vst [vmem:[%s308 + $0x14] sm:$0xf] %v1779
        %1796 = vst [vmem:[%s308 + $0x18] sm:$0xf] %v1780
        %1797 = vst [vmem:[%s308 + $0x1c] sm:$0xf] %v1781
        %v1798 = vadd.f32 %v1728, %v1731
        %v1799 = vadd.f32 %v1798, %v1736
        %v1800 = vadd.f32 %v1799, %v1739
        %v1801 = vadd.f32 %v1800, %v1744
        %v1802 = vadd.f32 %v1801, %v1747
        %v1803 = vadd.f32 %v1802, %v1752
        %v1804 = vadd.f32 %v1803, %v1755
        %v1805 = vrot.slane %v1804, 4
        %v1806 = vadd.f32 %v1804, %v1805
        %v1807 = vrot.slane %v1806, 2
        %v1808 = vadd.f32 %v1806, %v1807
        %v1809 = vrot.slane %v1808, 1
        %v1810 = vadd.f32 %v1808, %v1809
        %v1811 = vmul.f32 %v1728, %v1728
        %v1812 = vmul.f32 %v1731, %v1731
        %v1813 = vmul.f32 %v1736, %v1736
        %v1814 = vmul.f32 %v1739, %v1739
        %v1815 = vmul.f32 %v1744, %v1744
        %v1816 = vmul.f32 %v1747, %v1747
        %v1817 = vmul.f32 %v1752, %v1752
        %v1818 = vmul.f32 %v1755, %v1755
        %v1819 = vadd.f32 %v1811, %v1812
        %v1820 = vadd.f32 %v1819, %v1813
        %v1821 = vadd.f32 %v1820, %v1814
        %v1822 = vadd.f32 %v1821, %v1815
        %v1823 = vadd.f32 %v1822, %v1816
        %v1824 = vadd.f32 %v1823, %v1817
        %v1825 = vadd.f32 %v1824, %v1818
        %v1826 = vrot.slane %v1825, 4
        %v1827 = vadd.f32 %v1825, %v1826
        %v1828 = vrot.slane %v1827, 2
        %v1829 = vadd.f32 %v1827, %v1828
        %v1830 = vrot.slane %v1829, 1
        %v1831 = vadd.f32 %v1829, %v1830
        %vm1832 = vcmask 1040384
        %v1833 = vsel %vm1832, %v1810, %v1831
        %1834 = vst [vmem:[%s315] sm:$0x3] %v1833
        %v1835 = vld [vmem:[#allocation7] sm:$0xf]
        %v1836 = vld [vmem:[#allocation7 + $0x4] sm:$0xf]
        %v1837 = vld [vmem:[#allocation7 + $0x8] sm:$0xf]
        %v1838 = vld [vmem:[#allocation7 + $0xc] sm:$0xf]
        %v1839 = vld [vmem:[#allocation7 + $0x10] sm:$0xf]
        %v1840 = vld [vmem:[#allocation7 + $0x14] sm:$0xf]
        %v1841 = vld [vmem:[#allocation7 + $0x18] sm:$0xf]
        %v1842 = vld [vmem:[#allocation7 + $0x1c] sm:$0xf]
        %v1843 = vld [vmem:[#allocation7 + $0x20] sm:$0xf]
        %v1844 = vld [vmem:[#allocation7 + $0x24] sm:$0xf]
        %v1845 = vld [vmem:[#allocation7 + $0x28] sm:$0xf]
        %v1846 = vld [vmem:[#allocation7 + $0x2c] sm:$0xf]
        %v1847 = vld [vmem:[#allocation7 + $0x30] sm:$0xf]
        %v1848 = vld [vmem:[#allocation7 + $0x34] sm:$0xf]
        %v1849 = vld [vmem:[#allocation7 + $0x38] sm:$0xf]
        %v1850 = vld [vmem:[#allocation7 + $0x3c] sm:$0xf]
        %v1867 = vunpack.c.l.b16 %v1835
        %v1868 = vunpack.c.l.b16 %v1836
        %v1869 = vunpack.c.l.b16 %v1837
        %v1870 = vunpack.c.l.b16 %v1838
        %v1871 = vunpack.c.l.b16 %v1839
        %v1872 = vunpack.c.l.b16 %v1840
        %v1873 = vunpack.c.l.b16 %v1841
        %v1874 = vunpack.c.l.b16 %v1842
        %v1875 = vunpack.c.l.b16 %v1843
        %v1876 = vunpack.c.l.b16 %v1844
        %v1877 = vunpack.c.l.b16 %v1845
        %v1878 = vunpack.c.l.b16 %v1846
        %v1879 = vunpack.c.l.b16 %v1847
        %v1880 = vunpack.c.l.b16 %v1848
        %v1881 = vunpack.c.l.b16 %v1849
        %v1882 = vunpack.c.l.b16 %v1850
        %v1883 = vpack.c.b16 %v1868, %v1867
        %v1884 = vpack.c.b16 %v1870, %v1869
        %v1885 = vpack.c.b16 %v1872, %v1871
        %v1886 = vpack.c.b16 %v1874, %v1873
        %v1887 = vpack.c.b16 %v1876, %v1875
        %v1888 = vpack.c.b16 %v1878, %v1877
        %v1889 = vpack.c.b16 %v1880, %v1879
        %v1890 = vpack.c.b16 %v1882, %v1881
        %1899 = vmatprep.subr.bf16.mxu0 0
        %1900 = vmatpush1.bf16.msra.mxu0 %v1883
        %1901 = vmatprep.subr.bf16.mxu0 0
        %1902 = vmatpush1.bf16.msra.mxu0 %v1884
        %1903 = vmatprep.subr.bf16.mxu0 0
        %1904 = vmatpush1.bf16.msra.mxu0 %v1885
        %1905 = vmatprep.subr.bf16.mxu0 0
        %1906 = vmatpush1.bf16.msra.mxu0 %v1886
        %1907 = vmatprep.subr.bf16.mxu0 0
        %1908 = vmatpush1.bf16.msra.mxu0 %v1887
        %1909 = vmatprep.subr.bf16.mxu0 0
        %1910 = vmatpush1.bf16.msra.mxu0 %v1888
        %1911 = vmatprep.subr.bf16.mxu0 0
        %1912 = vmatpush1.bf16.msra.mxu0 %v1889
        %1913 = vmatprep.subr.bf16.mxu0 0
        %1914 = vmatpush1.bf16.msra.mxu0 %v1890
        %1915 = vmatprep.subr.bf16.mxu0 0
        %1916 = vmatpush1.bf16.msra.mxu0 0
        %1917 = vmatprep.subr.bf16.mxu0 0
        %1918 = vmatpush1.bf16.msra.mxu0 0
        %1919 = vmatprep.subr.bf16.mxu0 0
        %1920 = vmatpush1.bf16.msra.mxu0 0
        %1921 = vmatprep.subr.bf16.mxu0 0
        %1922 = vmatpush1.bf16.msra.mxu0 0
        %1923 = vmatprep.subr.bf16.mxu0 0
        %1924 = vmatpush1.bf16.msra.mxu0 0
        %1925 = vmatprep.subr.bf16.mxu0 0
        %1926 = vmatpush1.bf16.msra.mxu0 0
        %1927 = vmatprep.subr.bf16.mxu0 0
        %1928 = vmatpush1.bf16.msra.mxu0 0
        %1929 = vmatprep.subr.bf16.mxu0 0
        %1930 = vmatpush1.bf16.msra.mxu0 0
        %1931 = vmatprep.mubr.bf16.mxu0 0
        %1932 = vmatmul.mubr.bf16.gmra.mrb[0].mxu0 %v933
        %v1933 = vpop.f32.mrb[0].mxu0
        %v1934 = vadd.f32 0.0, %v1933
        %v1935 = vpop.f32.mrb[0].mxu0
        %v1936 = vpop.f32.mrb[0].mxu0
        %v1937 = vadd.f32 0.0, %v1936
        %v1938 = vpop.f32.mrb[0].mxu0
        %1939 = vmatprep.mubr.bf16.mxu0 0
        %1940 = vmatmul.mubr.bf16.gmra.mrb[0].mxu0 %v942
        %v1941 = vpop.f32.mrb[0].mxu0
        %v1942 = vadd.f32 0.0, %v1941
        %v1943 = vpop.f32.mrb[0].mxu0
        %v1944 = vpop.f32.mrb[0].mxu0
        %v1945 = vadd.f32 0.0, %v1944
        %v1946 = vpop.f32.mrb[0].mxu0
        %1947 = vmatprep.mubr.bf16.mxu0 0
        %1948 = vmatmul.mubr.bf16.gmra.mrb[0].mxu0 %v951
        %v1949 = vpop.f32.mrb[0].mxu0
        %v1950 = vadd.f32 0.0, %v1949
        %v1951 = vpop.f32.mrb[0].mxu0
        %v1952 = vpop.f32.mrb[0].mxu0
        %v1953 = vadd.f32 0.0, %v1952
        %v1954 = vpop.f32.mrb[0].mxu0
        %1955 = vmatprep.mubr.bf16.mxu0 0
        %1956 = vmatmul.mubr.bf16.gmra.mrb[0].mxu0 %v960
        %v1957 = vpop.f32.mrb[0].mxu0
        %v1958 = vadd.f32 0.0, %v1957
        %v1959 = vpop.f32.mrb[0].mxu0
        %v1960 = vpop.f32.mrb[0].mxu0
        %v1961 = vadd.f32 0.0, %v1960
        %v1962 = vpop.f32.mrb[0].mxu0
        %1963 = vdwg.mxu0
        %v1964 = vpack.c.bf16 %v1937, %v1934
        %v1965 = vpack.c.bf16 %v1945, %v1942
        %v1966 = vpack.c.bf16 %v1953, %v1950
        %v1967 = vpack.c.bf16 %v1961, %v1958
        %v1972 = vunpack.c.l.b16 %v1964
        %v1973 = vunpack.c.h.b16 %v1964
        %v1974 = vunpack.c.l.b16 %v1965
        %v1975 = vunpack.c.h.b16 %v1965
        %v1976 = vunpack.c.l.b16 %v1966
        %v1977 = vunpack.c.h.b16 %v1966
        %v1978 = vunpack.c.l.b16 %v1967
        %v1979 = vunpack.c.h.b16 %v1967
        %v1980 = vpack.c.b16 %v1972, %v1972
        %v1981 = vpack.c.b16 %v1973, %v1973
        %v1982 = vpack.c.b16 %v1974, %v1974
        %v1983 = vpack.c.b16 %v1975, %v1975
        %v1984 = vpack.c.b16 %v1976, %v1976
        %v1985 = vpack.c.b16 %v1977, %v1977
        %v1986 = vpack.c.b16 %v1978, %v1978
        %v1987 = vpack.c.b16 %v1979, %v1979
        %1996 = vst [vmem:[%s322] sm:$0xf] %v1980
        %1997 = vst [vmem:[%s322 + $0x4] sm:$0xf] %v1981
        %1998 = vst [vmem:[%s322 + $0x8] sm:$0xf] %v1982
        %1999 = vst [vmem:[%s322 + $0xc] sm:$0xf] %v1983
        %2000 = vst [vmem:[%s322 + $0x10] sm:$0xf] %v1984
        %2001 = vst [vmem:[%s322 + $0x14] sm:$0xf] %v1985
        %2002 = vst [vmem:[%s322 + $0x18] sm:$0xf] %v1986
        %2003 = vst [vmem:[%s322 + $0x1c] sm:$0xf] %v1987
        %v2004 = vadd.f32 %v1934, %v1937
        %v2005 = vadd.f32 %v2004, %v1942
        %v2006 = vadd.f32 %v2005, %v1945
        %v2007 = vadd.f32 %v2006, %v1950
        %v2008 = vadd.f32 %v2007, %v1953
        %v2009 = vadd.f32 %v2008, %v1958
        %v2010 = vadd.f32 %v2009, %v1961
        %v2011 = vrot.slane %v2010, 4
        %v2012 = vadd.f32 %v2010, %v2011
        %v2013 = vrot.slane %v2012, 2
        %v2014 = vadd.f32 %v2012, %v2013
        %v2015 = vrot.slane %v2014, 1
        %v2016 = vadd.f32 %v2014, %v2015
        %v2017 = vmul.f32 %v1934, %v1934
        %v2018 = vmul.f32 %v1937, %v1937
        %v2019 = vmul.f32 %v1942, %v1942
        %v2020 = vmul.f32 %v1945, %v1945
        %v2021 = vmul.f32 %v1950, %v1950
        %v2022 = vmul.f32 %v1953, %v1953
        %v2023 = vmul.f32 %v1958, %v1958
        %v2024 = vmul.f32 %v1961, %v1961
        %v2025 = vadd.f32 %v2017, %v2018
        %v2026 = vadd.f32 %v2025, %v2019
        %v2027 = vadd.f32 %v2026, %v2020
        %v2028 = vadd.f32 %v2027, %v2021
        %v2029 = vadd.f32 %v2028, %v2022
        %v2030 = vadd.f32 %v2029, %v2023
        %v2031 = vadd.f32 %v2030, %v2024
        %v2032 = vrot.slane %v2031, 4
        %v2033 = vadd.f32 %v2031, %v2032
        %v2034 = vrot.slane %v2033, 2
        %v2035 = vadd.f32 %v2033, %v2034
        %v2036 = vrot.slane %v2035, 1
        %v2037 = vadd.f32 %v2035, %v2036
        %v2038 = vsel %vm1832, %v2016, %v2037
        %2039 = vst [vmem:[%s329] sm:$0x3] %v2038
        %s2040 = sand.u32 %s119, 1
        %s2041 = scalar_lea.sflag [#allocation4], %s2040
        %s2042 = sand.u32 %s119, 1
        %s2043 = smul.addr %s2042, 32
        %s2044 = scalar_lea.vmem [#allocation8], %s2043
        %s2045 = sand.u32 %s29, 1
        %s2046 = scalar_lea.sflag [#allocation10], %s2045
        %s2047 = sand.u32 %s147, 1
        %s2048 = smul.addr %s2047, 2
        %s2049 = scalar_lea.vmem [#allocation9], %s2048
        %s2050 = sand.u32 %s29, 1
        %s2051 = scalar_lea.sflag [#allocation10], %s2050
        %s2052 = sand.u32 %s175, 1
        %s2053 = smul.addr %s2052, 32
        %s2054 = scalar_lea.vmem [#allocation11], %s2053
        %s2055 = sand.u32 %s203, 1
        %s2056 = scalar_lea.sflag [#allocation13], %s2055
        %s2057 = sand.u32 %s203, 1
        %s2058 = smul.addr %s2057, 2
        %s2059 = scalar_lea.vmem [#allocation12], %s2058
        // Predicated region
        $region45: #{bottleneck_block.4} parent=31 // pred_check
          %p2060 = pneg %p129
        $region46: #{bottleneck_block.4} parent=31 // pred_check_branch
          %2062 = sbr.rel (%p2060) target = $region48
        $region47: #{bottleneck_block.4} parent=31 // pred_region
          %s2063 = smul.u32 8, %s34
          %s2065 = ssub.s32 512, 512
          %2066 = vsyncadd %s2041, %s2065
          %s2067 = smul.addr %s33, 8
          %s2068 = sadd.s32 %s2063, %s2067
          %s2069 = smul.addr %s2068, 64
          %s2070 = scalar_lea.hbm %s3, %s2069
          %s2071 = sshll.u32 %s2044, 4
          %s2072 = int_to_ptr.vmem [resolvable:$true] %s2071
          %2077 = dma.vmem_to_hbm [thread:$0]  %s2072, 512, %s2070, %s2041, 64, 64, 4
        $region48: #{bottleneck_block.4} parent=31 // pred_fallthru
          _
        // Predicated region
        $region49: #{bottleneck_block.4} parent=31 // pred_check
          %p2078 = pneg %p157
        $region50: #{bottleneck_block.4} parent=31 // pred_check_branch
          %2080 = sbr.rel (%p2078) target = $region52
        $region51: #{bottleneck_block.4} parent=31 // pred_region
          %s2082 = ssub.s32 32, 32
          %2083 = vsyncadd %s2046, %s2082
          %s2084 = sadd.s32 %s34, %s33
          %s2085 = smul.addr %s2084, 32
          %s2086 = scalar_lea.hbm %s4, %s2085
          %s2088 = sshll.u32 %s2049, 4
          %s2089 = int_to_ptr.vmem [resolvable:$true] %s2088
          %2091 = dma.vmem_to_hbm [thread:$0]  %s2089, 32, %s2086, %s2046
        $region52: #{bottleneck_block.4} parent=31 // pred_fallthru
          _
        // Predicated region
        $region53: #{bottleneck_block.4} parent=31 // pred_check
          %p2092 = pneg %p185
        $region54: #{bottleneck_block.4} parent=31 // pred_check_branch
          %2094 = sbr.rel (%p2092) target = $region56
        $region55: #{bottleneck_block.4} parent=31 // pred_region
          %s2095 = smul.u32 8, %s34
          %s2097 = ssub.s32 512, 512
          %2098 = vsyncadd %s2051, %s2097
          %s2099 = smul.addr %s33, 8
          %s2100 = sadd.s32 %s2095, %s2099
          %s2101 = smul.addr %s2100, 64
          %s2102 = scalar_lea.hbm %s5, %s2101
          %s2103 = sshll.u32 %s2054, 4
          %s2104 = int_to_ptr.vmem [resolvable:$true] %s2103
          %2109 = dma.vmem_to_hbm [thread:$0]  %s2104, 512, %s2102, %s2051, 64, 64, 4
        $region56: #{bottleneck_block.4} parent=31 // pred_fallthru
          _
        // Predicated region
        $region57: #{bottleneck_block.4} parent=31 // pred_check
          %p2110 = pneg %p213
        $region58: #{bottleneck_block.4} parent=31 // pred_check_branch
          %2112 = sbr.rel (%p2110) target = $region60
        $region59: #{bottleneck_block.4} parent=31 // pred_region
          %s2114 = ssub.s32 32, 32
          %2115 = vsyncadd %s2056, %s2114
          %s2116 = sadd.s32 %s34, %s33
          %s2117 = smul.addr %s2116, 32
          %s2118 = scalar_lea.hbm %s6, %s2117
          %s2120 = sshll.u32 %s2059, 4
          %s2121 = int_to_ptr.vmem [resolvable:$true] %s2120
          %2123 = dma.vmem_to_hbm [thread:$0]  %s2121, 32, %s2118, %s2056
        $region60: #{bottleneck_block.4} parent=31 // pred_fallthru
          _
      $region32: #{bottleneck_block.4} parent=5 // pred_fallthru
        _
      %p2124 = scmp.le.s32.totalorder 2, %s24
      // Predicated region
      $region61: #{bottleneck_block.4} parent=5 // pred_check
        %p2125 = pneg %p2124
      $region62: #{bottleneck_block.4} parent=5 // pred_check_branch
        %2127 = sbr.rel (%p2125) target = $region64
      $region63: #{bottleneck_block.4} parent=5 // pred_region
        %s2128 = ssub.s32 %s24, 2
        // Predicated region
        $region65: #{bottleneck_block.4} parent=63 // pred_check
          %p2129 = pneg %p135
        $region66: #{bottleneck_block.4} parent=63 // pred_check_branch
          %2131 = sbr.rel (%p2129) target = $region68
        $region67: #{bottleneck_block.4} parent=63 // pred_region
          %s2132 = sand.u32 %s120, 1
          %s2133 = scalar_lea.sflag [#allocation4], %s2132
          %s2134 = sand.u32 %s120, 1
          %s2135 = smul.addr %s2134, 32
          %s2136 = scalar_lea.vmem [#allocation8], %s2135
          %2137 = dma.done %s2133, 512
        $region68: #{bottleneck_block.4} parent=63 // pred_fallthru
          _
        // Predicated region
        $region69: #{bottleneck_block.4} parent=63 // pred_check
          %p2138 = pneg %p163
        $region70: #{bottleneck_block.4} parent=63 // pred_check_branch
          %2140 = sbr.rel (%p2138) target = $region72
        $region71: #{bottleneck_block.4} parent=63 // pred_region
          %s2141 = sand.u32 %s30, 1
          %s2142 = scalar_lea.sflag [#allocation10], %s2141
          %s2143 = sand.u32 %s148, 1
          %s2144 = smul.addr %s2143, 2
          %s2145 = scalar_lea.vmem [#allocation9], %s2144
          %2146 = dma.done %s2142, 32
        $region72: #{bottleneck_block.4} parent=63 // pred_fallthru
          _
        // Predicated region
        $region73: #{bottleneck_block.4} parent=63 // pred_check
          %p2147 = pneg %p191
        $region74: #{bottleneck_block.4} parent=63 // pred_check_branch
          %2149 = sbr.rel (%p2147) target = $region76
        $region75: #{bottleneck_block.4} parent=63 // pred_region
          %s2150 = sand.u32 %s30, 1
          %s2151 = scalar_lea.sflag [#allocation10], %s2150
          %s2152 = sand.u32 %s176, 1
          %s2153 = smul.addr %s2152, 32
          %s2154 = scalar_lea.vmem [#allocation11], %s2153
          %2155 = dma.done %s2151, 512
        $region76: #{bottleneck_block.4} parent=63 // pred_fallthru
          _
        // Predicated region
        $region77: #{bottleneck_block.4} parent=63 // pred_check
          %p2156 = pneg %p219
        $region78: #{bottleneck_block.4} parent=63 // pred_check_branch
          %2158 = sbr.rel (%p2156) target = $region80
        $region79: #{bottleneck_block.4} parent=63 // pred_region
          %s2159 = sand.u32 %s204, 1
          %s2160 = scalar_lea.sflag [#allocation13], %s2159
          %s2161 = sand.u32 %s204, 1
          %s2162 = smul.addr %s2161, 2
          %s2163 = scalar_lea.vmem [#allocation12], %s2162
          %2164 = dma.done %s2160, 32
        $region80: #{bottleneck_block.4} parent=63 // pred_fallthru
          _
      $region64: #{bottleneck_block.4} parent=5 // pred_fallthru
        _
    $region6: #{bottleneck_block.4} parent=1 // loop_footer
      %s28 = sadd.s32 1, %s24
    $region7: #{bottleneck_block.4} parent=1 // loop_footer_branch
      %23 = sbr.rel target = $region3
    $region8: #{bottleneck_block.4} parent=1 // loop_exit
      _
    %2165 = vsyncpa [#allocation3], 1
    %s2166 = scalar_lea.sflag [#allocation3], 1
    %2167 = vsyncpa %s2166, 1
    %2168 = vsyncpa [#allocation6], 1
    %2169 = vsyncpa [#allocation4], 1
    %s2170 = scalar_lea.sflag [#allocation4], 1
    %2171 = vsyncpa %s2170, 1
    %2172 = vsyncpa [#allocation10], 1
    %s2173 = scalar_lea.sflag [#allocation10], 1
    %2174 = vsyncpa %s2173, 1
    %2175 = vsyncpa [#allocation13], 1
    %s2176 = scalar_lea.sflag [#allocation13], 1
    %2177 = vsyncpa %s2176, 1

// kernel: bottleneck_block.6
$region0: #{bottleneck_block.6}
  #allocation0 [shape = 'u32[]', space=smem, size = 0x4, offset = 0x4, fixed_abs, tag = 'smem constant byte address 0x4 - core index']
  #allocation1 [shape = 'u32[144,128]{1,0:T(1,128)}', space=vmem, size = 0x12000, scoped, tag = 'internal scratch']
  %s0 = inlined_call_operand.hbm [shape: bf16[2,1,10,10,128], index: 0, kind: input, shape index: {}]
  %s1 = inlined_call_operand.hbm [shape: bf16[1152,128], index: 1, kind: input, shape index: {}]
  %s2 = inlined_call_operand.hbm [shape: bf16[2,8,8,128], index: 2, kind: output, shape index: {0}]
  %s3 = inlined_call_operand.hbm [shape: f32[2,1,2,128], index: 3, kind: output, shape index: {1}]
  %4 = xla_tuple %s2, %s3
  %s5 = sld [smem:[#allocation0]]
  $region57: #{bottleneck_block.6} parent=0
    _
  %s7 = ssub.s32 1, %s5
  %s8 = scalar_select 0, %s7, %s5
  $region1: #{bottleneck_block.6} parent=0
    #allocation2 [shape = 'u8[40960]{0}', space=vmem, size = 0xa000, scoped, tag = 'input window, operand 0, single buffered']
    #allocation3 [shape = 's32[2]{0}', space=sflag, size = 0x8, scoped, tag = 'scoped memory for bottleneck_block.6']
    #allocation4 [shape = 's32[2]{0}', space=sflag, size = 0x8, scoped, tag = 'scoped memory for bottleneck_block.6']
    #allocation5 [shape = 'u8[294912]{0}', space=vmem, size = 0x48000, scoped, tag = 'input window, operand 1, single buffered']
    #allocation6 [shape = 's32[1]{0}', space=sflag, size = 0x4, scoped, tag = 'scoped memory for bottleneck_block.6']
    #allocation7 [shape = 'u8[32768]{0}', space=vmem, size = 0x8000, scoped, tag = 'output window, operand 0']
    #allocation8 [shape = 'u8[2048]{0}', space=vmem, size = 0x800, scoped, tag = 'output window, operand 1']
    #allocation9 [shape = 's32[2]{0}', space=sflag, size = 0x8, scoped, tag = 'scoped memory for bottleneck_block.6']
    %9 = vsyncpa [#allocation3], 0
    %10 = vsyncpa [#allocation6], 0
    %11 = vsyncpa [#allocation4], 0
    %s12 = scalar_lea.sflag [#allocation4], 1
    %13 = vsyncpa %s12, 0
    %14 = vsyncpa [#allocation9], 0
    %s15 = scalar_lea.sflag [#allocation9], 1
    %16 = vsyncpa %s15, 0
    loop: start=0, step=1, limit=4
    $region2: #{bottleneck_block.6} parent=1 // loop_pre_header
      _
    $region3: #{bottleneck_block.6} parent=1 // loop_header
      %s18 = sphi 0, %s22
      %p19 = scmp.ge.s32.totalorder %s18, 4
      %s25 = sphi 0, %s37
      %s26 = sphi 0, %s33
      %s27 = sphi 0, %s25
      %s28 = sphi 0, %s26
      %s29 = sphi 0, %s27
      %s30 = sphi 0, %s28
      %s40 = sphi 0, %s42
      %s43 = sphi 0, %s40
      %s44 = sphi 0, %s43
      %s60 = sphi 0, %s44
      %s64 = sphi 0, %s64
      %s66 = sphi 0, %s64
      %s67 = sphi 0, %s66
      %s81 = sphi 0, %s67
      %s89 = sphi 0, %s91
      %s92 = sphi 0, %s89
      %s93 = sphi 0, %s92
      %s109 = sphi 0, %s93
      %s117 = sphi 0, %s119
      %s120 = sphi 0, %s117
      %s121 = sphi 0, %s120
      %s137 = sphi 0, %s121
    $region4: #{bottleneck_block.6} parent=1 // loop_header_branch
      %21 = sbr.rel (%p19) target = $region8
    $region5: #{bottleneck_block.6} parent=1 // loop_body
      %s23 = ssub.s32 %s18, 1
      %s24 = ssub.s32 %s18, 2
      %s31 = sadd.s32 1, %s26
      %p32 = scmp.ge.s32.totalorder %s31, 1
      %s33 = scalar_select %p32, 0, %s31
      %s34 = sadd.s32 1, %s25
      %s35 = scalar_select %p32, %s34, %s25
      %p36 = scmp.ge.s32.totalorder %s35, 2
      %s37 = scalar_select %p36, 0, %s35
      %s38 = ssub.s32 %s25, %s37
      %p39 = scmp.eq.s32.totalorder %s38, 0
      %s41 = sadd.s32 %s40, 1
      %s42 = scalar_select %p39, %s40, %s41
      %p45 = pneg %p39
      %p46 = scmp.eq.s32.totalorder %s18, 1
      %p47 = por %p45, %p46
      %p48 = scmp.ne.s32.totalorder %s40, %s43
      %p49 = scmp.eq.s32.totalorder %s18, 0
      %p50 = por %p48, %p49
      %p51 = scmp.ne.s32.totalorder %s40, %s43
      %p52 = scmp.eq.s32.totalorder %s23, 1
      %p53 = por %p51, %p52
      %p54 = scmp.ne.s32.totalorder %s43, %s44
      %p55 = scmp.eq.s32.totalorder %s23, 0
      %p56 = por %p54, %p55
      %p57 = scmp.ne.s32.totalorder %s43, %s44
      %p58 = scmp.eq.s32.totalorder %s24, 1
      %p59 = por %p57, %p58
      %p61 = scmp.ne.s32.totalorder %s44, %s60
      %p62 = scmp.eq.s32.totalorder %s24, 0
      %p63 = por %p61, %p62
      %s65 = sadd.s32 %s64, 1
      %p68 = scmp.eq.s32.totalorder %s18, 1
      %p69 = scmp.ne.s32.totalorder %s64, %s66
      %p70 = scmp.eq.s32.totalorder %s18, 0
      %p71 = por %p69, %p70
      %p72 = scmp.ne.s32.totalorder %s64, %s66
      %p73 = scmp.eq.s32.totalorder %s23, 1
      %p74 = por %p72, %p73
      %p75 = scmp.ne.s32.totalorder %s66, %s67
      %p76 = scmp.eq.s32.totalorder %s23, 0
      %p77 = por %p75, %p76
      %p78 = scmp.ne.s32.totalorder %s66, %s67
      %p79 = scmp.eq.s32.totalorder %s24, 1
      %p80 = por %p78, %p79
      %p82 = scmp.ne.s32.totalorder %s67, %s81
      %p83 = scmp.eq.s32.totalorder %s24, 0
      %p84 = por %p82, %p83
      %s85 = ssub.s32 %s25, %s37
      %s86 = ssub.s32 %s26, %s33
      %s87 = sor.u32 %s85, %s86
      %p88 = scmp.eq.s32.totalorder %s87, 0
      %s90 = sadd.s32 %s89, 1
      %s91 = scalar_select %p88, %s89, %s90
      %p94 = pneg %p88
      %p95 = scmp.eq.s32.totalorder %s18, 1
      %p96 = por %p94, %p95
      %p97 = scmp.ne.s32.totalorder %s89, %s92
      %p98 = scmp.eq.s32.totalorder %s18, 0
      %p99 = por %p97, %p98
      %p100 = scmp.ne.s32.totalorder %s89, %s92
      %p101 = scmp.eq.s32.totalorder %s23, 1
      %p102 = por %p100, %p101
      %p103 = scmp.ne.s32.totalorder %s92, %s93
      %p104 = scmp.eq.s32.totalorder %s23, 0
      %p105 = por %p103, %p104
      %p106 = scmp.ne.s32.totalorder %s92, %s93
      %p107 = scmp.eq.s32.totalorder %s24, 1
      %p108 = por %p106, %p107
      %p110 = scmp.ne.s32.totalorder %s93, %s109
      %p111 = scmp.eq.s32.totalorder %s24, 0
      %p112 = por %p110, %p111
      %s113 = ssub.s32 %s25, %s37
      %s114 = ssub.s32 %s26, %s33
      %s115 = sor.u32 %s113, %s114
      %p116 = scmp.eq.s32.totalorder %s115, 0
      %s118 = sadd.s32 %s117, 1
      %s119 = scalar_select %p116, %s117, %s118
      %p122 = pneg %p116
      %p123 = scmp.eq.s32.totalorder %s18, 1
      %p124 = por %p122, %p123
      %p125 = scmp.ne.s32.totalorder %s117, %s120
      %p126 = scmp.eq.s32.totalorder %s18, 0
      %p127 = por %p125, %p126
      %p128 = scmp.ne.s32.totalorder %s117, %s120
      %p129 = scmp.eq.s32.totalorder %s23, 1
      %p130 = por %p128, %p129
      %p131 = scmp.ne.s32.totalorder %s120, %s121
      %p132 = scmp.eq.s32.totalorder %s23, 0
      %p133 = por %p131, %p132
      %p134 = scmp.ne.s32.totalorder %s120, %s121
      %p135 = scmp.eq.s32.totalorder %s24, 1
      %p136 = por %p134, %p135
      %p138 = scmp.ne.s32.totalorder %s121, %s137
      %p139 = scmp.eq.s32.totalorder %s24, 0
      %p140 = por %p138, %p139
      %p141 = scmp.le.s32.totalorder 1, %s18
      %p142 = scmp.lt.s32.totalorder %s18, 3
      %p143 = pnand %p141, %p142
      %p144 = pneg %p143
      // Predicated region
      $region9: #{bottleneck_block.6} parent=5 // pred_check
        _
      $region10: #{bottleneck_block.6} parent=5 // pred_check_branch
        %146 = sbr.rel (%p143) target = $region12
      $region11: #{bottleneck_block.6} parent=5 // pred_region
        %s147 = ssub.s32 %s18, 1
        // Predicated region
        $region13: #{bottleneck_block.6} parent=11 // pred_check
          %p148 = pneg %p56
        $region14: #{bottleneck_block.6} parent=11 // pred_check_branch
          %150 = sbr.rel (%p148) target = $region16
        $region15: #{bottleneck_block.6} parent=11 // pred_region
          %s152 = ssub.s32 1280, 1280
          %153 = vsyncadd [#allocation3], %s152
          %s154 = smul.addr %s27, 20
          %s155 = smul.addr %s154, 64
          %s156 = scalar_lea.hbm %s0, %s155
          %s157 = sshll.u32 [#allocation2], 4
          %s158 = int_to_ptr.vmem [resolvable:$true] %s157
          %163 = dma.hbm_to_vmem [thread:$0]  %s156, 1280, %s158, [#allocation3], 64, 64, 4
        $region16: #{bottleneck_block.6} parent=11 // pred_fallthru
          _
        // Predicated region
        $region17: #{bottleneck_block.6} parent=11 // pred_check
          %p164 = pneg %p77
        $region18: #{bottleneck_block.6} parent=11 // pred_check_branch
          %166 = sbr.rel (%p164) target = $region20
        $region19: #{bottleneck_block.6} parent=11 // pred_region
          %s168 = ssub.s32 9216, 9216
          %169 = vsyncadd [#allocation6], %s168
          %s170 = sshll.u32 [#allocation5], 4
          %s171 = int_to_ptr.vmem [resolvable:$true] %s170
          %176 = dma.hbm_to_vmem [thread:$0]  %s1, 9216, %s171, [#allocation6], 64, 64, 4
        $region20: #{bottleneck_block.6} parent=11 // pred_fallthru
          _
      $region12: #{bottleneck_block.6} parent=5 // pred_fallthru
        _
      %p177 = scmp.lt.s32.totalorder %s18, 2
      // Predicated region
      $region21: #{bottleneck_block.6} parent=5 // pred_check
        %p178 = pneg %p177
      $region22: #{bottleneck_block.6} parent=5 // pred_check_branch
        %180 = sbr.rel (%p178) target = $region24
      $region23: #{bottleneck_block.6} parent=5 // pred_region
        _
      $region24: #{bottleneck_block.6} parent=5 // pred_fallthru
        _
      %p181 = scmp.le.s32.totalorder 1, %s18
      %p182 = scmp.lt.s32.totalorder %s18, 3
      %p183 = pnand %p181, %p182
      %p184 = pneg %p183
      // Predicated region
      $region25: #{bottleneck_block.6} parent=5 // pred_check
        _
      $region26: #{bottleneck_block.6} parent=5 // pred_check_branch
        %186 = sbr.rel (%p183) target = $region28
      $region27: #{bottleneck_block.6} parent=5 // pred_region
        %s187 = ssub.s32 %s18, 1
        // Predicated region
        $region29: #{bottleneck_block.6} parent=27 // pred_check
          %p188 = pneg %p56
        $region30: #{bottleneck_block.6} parent=27 // pred_check_branch
          %190 = sbr.rel (%p188) target = $region32
        $region31: #{bottleneck_block.6} parent=27 // pred_region
          %191 = dma.done [#allocation3], 1280
        $region32: #{bottleneck_block.6} parent=27 // pred_fallthru
          _
        // Predicated region
        $region33: #{bottleneck_block.6} parent=27 // pred_check
          %p192 = pneg %p77
        $region34: #{bottleneck_block.6} parent=27 // pred_check_branch
          %194 = sbr.rel (%p192) target = $region36
        $region35: #{bottleneck_block.6} parent=27 // pred_region
          %195 = dma.done [#allocation6], 9216
        $region36: #{bottleneck_block.6} parent=27 // pred_fallthru
          _
        %p196 = pneg %p56
        %p197 = pneg %p53
        %p198 = pneg %p77
        %p199 = pneg %p74
        %p200 = pneg %p105
        %p201 = pneg %p102
        %s202 = sand.u32 %s92, 1
        %s203 = scalar_lea.sflag [#allocation4], %s202
        %s204 = sand.u32 %s92, 1
        %s205 = smul.addr %s204, 32
        %s206 = scalar_lea.vmem [#allocation7], %s205
        %p207 = pneg %p133
        %p208 = pneg %p130
        %s209 = sand.u32 %s120, 1
        %s210 = scalar_lea.sflag [#allocation9], %s209
        %s211 = sand.u32 %s120, 1
        %s212 = smul.addr %s211, 2
        %s213 = scalar_lea.vmem [#allocation8], %s212
        %s214 = smul.u32 8, %s28
        %s216 = smul.u32 %s28, 8
        %s217 = smul.u32 %s216, 2
        %s218 = smul.addr %s217, 4
        %s219 = scalar_lea.vmem [#allocation2], %s218
        %v220 = vld [vmem:[%s219] sm:$0xf]
        %v221 = vld [vmem:[%s219 + $0x8] sm:$0xf]
        %v222 = vld [vmem:[%s219 + $0x10] sm:$0xf]
        %v223 = vld [vmem:[%s219 + $0x18] sm:$0xf]
        %v224 = vld [vmem:[%s219 + $0x20] sm:$0xf]
        %v225 = vld [vmem:[%s219 + $0x28] sm:$0xf]
        %v226 = vld [vmem:[%s219 + $0x30] sm:$0xf]
        %v227 = vld [vmem:[%s219 + $0x38] sm:$0xf]
        %v228 = vld [vmem:[%s219 + $0x4] sm:$0x1]
        %v229 = vld [vmem:[%s219 + $0xc] sm:$0x1]
        %v230 = vld [vmem:[%s219 + $0x14] sm:$0x1]
        %v231 = vld [vmem:[%s219 + $0x1c] sm:$0x1]
        %v232 = vld [vmem:[%s219 + $0x24] sm:$0x1]
        %v233 = vld [vmem:[%s219 + $0x2c] sm:$0x1]
        %v234 = vld [vmem:[%s219 + $0x34] sm:$0x1]
        %v235 = vld [vmem:[%s219 + $0x3c] sm:$0x1]
        %v236 = vld [vmem:[%s219] sm:$0xe]
        %v237 = vld [vmem:[%s219 + $0x8] sm:$0xe]
        %v238 = vld [vmem:[%s219 + $0x10] sm:$0xe]
        %v239 = vld [vmem:[%s219 + $0x18] sm:$0xe]
        %v240 = vld [vmem:[%s219 + $0x20] sm:$0xe]
        %v241 = vld [vmem:[%s219 + $0x28] sm:$0xe]
        %v242 = vld [vmem:[%s219 + $0x30] sm:$0xe]
        %v243 = vld [vmem:[%s219 + $0x38] sm:$0xe]
        %s244 = sadd.s32 %s216, 1
        %s245 = smul.u32 %s244, 2
        %s246 = smul.addr %s245, 4
        %s247 = scalar_lea.vmem [#allocation2], %s246
        %v248 = vld [vmem:[%s247] sm:$0xf]
        %v249 = vld [vmem:[%s247 + $0x8] sm:$0xf]
        %v250 = vld [vmem:[%s247 + $0x10] sm:$0xf]
        %v251 = vld [vmem:[%s247 + $0x18] sm:$0xf]
        %v252 = vld [vmem:[%s247 + $0x20] sm:$0xf]
        %v253 = vld [vmem:[%s247 + $0x28] sm:$0xf]
        %v254 = vld [vmem:[%s247 + $0x30] sm:$0xf]
        %v255 = vld [vmem:[%s247 + $0x38] sm:$0xf]
        %v256 = vld [vmem:[%s247 + $0x4] sm:$0x1]
        %v257 = vld [vmem:[%s247 + $0xc] sm:$0x1]
        %v258 = vld [vmem:[%s247 + $0x14] sm:$0x1]
        %v259 = vld [vmem:[%s247 + $0x1c] sm:$0x1]
        %v260 = vld [vmem:[%s247 + $0x24] sm:$0x1]
        %v261 = vld [vmem:[%s247 + $0x2c] sm:$0x1]
        %v262 = vld [vmem:[%s247 + $0x34] sm:$0x1]
        %v263 = vld [vmem:[%s247 + $0x3c] sm:$0x1]
        %v264 = vld [vmem:[%s247] sm:$0xe]
        %v265 = vld [vmem:[%s247 + $0x8] sm:$0xe]
        %v266 = vld [vmem:[%s247 + $0x10] sm:$0xe]
        %v267 = vld [vmem:[%s247 + $0x18] sm:$0xe]
        %v268 = vld [vmem:[%s247 + $0x20] sm:$0xe]
        %v269 = vld [vmem:[%s247 + $0x28] sm:$0xe]
        %v270 = vld [vmem:[%s247 + $0x30] sm:$0xe]
        %v271 = vld [vmem:[%s247 + $0x38] sm:$0xe]
        %s272 = sadd.s32 %s216, 2
        %s273 = smul.u32 %s272, 2
        %s274 = smul.addr %s273, 4
        %s275 = scalar_lea.vmem [#allocation2], %s274
        %v276 = vld [vmem:[%s275] sm:$0xf]
        %v277 = vld [vmem:[%s275 + $0x8] sm:$0xf]
        %v278 = vld [vmem:[%s275 + $0x10] sm:$0xf]
        %v279 = vld [vmem:[%s275 + $0x18] sm:$0xf]
        %v280 = vld [vmem:[%s275 + $0x20] sm:$0xf]
        %v281 = vld [vmem:[%s275 + $0x28] sm:$0xf]
        %v282 = vld [vmem:[%s275 + $0x30] sm:$0xf]
        %v283 = vld [vmem:[%s275 + $0x38] sm:$0xf]
        %v284 = vld [vmem:[%s275 + $0x4] sm:$0x1]
        %v285 = vld [vmem:[%s275 + $0xc] sm:$0x1]
        %v286 = vld [vmem:[%s275 + $0x14] sm:$0x1]
        %v287 = vld [vmem:[%s275 + $0x1c] sm:$0x1]
        %v288 = vld [vmem:[%s275 + $0x24] sm:$0x1]
        %v289 = vld [vmem:[%s275 + $0x2c] sm:$0x1]
        %v290 = vld [vmem:[%s275 + $0x34] sm:$0x1]
        %v291 = vld [vmem:[%s275 + $0x3c] sm:$0x1]
        %v292 = vld [vmem:[%s275] sm:$0xe]
        %v293 = vld [vmem:[%s275 + $0x8] sm:$0xe]
        %v294 = vld [vmem:[%s275 + $0x10] sm:$0xe]
        %v295 = vld [vmem:[%s275 + $0x18] sm:$0xe]
        %v296 = vld [vmem:[%s275 + $0x20] sm:$0xe]
        %v297 = vld [vmem:[%s275 + $0x28] sm:$0xe]
        %v298 = vld [vmem:[%s275 + $0x30] sm:$0xe]
        %v299 = vld [vmem:[%s275 + $0x38] sm:$0xe]
        %v316 = vunpack.c.l.b16 %v220
        %v317 = vunpack.c.l.b16 %v228
        %v318 = vunpack.c.l.b16 %v221
        %v319 = vunpack.c.l.b16 %v229
        %v320 = vunpack.c.l.b16 %v222
        %v321 = vunpack.c.l.b16 %v230
        %v322 = vunpack.c.l.b16 %v223
        %v323 = vunpack.c.l.b16 %v231
        %v324 = vunpack.c.l.b16 %v224
        %v325 = vunpack.c.l.b16 %v232
        %v326 = vunpack.c.l.b16 %v225
        %v327 = vunpack.c.l.b16 %v233
        %v328 = vunpack.c.l.b16 %v226
        %v329 = vunpack.c.l.b16 %v234
        %v330 = vunpack.c.l.b16 %v227
        %v331 = vunpack.c.l.b16 %v235
        %v332 = vpack.c.b16 %v317, %v316
        %v333 = vpack.c.b16 %v319, %v318
        %v334 = vpack.c.b16 %v321, %v320
        %v335 = vpack.c.b16 %v323, %v322
        %v336 = vpack.c.b16 %v325, %v324
        %v337 = vpack.c.b16 %v327, %v326
        %v338 = vpack.c.b16 %v329, %v328
        %v339 = vpack.c.b16 %v331, %v330
        %v341 = vshrl.u32 %v332, 16
        %v343 = vshll.u32 %v332, 16
        %v345 = vrot.slane %v343, 1
        %v346 = vor.u32 %v341, %v345
        %v348 = vshrl.u32 %v333, 16
        %v350 = vshll.u32 %v333, 16
        %v352 = vrot.slane %v350, 1
        %v353 = vor.u32 %v348, %v352
        %v355 = vshrl.u32 %v334, 16
        %v357 = vshll.u32 %v334, 16
        %v359 = vrot.slane %v357, 1
        %v360 = vor.u32 %v355, %v359
        %v362 = vshrl.u32 %v335, 16
        %v364 = vshll.u32 %v335, 16
        %v366 = vrot.slane %v364, 1
        %v367 = vor.u32 %v362, %v366
        %v369 = vshrl.u32 %v336, 16
        %v371 = vshll.u32 %v336, 16
        %v373 = vrot.slane %v371, 1
        %v374 = vor.u32 %v369, %v373
        %v376 = vshrl.u32 %v337, 16
        %v378 = vshll.u32 %v337, 16
        %v380 = vrot.slane %v378, 1
        %v381 = vor.u32 %v376, %v380
        %v383 = vshrl.u32 %v338, 16
        %v385 = vshll.u32 %v338, 16
        %v387 = vrot.slane %v385, 1
        %v388 = vor.u32 %v383, %v387
        %v390 = vshrl.u32 %v339, 16
        %v392 = vshll.u32 %v339, 16
        %v394 = vrot.slane %v392, 1
        %v395 = vor.u32 %v390, %v394
        %v404 = vunpack.c.l.b16 %v236
        %v405 = vunpack.c.l.b16 %v237
        %v406 = vunpack.c.l.b16 %v238
        %v407 = vunpack.c.l.b16 %v239
        %v408 = vunpack.c.l.b16 %v240
        %v409 = vunpack.c.l.b16 %v241
        %v410 = vunpack.c.l.b16 %v242
        %v411 = vunpack.c.l.b16 %v243
        %v412 = vpack.c.b16 %v317, %v404
        %v413 = vpack.c.b16 %v319, %v405
        %v414 = vpack.c.b16 %v321, %v406
        %v415 = vpack.c.b16 %v323, %v407
        %v416 = vpack.c.b16 %v325, %v408
        %v417 = vpack.c.b16 %v327, %v409
        %v418 = vpack.c.b16 %v329, %v410
        %v419 = vpack.c.b16 %v331, %v411
        %v420 = vrot.slane %v412, 1
        %v421 = vrot.slane %v413, 1
        %v422 = vrot.slane %v414, 1
        %v423 = vrot.slane %v415, 1
        %v424 = vrot.slane %v416, 1
        %v425 = vrot.slane %v417, 1
        %v426 = vrot.slane %v418, 1
        %v427 = vrot.slane %v419, 1
        %v444 = vunpack.c.l.b16 %v248
        %v445 = vunpack.c.l.b16 %v256
        %v446 = vunpack.c.l.b16 %v249
        %v447 = vunpack.c.l.b16 %v257
        %v448 = vunpack.c.l.b16 %v250
        %v449 = vunpack.c.l.b16 %v258
        %v450 = vunpack.c.l.b16 %v251
        %v451 = vunpack.c.l.b16 %v259
        %v452 = vunpack.c.l.b16 %v252
        %v453 = vunpack.c.l.b16 %v260
        %v454 = vunpack.c.l.b16 %v253
        %v455 = vunpack.c.l.b16 %v261
        %v456 = vunpack.c.l.b16 %v254
        %v457 = vunpack.c.l.b16 %v262
        %v458 = vunpack.c.l.b16 %v255
        %v459 = vunpack.c.l.b16 %v263
        %v460 = vpack.c.b16 %v445, %v444
        %v461 = vpack.c.b16 %v447, %v446
        %v462 = vpack.c.b16 %v449, %v448
        %v463 = vpack.c.b16 %v451, %v450
        %v464 = vpack.c.b16 %v453, %v452
        %v465 = vpack.c.b16 %v455, %v454
        %v466 = vpack.c.b16 %v457, %v456
        %v467 = vpack.c.b16 %v459, %v458
        %v469 = vshrl.u32 %v460, 16
        %v471 = vshll.u32 %v460, 16
        %v473 = vrot.slane %v471, 1
        %v474 = vor.u32 %v469, %v473
        %v476 = vshrl.u32 %v461, 16
        %v478 = vshll.u32 %v461, 16
        %v480 = vrot.slane %v478, 1
        %v481 = vor.u32 %v476, %v480
        %v483 = vshrl.u32 %v462, 16
        %v485 = vshll.u32 %v462, 16
        %v487 = vrot.slane %v485, 1
        %v488 = vor.u32 %v483, %v487
        %v490 = vshrl.u32 %v463, 16
        %v492 = vshll.u32 %v463, 16
        %v494 = vrot.slane %v492, 1
        %v495 = vor.u32 %v490, %v494
        %v497 = vshrl.u32 %v464, 16
        %v499 = vshll.u32 %v464, 16
        %v501 = vrot.slane %v499, 1
        %v502 = vor.u32 %v497, %v501
        %v504 = vshrl.u32 %v465, 16
        %v506 = vshll.u32 %v465, 16
        %v508 = vrot.slane %v506, 1
        %v509 = vor.u32 %v504, %v508
        %v511 = vshrl.u32 %v466, 16
        %v513 = vshll.u32 %v466, 16
        %v515 = vrot.slane %v513, 1
        %v516 = vor.u32 %v511, %v515
        %v518 = vshrl.u32 %v467, 16
        %v520 = vshll.u32 %v467, 16
        %v522 = vrot.slane %v520, 1
        %v523 = vor.u32 %v518, %v522
        %v532 = vunpack.c.l.b16 %v264
        %v533 = vunpack.c.l.b16 %v265
        %v534 = vunpack.c.l.b16 %v266
        %v535 = vunpack.c.l.b16 %v267
        %v536 = vunpack.c.l.b16 %v268
        %v537 = vunpack.c.l.b16 %v269
        %v538 = vunpack.c.l.b16 %v270
        %v539 = vunpack.c.l.b16 %v271
        %v540 = vpack.c.b16 %v445, %v532
        %v541 = vpack.c.b16 %v447, %v533
        %v542 = vpack.c.b16 %v449, %v534
        %v543 = vpack.c.b16 %v451, %v535
        %v544 = vpack.c.b16 %v453, %v536
        %v545 = vpack.c.b16 %v455, %v537
        %v546 = vpack.c.b16 %v457, %v538
        %v547 = vpack.c.b16 %v459, %v539
        %v548 = vrot.slane %v540, 1
        %v549 = vrot.slane %v541, 1
        %v550 = vrot.slane %v542, 1
        %v551 = vrot.slane %v543, 1
        %v552 = vrot.slane %v544, 1
        %v553 = vrot.slane %v545, 1
        %v554 = vrot.slane %v546, 1
        %v555 = vrot.slane %v547, 1
        %v572 = vunpack.c.l.b16 %v276
        %v573 = vunpack.c.l.b16 %v284
        %v574 = vunpack.c.l.b16 %v277
        %v575 = vunpack.c.l.b16 %v285
        %v576 = vunpack.c.l.b16 %v278
        %v577 = vunpack.c.l.b16 %v286
        %v578 = vunpack.c.l.b16 %v279
        %v579 = vunpack.c.l.b16 %v287
        %v580 = vunpack.c.l.b16 %v280
        %v581 = vunpack.c.l.b16 %v288
        %v582 = vunpack.c.l.b16 %v281
        %v583 = vunpack.c.l.b16 %v289
        %v584 = vunpack.c.l.b16 %v282
        %v585 = vunpack.c.l.b16 %v290
        %v586 = vunpack.c.l.b16 %v283
        %v587 = vunpack.c.l.b16 %v291
        %v588 = vpack.c.b16 %v573, %v572
        %v589 = vpack.c.b16 %v575, %v574
        %v590 = vpack.c.b16 %v577, %v576
        %v591 = vpack.c.b16 %v579, %v578
        %v592 = vpack.c.b16 %v581, %v580
        %v593 = vpack.c.b16 %v583, %v582
        %v594 = vpack.c.b16 %v585, %v584
        %v595 = vpack.c.b16 %v587, %v586
        %v597 = vshrl.u32 %v588, 16
        %v599 = vshll.u32 %v588, 16
        %v601 = vrot.slane %v599, 1
        %v602 = vor.u32 %v597, %v601
        %v604 = vshrl.u32 %v589, 16
        %v606 = vshll.u32 %v589, 16
        %v608 = vrot.slane %v606, 1
        %v609 = vor.u32 %v604, %v608
        %v611 = vshrl.u32 %v590, 16
        %v613 = vshll.u32 %v590, 16
        %v615 = vrot.slane %v613, 1
        %v616 = vor.u32 %v611, %v615
        %v618 = vshrl.u32 %v591, 16
        %v620 = vshll.u32 %v591, 16
        %v622 = vrot.slane %v620, 1
        %v623 = vor.u32 %v618, %v622
        %v625 = vshrl.u32 %v592, 16
        %v627 = vshll.u32 %v592, 16
        %v629 = vrot.slane %v627, 1
        %v630 = vor.u32 %v625, %v629
        %v632 = vshrl.u32 %v593, 16
        %v634 = vshll.u32 %v593, 16
        %v636 = vrot.slane %v634, 1
        %v637 = vor.u32 %v632, %v636
        %v639 = vshrl.u32 %v594, 16
        %v641 = vshll.u32 %v594, 16
        %v643 = vrot.slane %v641, 1
        %v644 = vor.u32 %v639, %v643
        %v646 = vshrl.u32 %v595, 16
        %v648 = vshll.u32 %v595, 16
        %v650 = vrot.slane %v648, 1
        %v651 = vor.u32 %v646, %v650
        %v660 = vunpack.c.l.b16 %v292
        %v661 = vunpack.c.l.b16 %v293
        %v662 = vunpack.c.l.b16 %v294
        %v663 = vunpack.c.l.b16 %v295
        %v664 = vunpack.c.l.b16 %v296
        %v665 = vunpack.c.l.b16 %v297
        %v666 = vunpack.c.l.b16 %v298
        %v667 = vunpack.c.l.b16 %v299
        %v668 = vpack.c.b16 %v573, %v660
        %v669 = vpack.c.b16 %v575, %v661
        %v670 = vpack.c.b16 %v577, %v662
        %v671 = vpack.c.b16 %v579, %v663
        %v672 = vpack.c.b16 %v581, %v664
        %v673 = vpack.c.b16 %v583, %v665
        %v674 = vpack.c.b16 %v585, %v666
        %v675 = vpack.c.b16 %v587, %v667
        %v676 = vrot.slane %v668, 1
        %v677 = vrot.slane %v669, 1
        %v678 = vrot.slane %v670, 1
        %v679 = vrot.slane %v671, 1
        %v680 = vrot.slane %v672, 1
        %v681 = vrot.slane %v673, 1
        %v682 = vrot.slane %v674, 1
        %v683 = vrot.slane %v675, 1
        %v684 = vunpack.c.l.b16 %v346
        %v685 = vunpack.c.l.b16 %v420
        %v686 = vunpack.c.l.b16 %v474
        %v687 = vunpack.c.l.b16 %v548
        %v688 = vunpack.c.l.b16 %v602
        %v689 = vunpack.c.l.b16 %v676
        %v690 = vunpack.c.l.b16 %v353
        %v691 = vunpack.c.l.b16 %v421
        %v692 = vunpack.c.l.b16 %v481
        %v693 = vunpack.c.l.b16 %v549
        %v694 = vunpack.c.l.b16 %v609
        %v695 = vunpack.c.l.b16 %v677
        %v696 = vunpack.c.l.b16 %v360
        %v697 = vunpack.c.l.b16 %v422
        %v698 = vunpack.c.l.b16 %v488
        %v699 = vunpack.c.l.b16 %v550
        %v700 = vunpack.c.l.b16 %v616
        %v701 = vunpack.c.l.b16 %v678
        %v702 = vunpack.c.l.b16 %v367
        %v703 = vunpack.c.l.b16 %v423
        %v704 = vunpack.c.l.b16 %v495
        %v705 = vunpack.c.l.b16 %v551
        %v706 = vunpack.c.l.b16 %v623
        %v707 = vunpack.c.l.b16 %v679
        %v708 = vunpack.c.l.b16 %v374
        %v709 = vunpack.c.l.b16 %v424
        %v710 = vunpack.c.l.b16 %v502
        %v711 = vunpack.c.l.b16 %v552
        %v712 = vunpack.c.l.b16 %v630
        %v713 = vunpack.c.l.b16 %v680
        %v714 = vunpack.c.l.b16 %v381
        %v715 = vunpack.c.l.b16 %v425
        %v716 = vunpack.c.l.b16 %v509
        %v717 = vunpack.c.l.b16 %v553
        %v718 = vunpack.c.l.b16 %v637
        %v719 = vunpack.c.l.b16 %v681
        %v720 = vunpack.c.l.b16 %v388
        %v721 = vunpack.c.l.b16 %v426
        %v722 = vunpack.c.l.b16 %v516
        %v723 = vunpack.c.l.b16 %v554
        %v724 = vunpack.c.l.b16 %v644
        %v725 = vunpack.c.l.b16 %v682
        %v726 = vunpack.c.l.b16 %v395
        %v727 = vunpack.c.l.b16 %v427
        %v728 = vunpack.c.l.b16 %v523
        %v729 = vunpack.c.l.b16 %v555
        %v730 = vunpack.c.l.b16 %v651
        %v731 = vunpack.c.l.b16 %v683
        %v732 = vld [vmem:[#allocation5] sm:$0xf]
        %v733 = vld [vmem:[#allocation5 + $0x4] sm:$0xf]
        %v734 = vld [vmem:[#allocation5 + $0x8] sm:$0xf]
        %v735 = vld [vmem:[#allocation5 + $0xc] sm:$0xf]
        %v736 = vld [vmem:[#allocation5 + $0x10] sm:$0xf]
        %v737 = vld [vmem:[#allocation5 + $0x14] sm:$0xf]
        %v738 = vld [vmem:[#allocation5 + $0x18] sm:$0xf]
        %v739 = vld [vmem:[#allocation5 + $0x1c] sm:$0xf]
        %v740 = vld [vmem:[#allocation5 + $0x20] sm:$0xf]
        %v741 = vld [vmem:[#allocation5 + $0x24] sm:$0xf]
        %v742 = vld [vmem:[#allocation5 + $0x28] sm:$0xf]
        %v743 = vld [vmem:[#allocation5 + $0x2c] sm:$0xf]
        %v744 = vld [vmem:[#allocation5 + $0x30] sm:$0xf]
        %v745 = vld [vmem:[#allocation5 + $0x34] sm:$0xf]
        %v746 = vld [vmem:[#allocation5 + $0x38] sm:$0xf]
        %v747 = vld [vmem:[#allocation5 + $0x3c] sm:$0xf]
        %v748 = vld [vmem:[#allocation5 + $0x40] sm:$0xf]
        %v749 = vld [vmem:[#allocation5 + $0x44] sm:$0xf]
        %v750 = vld [vmem:[#allocation5 + $0x48] sm:$0xf]
        %v751 = vld [vmem:[#allocation5 + $0x4c] sm:$0xf]
        %v752 = vld [vmem:[#allocation5 + $0x50] sm:$0xf]
        %v753 = vld [vmem:[#allocation5 + $0x54] sm:$0xf]
        %v754 = vld [vmem:[#allocation5 + $0x58] sm:$0xf]
        %v755 = vld [vmem:[#allocation5 + $0x5c] sm:$0xf]
        %v756 = vld [vmem:[#allocation5 + $0x60] sm:$0xf]
        %v757 = vld [vmem:[#allocation5 + $0x64] sm:$0xf]
        %v758 = vld [vmem:[#allocation5 + $0x68] sm:$0xf]
        %v759 = vld [vmem:[#allocation5 + $0x6c] sm:$0xf]
        %v760 = vld [vmem:[#allocation5 + $0x70] sm:$0xf]
        %v761 = vld [vmem:[#allocation5 + $0x74] sm:$0xf]
        %v762 = vld [vmem:[#allocation5 + $0x78] sm:$0xf]
        %v763 = vld [vmem:[#allocation5 + $0x7c] sm:$0xf]
        %v764 = vld [vmem:[#allocation5 + $0x80] sm:$0xf]
        %v765 = vld [vmem:[#allocation5 + $0x84] sm:$0xf]
        %v766 = vld [vmem:[#allocation5 + $0x88] sm:$0xf]
        %v767 = vld [vmem:[#allocation5 + $0x8c] sm:$0xf]
        %v768 = vld [vmem:[#allocation5 + $0x90] sm:$0xf]
        %v769 = vld [vmem:[#allocation5 + $0x94] sm:$0xf]
        %v770 = vld [vmem:[#allocation5 + $0x98] sm:$0xf]
        %v771 = vld [vmem:[#allocation5 + $0x9c] sm:$0xf]
        %v772 = vld [vmem:[#allocation5 + $0xa0] sm:$0xf]
        %v773 = vld [vmem:[#allocation5 + $0xa4] sm:$0xf]
        %v774 = vld [vmem:[#allocation5 + $0xa8] sm:$0xf]
        %v775 = vld [vmem:[#allocation5 + $0xac] sm:$0xf]
        %v776 = vld [vmem:[#allocation5 + $0xb0] sm:$0xf]
        %v777 = vld [vmem:[#allocation5 + $0xb4] sm:$0xf]
        %v778 = vld [vmem:[#allocation5 + $0xb8] sm:$0xf]
        %v779 = vld [vmem:[#allocation5 + $0xbc] sm:$0xf]
        %v780 = vld [vmem:[#allocation5 + $0xc0] sm:$0xf]
        %v781 = vld [vmem:[#allocation5 + $0xc4] sm:$0xf]
        %v782 = vld [vmem:[#allocation5 + $0xc8] sm:$0xf]
        %v783 = vld [vmem:[#allocation5 + $0xcc] sm:$0xf]
        %v784 = vld [vmem:[#allocation5 + $0xd0] sm:$0xf]
        %v785 = vld [vmem:[#allocation5 + $0xd4] sm:$0xf]
        %v786 = vld [vmem:[#allocation5 + $0xd8] sm:$0xf]
        %v787 = vld [vmem:[#allocation5 + $0xdc] sm:$0xf]
        %v788 = vld [vmem:[#allocation5 + $0xe0] sm:$0xf]
        %v789 = vld [vmem:[#allocation5 + $0xe4] sm:$0xf]
        %v790 = vld [vmem:[#allocation5 + $0xe8] sm:$0xf]
        %v791 = vld [vmem:[#allocation5 + $0xec] sm:$0xf]
        %v792 = vld [vmem:[#allocation5 + $0xf0] sm:$0xf]
        %v793 = vld [vmem:[#allocation5 + $0xf4] sm:$0xf]
        %v794 = vld [vmem:[#allocation5 + $0xf8] sm:$0xf]
        %v795 = vld [vmem:[#allocation5 + $0xfc] sm:$0xf]
        %v796 = vld [vmem:[#allocation5 + $0x100] sm:$0xf]
        %v797 = vld [vmem:[#allocation5 + $0x104] sm:$0xf]
        %v798 = vld [vmem:[#allocation5 + $0x108] sm:$0xf]
        %v799 = vld [vmem:[#allocation5 + $0x10c] sm:$0xf]
        %v800 = vld [vmem:[#allocation5 + $0x110] sm:$0xf]
        %v801 = vld [vmem:[#allocation5 + $0x114] sm:$0xf]
        %v802 = vld [vmem:[#allocation5 + $0x118] sm:$0xf]
        %v803 = vld [vmem:[#allocation5 + $0x11c] sm:$0xf]
        %v804 = vld [vmem:[#allocation5 + $0x120] sm:$0xf]
        %v805 = vld [vmem:[#allocation5 + $0x124] sm:$0xf]
        %v806 = vld [vmem:[#allocation5 + $0x128] sm:$0xf]
        %v807 = vld [vmem:[#allocation5 + $0x12c] sm:$0xf]
        %v808 = vld [vmem:[#allocation5 + $0x130] sm:$0xf]
        %v809 = vld [vmem:[#allocation5 + $0x134] sm:$0xf]
        %v810 = vld [vmem:[#allocation5 + $0x138] sm:$0xf]
        %v811 = vld [vmem:[#allocation5 + $0x13c] sm:$0xf]
        %v812 = vld [vmem:[#allocation5 + $0x140] sm:$0xf]
        %v813 = vld [vmem:[#allocation5 + $0x144] sm:$0xf]
        %v814 = vld [vmem:[#allocation5 + $0x148] sm:$0xf]
        %v815 = vld [vmem:[#allocation5 + $0x14c] sm:$0xf]
        %v816 = vld [vmem:[#allocation5 + $0x150] sm:$0xf]
        %v817 = vld [vmem:[#allocation5 + $0x154] sm:$0xf]
        %v818 = vld [vmem:[#allocation5 + $0x158] sm:$0xf]
        %v819 = vld [vmem:[#allocation5 + $0x15c] sm:$0xf]
        %v820 = vld [vmem:[#allocation5 + $0x160] sm:$0xf]
        %v821 = vld [vmem:[#allocation5 + $0x164] sm:$0xf]
        %v822 = vld [vmem:[#allocation5 + $0x168] sm:$0xf]
        %v823 = vld [vmem:[#allocation5 + $0x16c] sm:$0xf]
        %v824 = vld [vmem:[#allocation5 + $0x170] sm:$0xf]
        %v825 = vld [vmem:[#allocation5 + $0x174] sm:$0xf]
        %v826 = vld [vmem:[#allocation5 + $0x178] sm:$0xf]
        %v827 = vld [vmem:[#allocation5 + $0x17c] sm:$0xf]
        %v828 = vld [vmem:[#allocation5 + $0x180] sm:$0xf]
        %v829 = vld [vmem:[#allocation5 + $0x184] sm:$0xf]
        %v830 = vld [vmem:[#allocation5 + $0x188] sm:$0xf]
        %v831 = vld [vmem:[#allocation5 + $0x18c] sm:$0xf]
        %v832 = vld [vmem:[#allocation5 + $0x190] sm:$0xf]
        %v833 = vld [vmem:[#allocation5 + $0x194] sm:$0xf]
        %v834 = vld [vmem:[#allocation5 + $0x198] sm:$0xf]
        %v835 = vld [vmem:[#allocation5 + $0x19c] sm:$0xf]
        %v836 = vld [vmem:[#allocation5 + $0x1a0] sm:$0xf]
        %v837 = vld [vmem:[#allocation5 + $0x1a4] sm:$0xf]
        %v838 = vld [vmem:[#allocation5 + $0x1a8] sm:$0xf]
        %v839 = vld [vmem:[#allocation5 + $0x1ac] sm:$0xf]
        %v840 = vld [vmem:[#allocation5 + $0x1b0] sm:$0xf]
        %v841 = vld [vmem:[#allocation5 + $0x1b4] sm:$0xf]
        %v842 = vld [vmem:[#allocation5 + $0x1b8] sm:$0xf]
        %v843 = vld [vmem:[#allocation5 + $0x1bc] sm:$0xf]
        %v844 = vld [vmem:[#allocation5 + $0x1c0] sm:$0xf]
        %v845 = vld [vmem:[#allocation5 + $0x1c4] sm:$0xf]
        %v846 = vld [vmem:[#allocation5 + $0x1c8] sm:$0xf]
        %v847 = vld [vmem:[#allocation5 + $0x1cc] sm:$0xf]
        %v848 = vld [vmem:[#allocation5 + $0x1d0] sm:$0xf]
        %v849 = vld [vmem:[#allocation5 + $0x1d4] sm:$0xf]
        %v850 = vld [vmem:[#allocation5 + $0x1d8] sm:$0xf]
        %v851 = vld [vmem:[#allocation5 + $0x1dc] sm:$0xf]
        %v852 = vld [vmem:[#allocation5 + $0x1e0] sm:$0xf]
        %v853 = vld [vmem:[#allocation5 + $0x1e4] sm:$0xf]
        %v854 = vld [vmem:[#allocation5 + $0x1e8] sm:$0xf]
        %v855 = vld [vmem:[#allocation5 + $0x1ec] sm:$0xf]
        %v856 = vld [vmem:[#allocation5 + $0x1f0] sm:$0xf]
        %v857 = vld [vmem:[#allocation5 + $0x1f4] sm:$0xf]
        %v858 = vld [vmem:[#allocation5 + $0x1f8] sm:$0xf]
        %v859 = vld [vmem:[#allocation5 + $0x1fc] sm:$0xf]
        %v860 = vld [vmem:[#allocation5 + $0x200] sm:$0xf]
        %v861 = vld [vmem:[#allocation5 + $0x204] sm:$0xf]
        %v862 = vld [vmem:[#allocation5 + $0x208] sm:$0xf]
        %v863 = vld [vmem:[#allocation5 + $0x20c] sm:$0xf]
        %v864 = vld [vmem:[#allocation5 + $0x210] sm:$0xf]
        %v865 = vld [vmem:[#allocation5 + $0x214] sm:$0xf]
        %v866 = vld [vmem:[#allocation5 + $0x218] sm:$0xf]
        %v867 = vld [vmem:[#allocation5 + $0x21c] sm:$0xf]
        %v868 = vld [vmem:[#allocation5 + $0x220] sm:$0xf]
        %v869 = vld [vmem:[#allocation5 + $0x224] sm:$0xf]
        %v870 = vld [vmem:[#allocation5 + $0x228] sm:$0xf]
        %v871 = vld [vmem:[#allocation5 + $0x22c] sm:$0xf]
        %v872 = vld [vmem:[#allocation5 + $0x230] sm:$0xf]
        %v873 = vld [vmem:[#allocation5 + $0x234] sm:$0xf]
        %v874 = vld [vmem:[#allocation5 + $0x238] sm:$0xf]
        %v875 = vld [vmem:[#allocation5 + $0x23c] sm:$0xf]
        %v876 = vpack.c.b16 %v318, %v316
        %v877 = vpack.c.b16 %v690, %v684
        %v878 = vpack.c.b16 %v691, %v685
        %v879 = vpack.c.b16 %v446, %v444
        %v880 = vpack.c.b16 %v692, %v686
        %v881 = vpack.c.b16 %v693, %v687
        %v882 = vpack.c.b16 %v574, %v572
        %v883 = vpack.c.b16 %v694, %v688
        %v884 = vpack.c.b16 %v695, %v689
        %v885 = vpack.c.b16 %v322, %v320
        %v886 = vpack.c.b16 %v702, %v696
        %v887 = vpack.c.b16 %v703, %v697
        %v888 = vpack.c.b16 %v450, %v448
        %v889 = vpack.c.b16 %v704, %v698
        %v890 = vpack.c.b16 %v705, %v699
        %v891 = vpack.c.b16 %v578, %v576
        %v892 = vpack.c.b16 %v706, %v700
        %v893 = vpack.c.b16 %v707, %v701
        %v894 = vpack.c.b16 %v326, %v324
        %v895 = vpack.c.b16 %v714, %v708
        %v896 = vpack.c.b16 %v715, %v709
        %v897 = vpack.c.b16 %v454, %v452
        %v898 = vpack.c.b16 %v716, %v710
        %v899 = vpack.c.b16 %v717, %v711
        %v900 = vpack.c.b16 %v582, %v580
        %v901 = vpack.c.b16 %v718, %v712
        %v902 = vpack.c.b16 %v719, %v713
        %v903 = vpack.c.b16 %v330, %v328
        %v904 = vpack.c.b16 %v726, %v720
        %v905 = vpack.c.b16 %v727, %v721
        %v906 = vpack.c.b16 %v458, %v456
        %v907 = vpack.c.b16 %v728, %v722
        %v908 = vpack.c.b16 %v729, %v723
        %v909 = vpack.c.b16 %v586, %v584
        %v910 = vpack.c.b16 %v730, %v724
        %v911 = vpack.c.b16 %v731, %v725
        %v1092 = vunpack.c.l.b16 %v732
        %v1093 = vunpack.c.l.b16 %v733
        %v1094 = vunpack.c.l.b16 %v734
        %v1095 = vunpack.c.l.b16 %v735
        %v1096 = vunpack.c.l.b16 %v736
        %v1097 = vunpack.c.l.b16 %v737
        %v1098 = vunpack.c.l.b16 %v738
        %v1099 = vunpack.c.l.b16 %v739
        %v1100 = vunpack.c.l.b16 %v740
        %v1101 = vunpack.c.l.b16 %v741
        %v1102 = vunpack.c.l.b16 %v742
        %v1103 = vunpack.c.l.b16 %v743
        %v1104 = vunpack.c.l.b16 %v744
        %v1105 = vunpack.c.l.b16 %v745
        %v1106 = vunpack.c.l.b16 %v746
        %v1107 = vunpack.c.l.b16 %v747
        %v1108 = vunpack.c.l.b16 %v748
        %v1109 = vunpack.c.l.b16 %v749
        %v1110 = vunpack.c.l.b16 %v750
        %v1111 = vunpack.c.l.b16 %v751
        %v1112 = vunpack.c.l.b16 %v752
        %v1113 = vunpack.c.l.b16 %v753
        %v1114 = vunpack.c.l.b16 %v754
        %v1115 = vunpack.c.l.b16 %v755
        %v1116 = vunpack.c.l.b16 %v756
        %v1117 = vunpack.c.l.b16 %v757
        %v1118 = vunpack.c.l.b16 %v758
        %v1119 = vunpack.c.l.b16 %v759
        %v1120 = vunpack.c.l.b16 %v760
        %v1121 = vunpack.c.l.b16 %v761
        %v1122 = vunpack.c.l.b16 %v762
        %v1123 = vunpack.c.l.b16 %v763
        %v1124 = vunpack.c.l.b16 %v764
        %v1125 = vunpack.c.l.b16 %v765
        %v1126 = vunpack.c.l.b16 %v766
        %v1127 = vunpack.c.l.b16 %v767
        %v1128 = vunpack.c.l.b16 %v768
        %v1129 = vunpack.c.l.b16 %v769
        %v1130 = vunpack.c.l.b16 %v770
        %v1131 = vunpack.c.l.b16 %v771
        %v1132 = vunpack.c.l.b16 %v772
        %v1133 = vunpack.c.l.b16 %v773
        %v1134 = vunpack.c.l.b16 %v774
        %v1135 = vunpack.c.l.b16 %v775
        %v1136 = vunpack.c.l.b16 %v776
        %v1137 = vunpack.c.l.b16 %v777
        %v1138 = vunpack.c.l.b16 %v778
        %v1139 = vunpack.c.l.b16 %v779
        %v1140 = vunpack.c.l.b16 %v780
        %v1141 = vunpack.c.l.b16 %v781
        %v1142 = vunpack.c.l.b16 %v782
        %v1143 = vunpack.c.l.b16 %v783
        %v1144 = vunpack.c.l.b16 %v784
        %v1145 = vunpack.c.l.b16 %v785
        %v1146 = vunpack.c.l.b16 %v786
        %v1147 = vunpack.c.l.b16 %v787
        %v1148 = vunpack.c.l.b16 %v788
        %v1149 = vunpack.c.l.b16 %v789
        %v1150 = vunpack.c.l.b16 %v790
        %v1151 = vunpack.c.l.b16 %v791
        %v1152 = vunpack.c.l.b16 %v792
        %v1153 = vunpack.c.l.b16 %v793
        %v1154 = vunpack.c.l.b16 %v794
        %v1155 = vunpack.c.l.b16 %v795
        %v1156 = vunpack.c.l.b16 %v796
        %v1157 = vunpack.c.l.b16 %v797
        %v1158 = vunpack.c.l.b16 %v798
        %v1159 = vunpack.c.l.b16 %v799
        %v1160 = vunpack.c.l.b16 %v800
        %v1161 = vunpack.c.l.b16 %v801
        %v1162 = vunpack.c.l.b16 %v802
        %v1163 = vunpack.c.l.b16 %v803
        %v1164 = vunpack.c.l.b16 %v804
        %v1165 = vunpack.c.l.b16 %v805
        %v1166 = vunpack.c.l.b16 %v806
        %v1167 = vunpack.c.l.b16 %v807
        %v1168 = vunpack.c.l.b16 %v808
        %v1169 = vunpack.c.l.b16 %v809
        %v1170 = vunpack.c.l.b16 %v810
        %v1171 = vunpack.c.l.b16 %v811
        %v1172 = vunpack.c.l.b16 %v812
        %v1173 = vunpack.c.l.b16 %v813
        %v1174 = vunpack.c.l.b16 %v814
        %v1175 = vunpack.c.l.b16 %v815
        %v1176 = vunpack.c.l.b16 %v816
        %v1177 = vunpack.c.l.b16 %v817
        %v1178 = vunpack.c.l.b16 %v818
        %v1179 = vunpack.c.l.b16 %v819
        %v1180 = vunpack.c.l.b16 %v820
        %v1181 = vunpack.c.l.b16 %v821
        %v1182 = vunpack.c.l.b16 %v822
        %v1183 = vunpack.c.l.b16 %v823
        %v1184 = vunpack.c.l.b16 %v824
        %v1185 = vunpack.c.l.b16 %v825
        %v1186 = vunpack.c.l.b16 %v826
        %v1187 = vunpack.c.l.b16 %v827
        %v1188 = vunpack.c.l.b16 %v828
        %v1189 = vunpack.c.l.b16 %v829
        %v1190 = vunpack.c.l.b16 %v830
        %v1191 = vunpack.c.l.b16 %v831
        %v1192 = vunpack.c.l.b16 %v832
        %v1193 = vunpack.c.l.b16 %v833
        %v1194 = vunpack.c.l.b16 %v834
        %v1195 = vunpack.c.l.b16 %v835
        %v1196 = vunpack.c.l.b16 %v836
        %v1197 = vunpack.c.l.b16 %v837
        %v1198 = vunpack.c.l.b16 %v838
        %v1199 = vunpack.c.l.b16 %v839
        %v1200 = vunpack.c.l.b16 %v840
        %v1201 = vunpack.c.l.b16 %v841
        %v1202 = vunpack.c.l.b16 %v842
        %v1203 = vunpack.c.l.b16 %v843
        %v1204 = vunpack.c.l.b16 %v844
        %v1205 = vunpack.c.l.b16 %v845
        %v1206 = vunpack.c.l.b16 %v846
        %v1207 = vunpack.c.l.b16 %v847
        %v1208 = vunpack.c.l.b16 %v848
        %v1209 = vunpack.c.l.b16 %v849
        %v1210 = vunpack.c.l.b16 %v850
        %v1211 = vunpack.c.l.b16 %v851
        %v1212 = vunpack.c.l.b16 %v852
        %v1213 = vunpack.c.l.b16 %v853
        %v1214 = vunpack.c.l.b16 %v854
        %v1215 = vunpack.c.l.b16 %v855
        %v1216 = vunpack.c.l.b16 %v856
        %v1217 = vunpack.c.l.b16 %v857
        %v1218 = vunpack.c.l.b16 %v858
        %v1219 = vunpack.c.l.b16 %v859
        %v1220 = vunpack.c.l.b16 %v860
        %v1221 = vunpack.c.l.b16 %v861
        %v1222 = vunpack.c.l.b16 %v862
        %v1223 = vunpack.c.l.b16 %v863
        %v1224 = vunpack.c.l.b16 %v864
        %v1225 = vunpack.c.l.b16 %v865
        %v1226 = vunpack.c.l.b16 %v866
        %v1227 = vunpack.c.l.b16 %v867
        %v1228 = vunpack.c.l.b16 %v868
        %v1229 = vunpack.c.l.b16 %v869
        %v1230 = vunpack.c.l.b16 %v870
        %v1231 = vunpack.c.l.b16 %v871
        %v1232 = vunpack.c.l.b16 %v872
        %v1233 = vunpack.c.l.b16 %v873
        %v1234 = vunpack.c.l.b16 %v874
        %v1235 = vunpack.c.l.b16 %v875
        %v1236 = vpack.c.b16 %v1093, %v1092
        %v1237 = vpack.c.b16 %v1095, %v1094
        %v1238 = vpack.c.b16 %v1097, %v1096
        %v1239 = vpack.c.b16 %v1099, %v1098
        %v1240 = vpack.c.b16 %v1101, %v1100
        %v1241 = vpack.c.b16 %v1103, %v1102
        %v1242 = vpack.c.b16 %v1105, %v1104
        %v1243 = vpack.c.b16 %v1107, %v1106
        %v1244 = vpack.c.b16 %v1109, %v1108
        %v1245 = vpack.c.b16 %v1111, %v1110
        %v1246 = vpack.c.b16 %v1113, %v1112
        %v1247 = vpack.c.b16 %v1115, %v1114
        %v1248 = vpack.c.b16 %v1117, %v1116
        %v1249 = vpack.c.b16 %v1119, %v1118
        %v1250 = vpack.c.b16 %v1121, %v1120
        %v1251 = vpack.c.b16 %v1123, %v1122
        %v1252 = vpack.c.b16 %v1125, %v1124
        %v1253 = vpack.c.b16 %v1127, %v1126
        %v1254 = vpack.c.b16 %v1129, %v1128
        %v1255 = vpack.c.b16 %v1131, %v1130
        %v1256 = vpack.c.b16 %v1133, %v1132
        %v1257 = vpack.c.b16 %v1135, %v1134
        %v1258 = vpack.c.b16 %v1137, %v1136
        %v1259 = vpack.c.b16 %v1139, %v1138
        %v1260 = vpack.c.b16 %v1141, %v1140
        %v1261 = vpack.c.b16 %v1143, %v1142
        %v1262 = vpack.c.b16 %v1145, %v1144
        %v1263 = vpack.c.b16 %v1147, %v1146
        %v1264 = vpack.c.b16 %v1149, %v1148
        %v1265 = vpack.c.b16 %v1151, %v1150
        %v1266 = vpack.c.b16 %v1153, %v1152
        %v1267 = vpack.c.b16 %v1155, %v1154
        %v1268 = vpack.c.b16 %v1157, %v1156
        %v1269 = vpack.c.b16 %v1159, %v1158
        %v1270 = vpack.c.b16 %v1161, %v1160
        %v1271 = vpack.c.b16 %v1163, %v1162
        %v1272 = vpack.c.b16 %v1165, %v1164
        %v1273 = vpack.c.b16 %v1167, %v1166
        %v1274 = vpack.c.b16 %v1169, %v1168
        %v1275 = vpack.c.b16 %v1171, %v1170
        %v1276 = vpack.c.b16 %v1173, %v1172
        %v1277 = vpack.c.b16 %v1175, %v1174
        %v1278 = vpack.c.b16 %v1177, %v1176
        %v1279 = vpack.c.b16 %v1179, %v1178
        %v1280 = vpack.c.b16 %v1181, %v1180
        %v1281 = vpack.c.b16 %v1183, %v1182
        %v1282 = vpack.c.b16 %v1185, %v1184
        %v1283 = vpack.c.b16 %v1187, %v1186
        %v1284 = vpack.c.b16 %v1189, %v1188
        %v1285 = vpack.c.b16 %v1191, %v1190
        %v1286 = vpack.c.b16 %v1193, %v1192
        %v1287 = vpack.c.b16 %v1195, %v1194
        %v1288 = vpack.c.b16 %v1197, %v1196
        %v1289 = vpack.c.b16 %v1199, %v1198
        %v1290 = vpack.c.b16 %v1201, %v1200
        %v1291 = vpack.c.b16 %v1203, %v1202
        %v1292 = vpack.c.b16 %v1205, %v1204
        %v1293 = vpack.c.b16 %v1207, %v1206
        %v1294 = vpack.c.b16 %v1209, %v1208
        %v1295 = vpack.c.b16 %v1211, %v1210
        %v1296 = vpack.c.b16 %v1213, %v1212
        %v1297 = vpack.c.b16 %v1215, %v1214
        %v1298 = vpack.c.b16 %v1217, %v1216
        %v1299 = vpack.c.b16 %v1219, %v1218
        %v1300 = vpack.c.b16 %v1221, %v1220
        %v1301 = vpack.c.b16 %v1223, %v1222
        %v1302 = vpack.c.b16 %v1225, %v1224
        %v1303 = vpack.c.b16 %v1227, %v1226
        %v1304 = vpack.c.b16 %v1229, %v1228
        %v1305 = vpack.c.b16 %v1231, %v1230
        %v1306 = vpack.c.b16 %v1233, %v1232
        %v1307 = vpack.c.b16 %v1235, %v1234
        %1380 = vmatprep.subr.bf16.mxu0 0
        %1381 = vmatpush1.bf16.msra.mxu0 %v1236
        %1382 = vmatprep.subr.bf16.mxu0 0
        %1383 = vmatpush1.bf16.msra.mxu0 %v1237
        %1384 = vmatprep.subr.bf16.mxu0 0
        %1385 = vmatpush1.bf16.msra.mxu0 %v1238
        %1386 = vmatprep.subr.bf16.mxu0 0
        %1387 = vmatpush1.bf16.msra.mxu0 %v1239
        %1388 = vmatprep.subr.bf16.mxu0 0
        %1389 = vmatpush1.bf16.msra.mxu0 %v1240
        %1390 = vmatprep.subr.bf16.mxu0 0
        %1391 = vmatpush1.bf16.msra.mxu0 %v1241
        %1392 = vmatprep.subr.bf16.mxu0 0
        %1393 = vmatpush1.bf16.msra.mxu0 %v1242
        %1394 = vmatprep.subr.bf16.mxu0 0
        %1395 = vmatpush1.bf16.msra.mxu0 %v1243
        %1396 = vmatprep.subr.bf16.mxu0 0
        %1397 = vmatpush1.bf16.msra.mxu0 %v1244
        %1398 = vmatprep.subr.bf16.mxu0 0
        %1399 = vmatpush1.bf16.msra.mxu0 %v1245
        %1400 = vmatprep.subr.bf16.mxu0 0
        %1401 = vmatpush1.bf16.msra.mxu0 %v1246
        %1402 = vmatprep.subr.bf16.mxu0 0
        %1403 = vmatpush1.bf16.msra.mxu0 %v1247
        %1404 = vmatprep.subr.bf16.mxu0 0
        %1405 = vmatpush1.bf16.msra.mxu0 %v1248
        %1406 = vmatprep.subr.bf16.mxu0 0
        %1407 = vmatpush1.bf16.msra.mxu0 %v1249
        %1408 = vmatprep.subr.bf16.mxu0 0
        %1409 = vmatpush1.bf16.msra.mxu0 %v1250
        %1410 = vmatprep.subr.bf16.mxu0 0
        %1411 = vmatpush1.bf16.msra.mxu0 %v1251
        %1412 = vmatprep.mubr.bf16.mxu0 %v877
        %1413 = vmatmul.mubr.bf16.gmra.mrb[0].mxu0 %v876
        %v1414 = vpop.f32.mrb[0].mxu0
        %v1415 = vadd.f32 0.0, %v1414
        %v1416 = vpop.f32.mrb[0].mxu0
        %v1417 = vpop.f32.mrb[0].mxu0
        %v1418 = vadd.f32 0.0, %v1417
        %v1419 = vpop.f32.mrb[0].mxu0
        %1420 = vmatprep.mubr.bf16.mxu0 %v886
        %1421 = vmatmul.mubr.bf16.gmra.mrb[0].mxu0 %v885
        %v1422 = vpop.f32.mrb[0].mxu0
        %v1423 = vadd.f32 0.0, %v1422
        %v1424 = vpop.f32.mrb[0].mxu0
        %v1425 = vpop.f32.mrb[0].mxu0
        %v1426 = vadd.f32 0.0, %v1425
        %v1427 = vpop.f32.mrb[0].mxu0
        %1428 = vmatprep.mubr.bf16.mxu0 %v895
        %1429 = vmatmul.mubr.bf16.gmra.mrb[0].mxu0 %v894
        %v1430 = vpop.f32.mrb[0].mxu0
        %v1431 = vadd.f32 0.0, %v1430
        %v1432 = vpop.f32.mrb[0].mxu0
        %v1433 = vpop.f32.mrb[0].mxu0
        %v1434 = vadd.f32 0.0, %v1433
        %v1435 = vpop.f32.mrb[0].mxu0
        %1436 = vmatprep.mubr.bf16.mxu0 %v904
        %1437 = vmatmul.mubr.bf16.gmra.mrb[0].mxu0 %v903
        %v1438 = vpop.f32.mrb[0].mxu0
        %v1439 = vadd.f32 0.0, %v1438
        %v1440 = vpop.f32.mrb[0].mxu0
        %v1441 = vpop.f32.mrb[0].mxu0
        %v1442 = vadd.f32 0.0, %v1441
        %v1443 = vpop.f32.mrb[0].mxu0
        %1444 = vdwg.mxu0
        %1445 = vmatprep.subr.bf16.mxu0 0
        %1446 = vmatpush1.bf16.msra.mxu0 %v1252
        %1447 = vmatprep.subr.bf16.mxu0 0
        %1448 = vmatpush1.bf16.msra.mxu0 %v1253
        %1449 = vmatprep.subr.bf16.mxu0 0
        %1450 = vmatpush1.bf16.msra.mxu0 %v1254
        %1451 = vmatprep.subr.bf16.mxu0 0
        %1452 = vmatpush1.bf16.msra.mxu0 %v1255
        %1453 = vmatprep.subr.bf16.mxu0 0
        %1454 = vmatpush1.bf16.msra.mxu0 %v1256
        %1455 = vmatprep.subr.bf16.mxu0 0
        %1456 = vmatpush1.bf16.msra.mxu0 %v1257
        %1457 = vmatprep.subr.bf16.mxu0 0
        %1458 = vmatpush1.bf16.msra.mxu0 %v1258
        %1459 = vmatprep.subr.bf16.mxu0 0
        %1460 = vmatpush1.bf16.msra.mxu0 %v1259
        %1461 = vmatprep.subr.bf16.mxu0 0
        %1462 = vmatpush1.bf16.msra.mxu0 %v1260
        %1463 = vmatprep.subr.bf16.mxu0 0
        %1464 = vmatpush1.bf16.msra.mxu0 %v1261
        %1465 = vmatprep.subr.bf16.mxu0 0
        %1466 = vmatpush1.bf16.msra.mxu0 %v1262
        %1467 = vmatprep.subr.bf16.mxu0 0
        %1468 = vmatpush1.bf16.msra.mxu0 %v1263
        %1469 = vmatprep.subr.bf16.mxu0 0
        %1470 = vmatpush1.bf16.msra.mxu0 %v1264
        %1471 = vmatprep.subr.bf16.mxu0 0
        %1472 = vmatpush1.bf16.msra.mxu0 %v1265
        %1473 = vmatprep.subr.bf16.mxu0 0
        %1474 = vmatpush1.bf16.msra.mxu0 %v1266
        %1475 = vmatprep.subr.bf16.mxu0 0
        %1476 = vmatpush1.bf16.msra.mxu0 %v1267
        %1477 = vmatprep.mubr.bf16.mxu0 %v879
        %1478 = vmatmul.mubr.bf16.gmra.mrb[0].mxu0 %v878
        %v1479 = vpop.f32.mrb[0].mxu0
        %v1480 = vadd.f32 %v1415, %v1479
        %v1481 = vpop.f32.mrb[0].mxu0
        %v1482 = vpop.f32.mrb[0].mxu0
        %v1483 = vadd.f32 %v1418, %v1482
        %v1484 = vpop.f32.mrb[0].mxu0
        %1485 = vmatprep.mubr.bf16.mxu0 %v888
        %1486 = vmatmul.mubr.bf16.gmra.mrb[0].mxu0 %v887
        %v1487 = vpop.f32.mrb[0].mxu0
        %v1488 = vadd.f32 %v1423, %v1487
        %v1489 = vpop.f32.mrb[0].mxu0
        %v1490 = vpop.f32.mrb[0].mxu0
        %v1491 = vadd.f32 %v1426, %v1490
        %v1492 = vpop.f32.mrb[0].mxu0
        %1493 = vmatprep.mubr.bf16.mxu0 %v897
        %1494 = vmatmul.mubr.bf16.gmra.mrb[0].mxu0 %v896
        %v1495 = vpop.f32.mrb[0].mxu0
        %v1496 = vadd.f32 %v1431, %v1495
        %v1497 = vpop.f32.mrb[0].mxu0
        %v1498 = vpop.f32.mrb[0].mxu0
        %v1499 = vadd.f32 %v1434, %v1498
        %v1500 = vpop.f32.mrb[0].mxu0
        %1501 = vmatprep.mubr.bf16.mxu0 %v906
        %1502 = vmatmul.mubr.bf16.gmra.mrb[0].mxu0 %v905
        %v1503 = vpop.f32.mrb[0].mxu0
        %v1504 = vadd.f32 %v1439, %v1503
        %v1505 = vpop.f32.mrb[0].mxu0
        %v1506 = vpop.f32.mrb[0].mxu0
        %v1507 = vadd.f32 %v1442, %v1506
        %v1508 = vpop.f32.mrb[0].mxu0
        %1509 = vdwg.mxu0
        %1510 = vmatprep.subr.bf16.mxu0 0
        %1511 = vmatpush1.bf16.msra.mxu0 %v1268
        %1512 = vmatprep.subr.bf16.mxu0 0
        %1513 = vmatpush1.bf16.msra.mxu0 %v1269
        %1514 = vmatprep.subr.bf16.mxu0 0
        %1515 = vmatpush1.bf16.msra.mxu0 %v1270
        %1516 = vmatprep.subr.bf16.mxu0 0
        %1517 = vmatpush1.bf16.msra.mxu0 %v1271
        %1518 = vmatprep.subr.bf16.mxu0 0
        %1519 = vmatpush1.bf16.msra.mxu0 %v1272
        %1520 = vmatprep.subr.bf16.mxu0 0
        %1521 = vmatpush1.bf16.msra.mxu0 %v1273
        %1522 = vmatprep.subr.bf16.mxu0 0
        %1523 = vmatpush1.bf16.msra.mxu0 %v1274
        %1524 = vmatprep.subr.bf16.mxu0 0
        %1525 = vmatpush1.bf16.msra.mxu0 %v1275
        %1526 = vmatprep.subr.bf16.mxu0 0
        %1527 = vmatpush1.bf16.msra.mxu0 %v1276
        %1528 = vmatprep.subr.bf16.mxu0 0
        %1529 = vmatpush1.bf16.msra.mxu0 %v1277
        %1530 = vmatprep.subr.bf16.mxu0 0
        %1531 = vmatpush1.bf16.msra.mxu0 %v1278
        %1532 = vmatprep.subr.bf16.mxu0 0
        %1533 = vmatpush1.bf16.msra.mxu0 %v1279
        %1534 = vmatprep.subr.bf16.mxu0 0
        %1535 = vmatpush1.bf16.msra.mxu0 %v1280
        %1536 = vmatprep.subr.bf16.mxu0 0
        %1537 = vmatpush1.bf16.msra.mxu0 %v1281
        %1538 = vmatprep.subr.bf16.mxu0 0
        %1539 = vmatpush1.bf16.msra.mxu0 %v1282
        %1540 = vmatprep.subr.bf16.mxu0 0
        %1541 = vmatpush1.bf16.msra.mxu0 %v1283
        %1542 = vmatprep.mubr.bf16.mxu0 %v881
        %1543 = vmatmul.mubr.bf16.gmra.mrb[0].mxu0 %v880
        %v1544 = vpop.f32.mrb[0].mxu0
        %v1545 = vadd.f32 %v1480, %v1544
        %v1546 = vpop.f32.mrb[0].mxu0
        %v1547 = vpop.f32.mrb[0].mxu0
        %v1548 = vadd.f32 %v1483, %v1547
        %v1549 = vpop.f32.mrb[0].mxu0
        %1550 = vmatprep.mubr.bf16.mxu0 %v890
        %1551 = vmatmul.mubr.bf16.gmra.mrb[0].mxu0 %v889
        %v1552 = vpop.f32.mrb[0].mxu0
        %v1553 = vadd.f32 %v1488, %v1552
        %v1554 = vpop.f32.mrb[0].mxu0
        %v1555 = vpop.f32.mrb[0].mxu0
        %v1556 = vadd.f32 %v1491, %v1555
        %v1557 = vpop.f32.mrb[0].mxu0
        %1558 = vmatprep.mubr.bf16.mxu0 %v899
        %1559 = vmatmul.mubr.bf16.gmra.mrb[0].mxu0 %v898
        %v1560 = vpop.f32.mrb[0].mxu0
        %v1561 = vadd.f32 %v1496, %v1560
        %v1562 = vpop.f32.mrb[0].mxu0
        %v1563 = vpop.f32.mrb[0].mxu0
        %v1564 = vadd.f32 %v1499, %v1563
        %v1565 = vpop.f32.mrb[0].mxu0
        %1566 = vmatprep.mubr.bf16.mxu0 %v908
        %1567 = vmatmul.mubr.bf16.gmra.mrb[0].mxu0 %v907
        %v1568 = vpop.f32.mrb[0].mxu0
        %v1569 = vadd.f32 %v1504, %v1568
        %v1570 = vpop.f32.mrb[0].mxu0
        %v1571 = vpop.f32.mrb[0].mxu0
        %v1572 = vadd.f32 %v1507, %v1571
        %v1573 = vpop.f32.mrb[0].mxu0
        %1574 = vdwg.mxu0
        %1575 = vmatprep.subr.bf16.mxu0 0
        %1576 = vmatpush1.bf16.msra.mxu0 %v1284
        %1577 = vmatprep.subr.bf16.mxu0 0
        %1578 = vmatpush1.bf16.msra.mxu0 %v1285
        %1579 = vmatprep.subr.bf16.mxu0 0
        %1580 = vmatpush1.bf16.msra.mxu0 %v1286
        %1581 = vmatprep.subr.bf16.mxu0 0
        %1582 = vmatpush1.bf16.msra.mxu0 %v1287
        %1583 = vmatprep.subr.bf16.mxu0 0
        %1584 = vmatpush1.bf16.msra.mxu0 %v1288
        %1585 = vmatprep.subr.bf16.mxu0 0
        %1586 = vmatpush1.bf16.msra.mxu0 %v1289
        %1587 = vmatprep.subr.bf16.mxu0 0
        %1588 = vmatpush1.bf16.msra.mxu0 %v1290
        %1589 = vmatprep.subr.bf16.mxu0 0
        %1590 = vmatpush1.bf16.msra.mxu0 %v1291
        %1591 = vmatprep.subr.bf16.mxu0 0
        %1592 = vmatpush1.bf16.msra.mxu0 %v1292
        %1593 = vmatprep.subr.bf16.mxu0 0
        %1594 = vmatpush1.bf16.msra.mxu0 %v1293
        %1595 = vmatprep.subr.bf16.mxu0 0
        %1596 = vmatpush1.bf16.msra.mxu0 %v1294
        %1597 = vmatprep.subr.bf16.mxu0 0
        %1598 = vmatpush1.bf16.msra.mxu0 %v1295
        %1599 = vmatprep.subr.bf16.mxu0 0
        %1600 = vmatpush1.bf16.msra.mxu0 %v1296
        %1601 = vmatprep.subr.bf16.mxu0 0
        %1602 = vmatpush1.bf16.msra.mxu0 %v1297
        %1603 = vmatprep.subr.bf16.mxu0 0
        %1604 = vmatpush1.bf16.msra.mxu0 %v1298
        %1605 = vmatprep.subr.bf16.mxu0 0
        %1606 = vmatpush1.bf16.msra.mxu0 %v1299
        %1607 = vmatprep.mubr.bf16.mxu0 %v883
        %1608 = vmatmul.mubr.bf16.gmra.mrb[0].mxu0 %v882
        %v1609 = vpop.f32.mrb[0].mxu0
        %v1610 = vadd.f32 %v1545, %v1609
        %v1611 = vpop.f32.mrb[0].mxu0
        %v1612 = vpop.f32.mrb[0].mxu0
        %v1613 = vadd.f32 %v1548, %v1612
        %v1614 = vpop.f32.mrb[0].mxu0
        %1615 = vmatprep.mubr.bf16.mxu0 %v892
        %1616 = vmatmul.mubr.bf16.gmra.mrb[0].mxu0 %v891
        %v1617 = vpop.f32.mrb[0].mxu0
        %v1618 = vadd.f32 %v1553, %v1617
        %v1619 = vpop.f32.mrb[0].mxu0
        %v1620 = vpop.f32.mrb[0].mxu0
        %v1621 = vadd.f32 %v1556, %v1620
        %v1622 = vpop.f32.mrb[0].mxu0
        %1623 = vmatprep.mubr.bf16.mxu0 %v901
        %1624 = vmatmul.mubr.bf16.gmra.mrb[0].mxu0 %v900
        %v1625 = vpop.f32.mrb[0].mxu0
        %v1626 = vadd.f32 %v1561, %v1625
        %v1627 = vpop.f32.mrb[0].mxu0
        %v1628 = vpop.f32.mrb[0].mxu0
        %v1629 = vadd.f32 %v1564, %v1628
        %v1630 = vpop.f32.mrb[0].mxu0
        %1631 = vmatprep.mubr.bf16.mxu0 %v910
        %1632 = vmatmul.mubr.bf16.gmra.mrb[0].mxu0 %v909
        %v1633 = vpop.f32.mrb[0].mxu0
        %v1634 = vadd.f32 %v1569, %v1633
        %v1635 = vpop.f32.mrb[0].mxu0
        %v1636 = vpop.f32.mrb[0].mxu0
        %v1637 = vadd.f32 %v1572, %v1636
        %v1638 = vpop.f32.mrb[0].mxu0
        %1639 = vdwg.mxu0
        %1640 = vmatprep.subr.bf16.mxu0 0
        %1641 = vmatpush1.bf16.msra.mxu0 %v1300
        %1642 = vmatprep.subr.bf16.mxu0 0
        %1643 = vmatpush1.bf16.msra.mxu0 %v1301
        %1644 = vmatprep.subr.bf16.mxu0 0
        %1645 = vmatpush1.bf16.msra.mxu0 %v1302
        %1646 = vmatprep.subr.bf16.mxu0 0
        %1647 = vmatpush1.bf16.msra.mxu0 %v1303
        %1648 = vmatprep.subr.bf16.mxu0 0
        %1649 = vmatpush1.bf16.msra.mxu0 %v1304
        %1650 = vmatprep.subr.bf16.mxu0 0
        %1651 = vmatpush1.bf16.msra.mxu0 %v1305
        %1652 = vmatprep.subr.bf16.mxu0 0
        %1653 = vmatpush1.bf16.msra.mxu0 %v1306
        %1654 = vmatprep.subr.bf16.mxu0 0
        %1655 = vmatpush1.bf16.msra.mxu0 %v1307
        %1656 = vmatprep.subr.bf16.mxu0 0
        %1657 = vmatpush1.bf16.msra.mxu0 0
        %1658 = vmatprep.subr.bf16.mxu0 0
        %1659 = vmatpush1.bf16.msra.mxu0 0
        %1660 = vmatprep.subr.bf16.mxu0 0
        %1661 = vmatpush1.bf16.msra.mxu0 0
        %1662 = vmatprep.subr.bf16.mxu0 0
        %1663 = vmatpush1.bf16.msra.mxu0 0
        %1664 = vmatprep.subr.bf16.mxu0 0
        %1665 = vmatpush1.bf16.msra.mxu0 0
        %1666 = vmatprep.subr.bf16.mxu0 0
        %1667 = vmatpush1.bf16.msra.mxu0 0
        %1668 = vmatprep.subr.bf16.mxu0 0
        %1669 = vmatpush1.bf16.msra.mxu0 0
        %1670 = vmatprep.subr.bf16.mxu0 0
        %1671 = vmatpush1.bf16.msra.mxu0 0
        %1672 = vmatprep.mubr.bf16.mxu0 0
        %1673 = vmatmul.mubr.bf16.gmra.mrb[0].mxu0 %v884
        %v1674 = vpop.f32.mrb[0].mxu0
        %v1675 = vadd.f32 %v1610, %v1674
        %v1676 = vpop.f32.mrb[0].mxu0
        %v1677 = vpop.f32.mrb[0].mxu0
        %v1678 = vadd.f32 %v1613, %v1677
        %v1679 = vpop.f32.mrb[0].mxu0
        %1680 = vmatprep.mubr.bf16.mxu0 0
        %1681 = vmatmul.mubr.bf16.gmra.mrb[0].mxu0 %v893
        %v1682 = vpop.f32.mrb[0].mxu0
        %v1683 = vadd.f32 %v1618, %v1682
        %v1684 = vpop.f32.mrb[0].mxu0
        %v1685 = vpop.f32.mrb[0].mxu0
        %v1686 = vadd.f32 %v1621, %v1685
        %v1687 = vpop.f32.mrb[0].mxu0
        %1688 = vmatprep.mubr.bf16.mxu0 0
        %1689 = vmatmul.mubr.bf16.gmra.mrb[0].mxu0 %v902
        %v1690 = vpop.f32.mrb[0].mxu0
        %v1691 = vadd.f32 %v1626, %v1690
        %v1692 = vpop.f32.mrb[0].mxu0
        %v1693 = vpop.f32.mrb[0].mxu0
        %v1694 = vadd.f32 %v1629, %v1693
        %v1695 = vpop.f32.mrb[0].mxu0
        %1696 = vmatprep.mubr.bf16.mxu0 0
        %1697 = vmatmul.mubr.bf16.gmra.mrb[0].mxu0 %v911
        %v1698 = vpop.f32.mrb[0].mxu0
        %v1699 = vadd.f32 %v1634, %v1698
        %v1700 = vpop.f32.mrb[0].mxu0
        %v1701 = vpop.f32.mrb[0].mxu0
        %v1702 = vadd.f32 %v1637, %v1701
        %v1703 = vpop.f32.mrb[0].mxu0
        %1704 = vdwg.mxu0
        %v1705 = vpack.c.bf16 %v1678, %v1675
        %v1706 = vpack.c.bf16 %v1686, %v1683
        %v1707 = vpack.c.bf16 %v1694, %v1691
        %v1708 = vpack.c.bf16 %v1702, %v1699
        %v1713 = vunpack.c.l.b16 %v1705
        %v1714 = vunpack.c.h.b16 %v1705
        %v1715 = vunpack.c.l.b16 %v1706
        %v1716 = vunpack.c.h.b16 %v1706
        %v1717 = vunpack.c.l.b16 %v1707
        %v1718 = vunpack.c.h.b16 %v1707
        %v1719 = vunpack.c.l.b16 %v1708
        %v1720 = vunpack.c.h.b16 %v1708
        %v1721 = vpack.c.b16 %v1713, %v1713
        %v1722 = vpack.c.b16 %v1714, %v1714
        %v1723 = vpack.c.b16 %v1715, %v1715
        %v1724 = vpack.c.b16 %v1716, %v1716
        %v1725 = vpack.c.b16 %v1717, %v1717
        %v1726 = vpack.c.b16 %v1718, %v1718
        %v1727 = vpack.c.b16 %v1719, %v1719
        %v1728 = vpack.c.b16 %v1720, %v1720
        %1737 = vst [vmem:[%s206] sm:$0xf] %v1721
        %1738 = vst [vmem:[%s206 + $0x4] sm:$0xf] %v1722
        %1739 = vst [vmem:[%s206 + $0x8] sm:$0xf] %v1723
        %1740 = vst [vmem:[%s206 + $0xc] sm:$0xf] %v1724
        %1741 = vst [vmem:[%s206 + $0x10] sm:$0xf] %v1725
        %1742 = vst [vmem:[%s206 + $0x14] sm:$0xf] %v1726
        %1743 = vst [vmem:[%s206 + $0x18] sm:$0xf] %v1727
        %1744 = vst [vmem:[%s206 + $0x1c] sm:$0xf] %v1728
        %v1745 = vadd.f32 %v1675, %v1678
        %v1746 = vadd.f32 %v1745, %v1683
        %v1747 = vadd.f32 %v1746, %v1686
        %v1748 = vadd.f32 %v1747, %v1691
        %v1749 = vadd.f32 %v1748, %v1694
        %v1750 = vadd.f32 %v1749, %v1699
        %v1751 = vadd.f32 %v1750, %v1702
        %v1752 = vrot.slane %v1751, 4
        %v1753 = vadd.f32 %v1751, %v1752
        %v1754 = vrot.slane %v1753, 2
        %v1755 = vadd.f32 %v1753, %v1754
        %v1756 = vrot.slane %v1755, 1
        %v1757 = vadd.f32 %v1755, %v1756
        %v1758 = vmul.f32 %v1675, %v1675
        %v1759 = vmul.f32 %v1678, %v1678
        %v1760 = vmul.f32 %v1683, %v1683
        %v1761 = vmul.f32 %v1686, %v1686
        %v1762 = vmul.f32 %v1691, %v1691
        %v1763 = vmul.f32 %v1694, %v1694
        %v1764 = vmul.f32 %v1699, %v1699
        %v1765 = vmul.f32 %v1702, %v1702
        %v1766 = vadd.f32 %v1758, %v1759
        %v1767 = vadd.f32 %v1766, %v1760
        %v1768 = vadd.f32 %v1767, %v1761
        %v1769 = vadd.f32 %v1768, %v1762
        %v1770 = vadd.f32 %v1769, %v1763
        %v1771 = vadd.f32 %v1770, %v1764
        %v1772 = vadd.f32 %v1771, %v1765
        %v1773 = vrot.slane %v1772, 4
        %v1774 = vadd.f32 %v1772, %v1773
        %v1775 = vrot.slane %v1774, 2
        %v1776 = vadd.f32 %v1774, %v1775
        %v1777 = vrot.slane %v1776, 1
        %v1778 = vadd.f32 %v1776, %v1777
        %vm1779 = vcmask 1040384
        %v1780 = vsel %vm1779, %v1757, %v1778
        %1781 = vst [vmem:[%s213] sm:$0x3] %v1780
        %s1782 = sand.u32 %s92, 1
        %s1783 = scalar_lea.sflag [#allocation4], %s1782
        %s1784 = sand.u32 %s92, 1
        %s1785 = smul.addr %s1784, 32
        %s1786 = scalar_lea.vmem [#allocation7], %s1785
        %s1787 = sand.u32 %s120, 1
        %s1788 = scalar_lea.sflag [#allocation9], %s1787
        %s1789 = sand.u32 %s120, 1
        %s1790 = smul.addr %s1789, 2
        %s1791 = scalar_lea.vmem [#allocation8], %s1790
        // Predicated region
        $region37: #{bottleneck_block.6} parent=27 // pred_check
          %p1792 = pneg %p102
        $region38: #{bottleneck_block.6} parent=27 // pred_check_branch
          %1794 = sbr.rel (%p1792) target = $region40
        $region39: #{bottleneck_block.6} parent=27 // pred_region
          %s1795 = smul.u32 8, %s28
          %s1797 = ssub.s32 512, 512
          %1798 = vsyncadd %s1783, %s1797
          %s1799 = smul.addr %s27, 8
          %s1800 = sadd.s32 %s1795, %s1799
          %s1801 = smul.addr %s1800, 64
          %s1802 = scalar_lea.hbm %s2, %s1801
          %s1803 = sshll.u32 %s1786, 4
          %s1804 = int_to_ptr.vmem [resolvable:$true] %s1803
          %1809 = dma.vmem_to_hbm [thread:$0]  %s1804, 512, %s1802, %s1783, 64, 64, 4
        $region40: #{bottleneck_block.6} parent=27 // pred_fallthru
          _
        // Predicated region
        $region41: #{bottleneck_block.6} parent=27 // pred_check
          %p1810 = pneg %p130
        $region42: #{bottleneck_block.6} parent=27 // pred_check_branch
          %1812 = sbr.rel (%p1810) target = $region44
        $region43: #{bottleneck_block.6} parent=27 // pred_region
          %s1814 = ssub.s32 32, 32
          %1815 = vsyncadd %s1788, %s1814
          %s1816 = sadd.s32 %s28, %s27
          %s1817 = smul.addr %s1816, 32
          %s1818 = scalar_lea.hbm %s3, %s1817
          %s1820 = sshll.u32 %s1791, 4
          %s1821 = int_to_ptr.vmem [resolvable:$true] %s1820
          %1823 = dma.vmem_to_hbm [thread:$0]  %s1821, 32, %s1818, %s1788
        $region44: #{bottleneck_block.6} parent=27 // pred_fallthru
          _
      $region28: #{bottleneck_block.6} parent=5 // pred_fallthru
        _
      %p1824 = scmp.le.s32.totalorder 2, %s18
      // Predicated region
      $region45: #{bottleneck_block.6} parent=5 // pred_check
        %p1825 = pneg %p1824
      $region46: #{bottleneck_block.6} parent=5 // pred_check_branch
        %1827 = sbr.rel (%p1825) target = $region48
      $region47: #{bottleneck_block.6} parent=5 // pred_region
        %s1828 = ssub.s32 %s18, 2
        // Predicated region
        $region49: #{bottleneck_block.6} parent=47 // pred_check
          %p1829 = pneg %p108
        $region50: #{bottleneck_block.6} parent=47 // pred_check_branch
          %1831 = sbr.rel (%p1829) target = $region52
        $region51: #{bottleneck_block.6} parent=47 // pred_region
          %s1832 = sand.u32 %s93, 1
          %s1833 = scalar_lea.sflag [#allocation4], %s1832
          %s1834 = sand.u32 %s93, 1
          %s1835 = smul.addr %s1834, 32
          %s1836 = scalar_lea.vmem [#allocation7], %s1835
          %1837 = dma.done %s1833, 512
        $region52: #{bottleneck_block.6} parent=47 // pred_fallthru
          _
        // Predicated region
        $region53: #{bottleneck_block.6} parent=47 // pred_check
          %p1838 = pneg %p136
        $region54: #{bottleneck_block.6} parent=47 // pred_check_branch
          %1840 = sbr.rel (%p1838) target = $region56
        $region55: #{bottleneck_block.6} parent=47 // pred_region
          %s1841 = sand.u32 %s121, 1
          %s1842 = scalar_lea.sflag [#allocation9], %s1841
          %s1843 = sand.u32 %s121, 1
          %s1844 = smul.addr %s1843, 2
          %s1845 = scalar_lea.vmem [#allocation8], %s1844
          %1846 = dma.done %s1842, 32
        $region56: #{bottleneck_block.6} parent=47 // pred_fallthru
          _
      $region48: #{bottleneck_block.6} parent=5 // pred_fallthru
        _
    $region6: #{bottleneck_block.6} parent=1 // loop_footer
      %s22 = sadd.s32 1, %s18
    $region7: #{bottleneck_block.6} parent=1 // loop_footer_branch
      %17 = sbr.rel target = $region3
    $region8: #{bottleneck_block.6} parent=1 // loop_exit
      _
    %1847 = vsyncpa [#allocation3], 1
    %s1848 = scalar_lea.sflag [#allocation3], 1
    %1849 = vsyncpa %s1848, 1
    %1850 = vsyncpa [#allocation6], 1
    %1851 = vsyncpa [#allocation4], 1
    %s1852 = scalar_lea.sflag [#allocation4], 1
    %1853 = vsyncpa %s1852, 1
    %1854 = vsyncpa [#allocation9], 1
    %s1855 = scalar_lea.sflag [#allocation9], 1
    %1856 = vsyncpa %s1855, 1

</llo_original>
